<compile_context>
chip_gen: v6e
topology: v6e:2x2x1
jax: 0.10.0
libtpu: 0.0.40
codegen_flags: <defaults>
</compile_context>

<pallas_src>
import functools

import jax
import jax.numpy as jnp
from jax.experimental import pallas as pl
from jax.experimental.pallas import tpu as pltpu


TB = 32                         # images per conv grid step (batch padded to a multiple)
VMEM_LIMIT = 32 * 1024 * 1024   # explicit scoped-VMEM budget (v5e default is only 16 MiB)


# ---------------------------------------------------------------------------
# Kernel 1/2: fused conv3x3(pad=1) + bias + ReLU + maxpool2x2 as one matmul.
# ---------------------------------------------------------------------------
def _conv_pool_relu_kernel(x_ref, w_ref, b_ref, o_ref, *, gc):
    # x_ref: (tm, G*16*Cin) bf16   -- G pool blocks (4x4 input patches) per row
    # w_ref: (G*16*Cin, 4*gc) bf16 -- block-diagonal folded conv weights,
    #                                 col = dd*gc + g*Cout + co (pool-position-major)
    # b_ref: (1, gc) f32           -- per-channel bias tiled G times
    # o_ref: (tm, gc) bf16         -- pooled + biased + ReLU'd activations
    y = jnp.dot(x_ref[...], w_ref[...], preferred_element_type=jnp.float32)
    # 2x2 max-pool == max over the 4 contiguous, 128-aligned, gc-wide lane slices.
    m = jnp.maximum(jnp.maximum(y[:, 0 * gc:1 * gc], y[:, 1 * gc:2 * gc]),
                    jnp.maximum(y[:, 2 * gc:3 * gc], y[:, 3 * gc:4 * gc]))
    # bias is identical for all 4 window positions and ReLU is monotonic, so
    # relu(maxpool(conv + b)) == relu(max(conv) + b).
    o_ref[...] = jnp.maximum(m + b_ref[...], 0.0).astype(o_ref.dtype)


# ---------------------------------------------------------------------------
# Kernel 3: fused fc1 + ReLU + fc2 (hidden activation never leaves the kernel).
# ---------------------------------------------------------------------------
def _mlp_kernel(x_ref, w1_ref, b1_ref, w2_ref, b2_ref, o_ref):
    h = jnp.dot(x_ref[...], w1_ref[...], preferred_element_type=jnp.float32)
    h = jnp.maximum(h + b1_ref[...], 0.0)
    o_ref[...] = jnp.dot(h.astype(jnp.bfloat16), w2_ref[...],
                         preferred_element_type=jnp.float32) + b2_ref[...]


# ---------------------------------------------------------------------------
# Wrapper glue (plain JAX, outside the kernels).
# ---------------------------------------------------------------------------
def _im2col_pool_blocks(x_nhwc, group):
    """(B,H,W,C) -> (B*(H//2)*(W//2)//group, group*16*C), bf16.

    One matmul row packs `group` consecutive 2x2-pool blocks (row-major over
    (b, ho, wo)); each block contributes the 16*C features of the 4x4 zero-padded
    input patch covering its four 3x3 receptive fields, ordered (ph, pw, c)."""
    Bq, H, W, C = x_nhwc.shape
    Hb, Wb = H // 2, W // 2
    xp = jnp.pad(x_nhwc, ((0, 0), (1, 1), (1, 1), (0, 0)))
    pats = [xp[:, ph:ph + 2 * Hb:2, pw:pw + 2 * Wb:2, :]
            for ph in range(4) for pw in range(4)]            # each (Bq, Hb, Wb, C)
    pat = jnp.stack(pats, axis=3)                             # (Bq, Hb, Wb, 16, C)
    rows = Bq * Hb * Wb
    assert rows % group == 0
    return pat.reshape(rows // group, group * 16 * C).astype(jnp.bfloat16)


def _fold_conv_pool_weight(w_hwio, group):
    """Fold (3,3,Cin,Cout) conv weights into a block-diagonal (group*16*Cin,
    4*group*Cout) bf16 matrix.

    Row = g*16*Cin + (ph*4+pw)*Cin + ci over each group's 4x4 patch;
    column = dd*(group*Cout) + g*Cout + co with dd = dh*2+dw the position inside
    the 2x2 pool window (pool-position-major -> 128-aligned pooling slices)."""
    _, _, cin, cout = w_hwio.shape
    base = jnp.zeros((4, 4, cin, 4, cout), w_hwio.dtype)
    for dh in range(2):
        for dw in range(2):
            base = base.at[dh:dh + 3, dw:dw + 3, :, dh * 2 + dw, :].set(w_hwio)
    base = base.reshape(16 * cin, 4, cout)
    wf = jnp.zeros((group, 16 * cin, 4, group, cout), w_hwio.dtype)
    for g in range(group):
        wf = wf.at[g, :, :, g, :].set(base)
    return wf.reshape(group * 16 * cin, 4 * group * cout).astype(jnp.bfloat16)


def conv3x3_relu_pool(x_nhwc, w_hwio, b, *, group, batch_tile):
    """Fused conv3x3(pad=1) + bias + ReLU + maxpool2x2.

    Returns (B*P//group, group*Cout) bf16 -- a pure row-major regrouping of the
    (B, H//2, W//2, Cout) pooled activation (downstream reshapes are unchanged)."""
    Bq, H, W, Cin = x_nhwc.shape
    Cout = w_hwio.shape[-1]
    assert H % 2 == 0 and W % 2 == 0 and Bq % batch_tile == 0
    P = (H // 2) * (W // 2)
    gc = group * Cout
    K = group * 16 * Cin
    assert gc % 128 == 0 and K % 128 == 0              # lane-dense LHS & output
    assert (batch_tile * P) % group == 0
    tm = batch_tile * P // group                       # matmul rows per grid step
    assert tm % 16 == 0 or Bq == batch_tile            # bf16 sublane tiling

    xs = _im2col_pool_blocks(x_nhwc, group)            # (Bq*P//group, K) bf16
    wf = _fold_conv_pool_weight(w_hwio, group)         # (K, 4*gc) bf16
    bt = jnp.tile(b.reshape(1, Cout).astype(jnp.float32), (1, group))  # (1, gc)

    return pl.pallas_call(
        functools.partial(_conv_pool_relu_kernel, gc=gc),
        out_shape=jax.ShapeDtypeStruct((Bq * P // group, gc), jnp.bfloat16),
        grid=(Bq // batch_tile,),
        in_specs=[
            pl.BlockSpec((tm, K), lambda i: (i, 0)),
            pl.BlockSpec((K, 4 * gc), lambda i: (0, 0)),     # resident weights
            pl.BlockSpec((1, gc), lambda i: (0, 0)),
        ],
        out_specs=pl.BlockSpec((tm, gc), lambda i: (i, 0)),
        compiler_params=pltpu.CompilerParams(
            dimension_semantics=("parallel",),
            vmem_limit_bytes=VMEM_LIMIT),
    )(xs, wf, bt)


def mlp(x_bf16, w1, b1, w2, b2):
    """Fused fc1 + ReLU + fc2.  fc2 outputs are zero-padded to a multiple of 128
    lanes so the final store is unmasked; the caller slices the real columns."""
    Bq, K = x_bf16.shape
    Hd = w1.shape[1]
    N = w2.shape[1]
    Np = ((N + 127) // 128) * 128
    w1b = w1.astype(jnp.bfloat16)
    b1r = b1.reshape(1, Hd).astype(jnp.float32)
    w2p = jnp.pad(w2, ((0, 0), (0, Np - N))).astype(jnp.bfloat16)
    b2p = jnp.pad(b2.reshape(1, N), ((0, 0), (0, Np - N))).astype(jnp.float32)
    tb = next((t for t in (128, 64, 32) if Bq % t == 0), Bq)  # Bq is 32k or tiny

    return pl.pallas_call(
        _mlp_kernel,
        out_shape=jax.ShapeDtypeStruct((Bq, Np), jnp.float32),
        grid=(Bq // tb,),
        in_specs=[
            pl.BlockSpec((tb, K), lambda i: (i, 0)),
            pl.BlockSpec((K, Hd), lambda i: (0, 0)),
            pl.BlockSpec((1, Hd), lambda i: (0, 0)),
            pl.BlockSpec((Hd, Np), lambda i: (0, 0)),
            pl.BlockSpec((1, Np), lambda i: (0, 0)),
        ],
        out_specs=pl.BlockSpec((tb, Np), lambda i: (i, 0)),
        compiler_params=pltpu.CompilerParams(
            dimension_semantics=("parallel",),
            vmem_limit_bytes=VMEM_LIMIT),
    )(x_bf16, w1b, b1r, w2p, b2p)


def _pad_batch(batch):
    """(padded_batch, conv_batch_tile).

    Large batches: pad to a multiple of TB, tile at TB images/step (multi-step
    'parallel' grid, bounded per-step VMEM).  Tiny batches (< TB): one full-batch
    block, which is strictly smaller than a TB-sized block."""
    if batch >= TB:
        bp = ((batch + TB - 1) // TB) * TB
        return bp, TB
    bp = batch + (batch % 2)                  # pool-block packing needs even batch
    return bp, bp


# ---------------------------------------------------------------------------
# Full forward pass (mirrors CNNModel.forward).
# ---------------------------------------------------------------------------
def cnn_forward(x_nchw, params):
    B = x_nchw.shape[0]
    Bp, tile = _pad_batch(B)
    x = jnp.transpose(x_nchw, (0, 2, 3, 1)).astype(jnp.bfloat16)   # NCHW -> NHWC
    if Bp != B:
        x = jnp.pad(x, ((0, Bp - B), (0, 0), (0, 0), (0, 0)))
    # Stage 1: 28x28x1 -> 14x14x32.   G=8 pool blocks/row -> K=128, 256 output lanes.
    h1 = conv3x3_relu_pool(x, params["w1"], params["b1"], group=8, batch_tile=tile)
    h1 = h1.reshape(Bp, 14, 14, 32)
    # Stage 2: 14x14x32 -> 7x7x64.    G=2 pool blocks/row -> K=1024, 128 output lanes.
    h2 = conv3x3_relu_pool(h1, params["w2"], params["b2"], group=2, batch_tile=tile)
    # NHWC flatten: feature index = (h*7 + w)*64 + c; wfc1 rows are defined in this
    # order (the PyTorch NCHW-flatten permutation is folded into the weight).
    xf = h2.reshape(Bp, 49 * 64)
    logits = mlp(xf, params["wfc1"], params["bfc1"], params["wfc2"], params["bfc2"])
    return logits[:B, :10]


def init_params(key):
    ks = jax.random.split(key, 8)
    return {
        # conv weights stored HWIO = (kh, kw, Cin, Cout)
        "w1":   0.10 * jax.random.normal(ks[0], (3, 3, 1, 32), jnp.float32),
        "b1":   0.10 * jax.random.normal(ks[1], (32,), jnp.float32),
        "w2":   0.05 * jax.random.normal(ks[2], (3, 3, 32, 64), jnp.float32),
        "b2":   0.05 * jax.random.normal(ks[3], (64,), jnp.float32),
        # fc1 weight rows are in NHWC-flatten order (h, w, c).  To load PyTorch
        # weights: fc1.weight.reshape(128,64,7,7).transpose(0,2,3,1).reshape(128,-1).T
        "wfc1": 0.02 * jax.random.normal(ks[4], (64 * 7 * 7, 128), jnp.float32),
        "bfc1": 0.02 * jax.random.normal(ks[5], (128,), jnp.float32),
        "wfc2": 0.05 * jax.random.normal(ks[6], (128, 10), jnp.float32),
        "bfc2": 0.05 * jax.random.normal(ks[7], (10,), jnp.float32),
    }


if __name__ == "__main__":
    key = jax.random.PRNGKey(0)
    k_x, k_p = jax.random.split(key)

    # fc1 expects 64*7*7 features => spatial input must be 28x28 (MNIST-style).
    B = 2
    x = jax.random.normal(k_x, (B, 1, 28, 28), jnp.float32)    # NCHW like PyTorch
    params = init_params(k_p)

    fwd = jax.jit(cnn_forward)
    out = jax.block_until_ready(fwd(x, params))
    assert out.shape == (B, 10) and out.dtype == jnp.float32
    print("KERNEL_OK")
</pallas_src>

<mosaic_0001>
module attributes {stable_mosaic.version = 11 : i64} {
  func.func @_conv_pool_relu_kernel(%arg0: i32, %arg1: memref<49x128xbf16, #tpu.memory_space<vmem>>, %arg2: memref<128x1024xbf16, #tpu.memory_space<vmem>>, %arg3: memref<1x256xf32, #tpu.memory_space<vmem>>, %arg4: memref<49x256xbf16, #tpu.memory_space<vmem>>) attributes {dimension_semantics = [#tpu.dimension_semantics<parallel>], iteration_bounds = array<i64: 1>, scalar_prefetch = 0 : i64, scratch_operands = 0 : i64, tpu.core_type = #tpu.core_type<tc>, window_params = [{transform_indices = @transform_0, window_bounds = array<i64: 49, 128>}, {pipeline_mode = #tpu.pipeline_mode<synchronous>, transform_indices = @transform_1, window_bounds = array<i64: 128, 1024>}, {pipeline_mode = #tpu.pipeline_mode<synchronous>, transform_indices = @transform_2, window_bounds = array<i64: 1, 256>}, {transform_indices = @transform_3, window_bounds = array<i64: 49, 256>}]} {
    %c0 = arith.constant 0 : index
    %c0_0 = arith.constant 0 : index
    %0 = vector.load %arg1[%c0, %c0_0] : memref<49x128xbf16, #tpu.memory_space<vmem>>, vector<49x128xbf16>
    %c0_1 = arith.constant 0 : index
    %c0_2 = arith.constant 0 : index
    %1 = vector.load %arg2[%c0_1, %c0_2] : memref<128x1024xbf16, #tpu.memory_space<vmem>>, vector<128x1024xbf16>
    %cst = arith.constant dense<0.000000e+00> : vector<49x1024xf32>
    %2 = tpu.matmul %0, %1, %cst {dimension_numbers = #tpu.dot_dimension_numbers<[1], [0], [0], [1], [0, 0, 1, 1], [], []>} : vector<49x128xbf16>, vector<128x1024xbf16>, vector<49x1024xf32> -> vector<49x1024xf32>
    %3 = vector.extract_strided_slice %2 {offsets = [0, 0], sizes = [49, 256], strides = [1, 1]} : vector<49x1024xf32> to vector<49x256xf32>
    %4 = vector.extract_strided_slice %2 {offsets = [0, 256], sizes = [49, 256], strides = [1, 1]} : vector<49x1024xf32> to vector<49x256xf32>
    %5 = arith.maximumf %3, %4 : vector<49x256xf32>
    %6 = vector.extract_strided_slice %2 {offsets = [0, 512], sizes = [49, 256], strides = [1, 1]} : vector<49x1024xf32> to vector<49x256xf32>
    %7 = vector.extract_strided_slice %2 {offsets = [0, 768], sizes = [49, 256], strides = [1, 1]} : vector<49x1024xf32> to vector<49x256xf32>
    %8 = arith.maximumf %6, %7 : vector<49x256xf32>
    %9 = arith.maximumf %5, %8 : vector<49x256xf32>
    %c0_3 = arith.constant 0 : index
    %c0_4 = arith.constant 0 : index
    %10 = vector.load %arg3[%c0_3, %c0_4] : memref<1x256xf32, #tpu.memory_space<vmem>>, vector<1x256xf32>
    %11 = vector.broadcast %10 : vector<1x256xf32> to vector<49x256xf32>
    %12 = arith.addf %9, %11 : vector<49x256xf32>
    %cst_5 = arith.constant 0.000000e+00 : f32
    %13 = vector.broadcast %cst_5 : f32 to vector<49x256xf32>
    %14 = arith.maximumf %12, %13 : vector<49x256xf32>
    %15 = arith.truncf %14 : vector<49x256xf32> to vector<49x256xbf16>
    %c0_6 = arith.constant 0 : index
    %c0_7 = arith.constant 0 : index
    %16 = vector.load %arg4[%c0_6, %c0_7] : memref<49x256xbf16, #tpu.memory_space<vmem>>, vector<49x256xbf16>
    tpu.vector_store %arg4[%c0_6, %c0_7], %15 {strides = array<i32>} : memref<49x256xbf16, #tpu.memory_space<vmem>>, vector<49x256xbf16>,
    return
  }
  func.func @transform_0(%arg0: i32) -> (i32, i32) {
    %c0_i32 = arith.constant 0 : i32
    %c0_i32_0 = arith.constant 0 : i32
    return %arg0, %c0_i32 : i32, i32
  }
  func.func @transform_1(%arg0: i32) -> (i32, i32) {
    %c0_i32 = arith.constant 0 : i32
    %c0_i32_0 = arith.constant 0 : i32
    %c0_i32_1 = arith.constant 0 : i32
    return %c0_i32, %c0_i32_0 : i32, i32
  }
  func.func @transform_2(%arg0: i32) -> (i32, i32) {
    %c0_i32 = arith.constant 0 : i32
    %c0_i32_0 = arith.constant 0 : i32
    %c0_i32_1 = arith.constant 0 : i32
    return %c0_i32, %c0_i32_0 : i32, i32
  }
  func.func @transform_3(%arg0: i32) -> (i32, i32) {
    %c0_i32 = arith.constant 0 : i32
    %c0_i32_0 = arith.constant 0 : i32
    return %arg0, %c0_i32 : i32, i32
  }
}

module attributes {stable_mosaic.version = 11 : i64} {
  func.func @_conv_pool_relu_kernel(%arg0: i32, %arg1: memref<49x1024xbf16, #tpu.memory_space<vmem>>, %arg2: memref<1024x512xbf16, #tpu.memory_space<vmem>>, %arg3: memref<1x128xf32, #tpu.memory_space<vmem>>, %arg4: memref<49x128xbf16, #tpu.memory_space<vmem>>) attributes {dimension_semantics = [#tpu.dimension_semantics<parallel>], iteration_bounds = array<i64: 1>, scalar_prefetch = 0 : i64, scratch_operands = 0 : i64, tpu.core_type = #tpu.core_type<tc>, window_params = [{transform_indices = @transform_0, window_bounds = array<i64: 49, 1024>}, {pipeline_mode = #tpu.pipeline_mode<synchronous>, transform_indices = @transform_1, window_bounds = array<i64: 1024, 512>}, {pipeline_mode = #tpu.pipeline_mode<synchronous>, transform_indices = @transform_2, window_bounds = array<i64: 1, 128>}, {transform_indices = @transform_3, window_bounds = array<i64: 49, 128>}]} {
    %c0 = arith.constant 0 : index
    %c0_0 = arith.constant 0 : index
    %0 = vector.load %arg1[%c0, %c0_0] : memref<49x1024xbf16, #tpu.memory_space<vmem>>, vector<49x1024xbf16>
    %c0_1 = arith.constant 0 : index
    %c0_2 = arith.constant 0 : index
    %1 = vector.load %arg2[%c0_1, %c0_2] : memref<1024x512xbf16, #tpu.memory_space<vmem>>, vector<1024x512xbf16>
    %cst = arith.constant dense<0.000000e+00> : vector<49x512xf32>
    %2 = tpu.matmul %0, %1, %cst {dimension_numbers = #tpu.dot_dimension_numbers<[1], [0], [0], [1], [0, 0, 1, 1], [], []>} : vector<49x1024xbf16>, vector<1024x512xbf16>, vector<49x512xf32> -> vector<49x512xf32>
    %3 = vector.extract_strided_slice %2 {offsets = [0, 0], sizes = [49, 128], strides = [1, 1]} : vector<49x512xf32> to vector<49x128xf32>
    %4 = vector.extract_strided_slice %2 {offsets = [0, 128], sizes = [49, 128], strides = [1, 1]} : vector<49x512xf32> to vector<49x128xf32>
    %5 = arith.maximumf %3, %4 : vector<49x128xf32>
    %6 = vector.extract_strided_slice %2 {offsets = [0, 256], sizes = [49, 128], strides = [1, 1]} : vector<49x512xf32> to vector<49x128xf32>
    %7 = vector.extract_strided_slice %2 {offsets = [0, 384], sizes = [49, 128], strides = [1, 1]} : vector<49x512xf32> to vector<49x128xf32>
    %8 = arith.maximumf %6, %7 : vector<49x128xf32>
    %9 = arith.maximumf %5, %8 : vector<49x128xf32>
    %c0_3 = arith.constant 0 : index
    %c0_4 = arith.constant 0 : index
    %10 = vector.load %arg3[%c0_3, %c0_4] : memref<1x128xf32, #tpu.memory_space<vmem>>, vector<1x128xf32>
    %11 = vector.broadcast %10 : vector<1x128xf32> to vector<49x128xf32>
    %12 = arith.addf %9, %11 : vector<49x128xf32>
    %cst_5 = arith.constant 0.000000e+00 : f32
    %13 = vector.broadcast %cst_5 : f32 to vector<49x128xf32>
    %14 = arith.maximumf %12, %13 : vector<49x128xf32>
    %15 = arith.truncf %14 : vector<49x128xf32> to vector<49x128xbf16>
    %c0_6 = arith.constant 0 : index
    %c0_7 = arith.constant 0 : index
    %16 = vector.load %arg4[%c0_6, %c0_7] : memref<49x128xbf16, #tpu.memory_space<vmem>>, vector<49x128xbf16>
    tpu.vector_store %arg4[%c0_6, %c0_7], %15 {strides = array<i32>} : memref<49x128xbf16, #tpu.memory_space<vmem>>, vector<49x128xbf16>,
    return
  }
  func.func @transform_0(%arg0: i32) -> (i32, i32) {
    %c0_i32 = arith.constant 0 : i32
    %c0_i32_0 = arith.constant 0 : i32
    return %arg0, %c0_i32 : i32, i32
  }
  func.func @transform_1(%arg0: i32) -> (i32, i32) {
    %c0_i32 = arith.constant 0 : i32
    %c0_i32_0 = arith.constant 0 : i32
    %c0_i32_1 = arith.constant 0 : i32
    return %c0_i32, %c0_i32_0 : i32, i32
  }
  func.func @transform_2(%arg0: i32) -> (i32, i32) {
    %c0_i32 = arith.constant 0 : i32
    %c0_i32_0 = arith.constant 0 : i32
    %c0_i32_1 = arith.constant 0 : i32
    return %c0_i32, %c0_i32_0 : i32, i32
  }
  func.func @transform_3(%arg0: i32) -> (i32, i32) {
    %c0_i32 = arith.constant 0 : i32
    %c0_i32_0 = arith.constant 0 : i32
    return %arg0, %c0_i32 : i32, i32
  }
}

module attributes {stable_mosaic.version = 11 : i64} {
  func.func @_mlp_kernel(%arg0: i32, %arg1: memref<2x3136xbf16, #tpu.memory_space<vmem>>, %arg2: memref<3136x128xbf16, #tpu.memory_space<vmem>>, %arg3: memref<1x128xf32, #tpu.memory_space<vmem>>, %arg4: memref<128x128xbf16, #tpu.memory_space<vmem>>, %arg5: memref<1x128xf32, #tpu.memory_space<vmem>>, %arg6: memref<2x128xf32, #tpu.memory_space<vmem>>) attributes {dimension_semantics = [#tpu.dimension_semantics<parallel>], iteration_bounds = array<i64: 1>, scalar_prefetch = 0 : i64, scratch_operands = 0 : i64, tpu.core_type = #tpu.core_type<tc>, window_params = [{transform_indices = @transform_0, window_bounds = array<i64: 2, 3136>}, {pipeline_mode = #tpu.pipeline_mode<synchronous>, transform_indices = @transform_1, window_bounds = array<i64: 3136, 128>}, {pipeline_mode = #tpu.pipeline_mode<synchronous>, transform_indices = @transform_2, window_bounds = array<i64: 1, 128>}, {pipeline_mode = #tpu.pipeline_mode<synchronous>, transform_indices = @transform_3, window_bounds = array<i64: 128, 128>}, {pipeline_mode = #tpu.pipeline_mode<synchronous>, transform_indices = @transform_4, window_bounds = array<i64: 1, 128>}, {transform_indices = @transform_5, window_bounds = array<i64: 2, 128>}]} {
    %c0 = arith.constant 0 : index
    %c0_0 = arith.constant 0 : index
    %0 = vector.load %arg1[%c0, %c0_0] : memref<2x3136xbf16, #tpu.memory_space<vmem>>, vector<2x3136xbf16>
    %c0_1 = arith.constant 0 : index
    %c0_2 = arith.constant 0 : index
    %1 = vector.load %arg2[%c0_1, %c0_2] : memref<3136x128xbf16, #tpu.memory_space<vmem>>, vector<3136x128xbf16>
    %cst = arith.constant dense<0.000000e+00> : vector<2x128xf32>
    %2 = tpu.matmul %0, %1, %cst {dimension_numbers = #tpu.dot_dimension_numbers<[1], [0], [0], [1], [0, 0, 1, 1], [], []>} : vector<2x3136xbf16>, vector<3136x128xbf16>, vector<2x128xf32> -> vector<2x128xf32>
    %c0_3 = arith.constant 0 : index
    %c0_4 = arith.constant 0 : index
    %3 = vector.load %arg3[%c0_3, %c0_4] : memref<1x128xf32, #tpu.memory_space<vmem>>, vector<1x128xf32>
    %4 = vector.broadcast %3 : vector<1x128xf32> to vector<2x128xf32>
    %5 = arith.addf %2, %4 : vector<2x128xf32>
    %cst_5 = arith.constant 0.000000e+00 : f32
    %6 = vector.broadcast %cst_5 : f32 to vector<2x128xf32>
    %7 = arith.maximumf %5, %6 : vector<2x128xf32>
    %8 = arith.truncf %7 : vector<2x128xf32> to vector<2x128xbf16>
    %c0_6 = arith.constant 0 : index
    %c0_7 = arith.constant 0 : index
    %9 = vector.load %arg4[%c0_6, %c0_7] : memref<128x128xbf16, #tpu.memory_space<vmem>>, vector<128x128xbf16>
    %cst_8 = arith.constant dense<0.000000e+00> : vector<2x128xf32>
    %10 = tpu.matmul %8, %9, %cst_8 {dimension_numbers = #tpu.dot_dimension_numbers<[1], [0], [0], [1], [0, 0, 1, 1], [], []>} : vector<2x128xbf16>, vector<128x128xbf16>, vector<2x128xf32> -> vector<2x128xf32>
    %c0_9 = arith.constant 0 : index
    %c0_10 = arith.constant 0 : index
    %11 = vector.load %arg5[%c0_9, %c0_10] : memref<1x128xf32, #tpu.memory_space<vmem>>, vector<1x128xf32>
    %12 = vector.broadcast %11 : vector<1x128xf32> to vector<2x128xf32>
    %13 = arith.addf %10, %12 : vector<2x128xf32>
    %c0_11 = arith.constant 0 : index
    %c0_12 = arith.constant 0 : index
    %14 = vector.load %arg6[%c0_11, %c0_12] : memref<2x128xf32, #tpu.memory_space<vmem>>, vector<2x128xf32>
    tpu.vector_store %arg6[%c0_11, %c0_12], %13 {strides = array<i32>} : memref<2x128xf32, #tpu.memory_space<vmem>>, vector<2x128xf32>,
    return
  }
  func.func @transform_0(%arg0: i32) -> (i32, i32) {
    %c0_i32 = arith.constant 0 : i32
    %c0_i32_0 = arith.constant 0 : i32
    return %arg0, %c0_i32 : i32, i32
  }
  func.func @transform_1(%arg0: i32) -> (i32, i32) {
    %c0_i32 = arith.constant 0 : i32
    %c0_i32_0 = arith.constant 0 : i32
    %c0_i32_1 = arith.constant 0 : i32
    return %c0_i32, %c0_i32_0 : i32, i32
  }
  func.func @transform_2(%arg0: i32) -> (i32, i32) {
    %c0_i32 = arith.constant 0 : i32
    %c0_i32_0 = arith.constant 0 : i32
    %c0_i32_1 = arith.constant 0 : i32
    return %c0_i32, %c0_i32_0 : i32, i32
  }
  func.func @transform_3(%arg0: i32) -> (i32, i32) {
    %c0_i32 = arith.constant 0 : i32
    %c0_i32_0 = arith.constant 0 : i32
    %c0_i32_1 = arith.constant 0 : i32
    return %c0_i32, %c0_i32_0 : i32, i32
  }
  func.func @transform_4(%arg0: i32) -> (i32, i32) {
    %c0_i32 = arith.constant 0 : i32
    %c0_i32_0 = arith.constant 0 : i32
    %c0_i32_1 = arith.constant 0 : i32
    return %c0_i32, %c0_i32_0 : i32, i32
  }
  func.func @transform_5(%arg0: i32) -> (i32, i32) {
    %c0_i32 = arith.constant 0 : i32
    %c0_i32_0 = arith.constant 0 : i32
    return %arg0, %c0_i32 : i32, i32
  }
}

</mosaic_0001>

<llo_original>
// kernel: cnn_forward.3
$region0: #{cnn_forward.3}
  #allocation0 [shape = 'u32[]', space=smem, size = 0x4, offset = 0x4, fixed_abs, tag = 'smem constant byte address 0x4 - core index']
  #allocation1 [shape = 'u32[144,128]{1,0:T(1,128)}', space=vmem, size = 0x12000, scoped, tag = 'internal scratch']
  %s0 = inlined_call_operand.vmem [shape: bf16[49,128], index: 0, kind: input, shape index: {}]
  %s1 = inlined_call_operand.vmem [shape: bf16[128,1024], index: 1, kind: input, shape index: {}]
  %s2 = inlined_call_operand.vmem [shape: f32[1,256], index: 2, kind: input, shape index: {}]
  %s3 = inlined_call_operand.vmem [shape: bf16[49,256], index: 3, kind: output, shape index: {}]
  %s4 = sld [smem:[#allocation0]]
  $region22: #{cnn_forward.3} parent=0
    _
  %s6 = ssub.s32 1, %s4
  %s7 = scalar_select 0, %s6, %s4
  // Predicated region
  $region2: #{cnn_forward.3} parent=0 // pred_check
    _
  $region3: #{cnn_forward.3} parent=0 // pred_check_branch
    %9 = sbr.rel (0) target = $region5
  $region4: #{cnn_forward.3} parent=0 // pred_region
    _
  $region5: #{cnn_forward.3} parent=0 // pred_fallthru
    _
  // Predicated region
  $region6: #{cnn_forward.3} parent=0 // pred_check
    _
  $region7: #{cnn_forward.3} parent=0 // pred_check_branch
    %11 = sbr.rel (0) target = $region9
  $region8: #{cnn_forward.3} parent=0 // pred_region
    _
  $region9: #{cnn_forward.3} parent=0 // pred_fallthru
    _
  // Predicated region
  $region10: #{cnn_forward.3} parent=0 // pred_check
    _
  $region11: #{cnn_forward.3} parent=0 // pred_check_branch
    %13 = sbr.rel (0) target = $region13
  $region12: #{cnn_forward.3} parent=0 // pred_region
    _
  $region13: #{cnn_forward.3} parent=0 // pred_fallthru
    _
  %v15 = vld [vmem:[%s0] sm:$0xf]
  %v16 = vld [vmem:[%s0 + $0x4] sm:$0xf]
  %v17 = vld [vmem:[%s0 + $0x8] sm:$0xf]
  %v18 = vld [vmem:[%s0 + $0xc] sm:$0xf]
  %v19 = vld [vmem:[%s0 + $0x10] sm:$0xf]
  %v20 = vld [vmem:[%s0 + $0x14] sm:$0xf]
  %v21 = vld [vmem:[%s0 + $0x18] sm:$0x1]
  %v22 = vld [vmem:[%s1] sm:$0xff]
  %v23 = vld [vmem:[%s1 + $0x8] sm:$0xff]
  %v24 = vld [vmem:[%s1 + $0x10] sm:$0xff]
  %v25 = vld [vmem:[%s1 + $0x18] sm:$0xff]
  %v26 = vld [vmem:[%s1 + $0x20] sm:$0xff]
  %v27 = vld [vmem:[%s1 + $0x28] sm:$0xff]
  %v28 = vld [vmem:[%s1 + $0x30] sm:$0xff]
  %v29 = vld [vmem:[%s1 + $0x38] sm:$0xff]
  %v30 = vld [vmem:[%s1 + $0x40] sm:$0xff]
  %v31 = vld [vmem:[%s1 + $0x48] sm:$0xff]
  %v32 = vld [vmem:[%s1 + $0x50] sm:$0xff]
  %v33 = vld [vmem:[%s1 + $0x58] sm:$0xff]
  %v34 = vld [vmem:[%s1 + $0x60] sm:$0xff]
  %v35 = vld [vmem:[%s1 + $0x68] sm:$0xff]
  %v36 = vld [vmem:[%s1 + $0x70] sm:$0xff]
  %v37 = vld [vmem:[%s1 + $0x78] sm:$0xff]
  %v38 = vld [vmem:[%s1 + $0x80] sm:$0xff]
  %v39 = vld [vmem:[%s1 + $0x88] sm:$0xff]
  %v40 = vld [vmem:[%s1 + $0x90] sm:$0xff]
  %v41 = vld [vmem:[%s1 + $0x98] sm:$0xff]
  %v42 = vld [vmem:[%s1 + $0xa0] sm:$0xff]
  %v43 = vld [vmem:[%s1 + $0xa8] sm:$0xff]
  %v44 = vld [vmem:[%s1 + $0xb0] sm:$0xff]
  %v45 = vld [vmem:[%s1 + $0xb8] sm:$0xff]
  %v46 = vld [vmem:[%s1 + $0xc0] sm:$0xff]
  %v47 = vld [vmem:[%s1 + $0xc8] sm:$0xff]
  %v48 = vld [vmem:[%s1 + $0xd0] sm:$0xff]
  %v49 = vld [vmem:[%s1 + $0xd8] sm:$0xff]
  %v50 = vld [vmem:[%s1 + $0xe0] sm:$0xff]
  %v51 = vld [vmem:[%s1 + $0xe8] sm:$0xff]
  %v52 = vld [vmem:[%s1 + $0xf0] sm:$0xff]
  %v53 = vld [vmem:[%s1 + $0xf8] sm:$0xff]
  %v54 = vld [vmem:[%s1 + $0x100] sm:$0xff]
  %v55 = vld [vmem:[%s1 + $0x108] sm:$0xff]
  %v56 = vld [vmem:[%s1 + $0x110] sm:$0xff]
  %v57 = vld [vmem:[%s1 + $0x118] sm:$0xff]
  %v58 = vld [vmem:[%s1 + $0x120] sm:$0xff]
  %v59 = vld [vmem:[%s1 + $0x128] sm:$0xff]
  %v60 = vld [vmem:[%s1 + $0x130] sm:$0xff]
  %v61 = vld [vmem:[%s1 + $0x138] sm:$0xff]
  %v62 = vld [vmem:[%s1 + $0x140] sm:$0xff]
  %v63 = vld [vmem:[%s1 + $0x148] sm:$0xff]
  %v64 = vld [vmem:[%s1 + $0x150] sm:$0xff]
  %v65 = vld [vmem:[%s1 + $0x158] sm:$0xff]
  %v66 = vld [vmem:[%s1 + $0x160] sm:$0xff]
  %v67 = vld [vmem:[%s1 + $0x168] sm:$0xff]
  %v68 = vld [vmem:[%s1 + $0x170] sm:$0xff]
  %v69 = vld [vmem:[%s1 + $0x178] sm:$0xff]
  %v70 = vld [vmem:[%s1 + $0x180] sm:$0xff]
  %v71 = vld [vmem:[%s1 + $0x188] sm:$0xff]
  %v72 = vld [vmem:[%s1 + $0x190] sm:$0xff]
  %v73 = vld [vmem:[%s1 + $0x198] sm:$0xff]
  %v74 = vld [vmem:[%s1 + $0x1a0] sm:$0xff]
  %v75 = vld [vmem:[%s1 + $0x1a8] sm:$0xff]
  %v76 = vld [vmem:[%s1 + $0x1b0] sm:$0xff]
  %v77 = vld [vmem:[%s1 + $0x1b8] sm:$0xff]
  %v78 = vld [vmem:[%s1 + $0x1c0] sm:$0xff]
  %v79 = vld [vmem:[%s1 + $0x1c8] sm:$0xff]
  %v80 = vld [vmem:[%s1 + $0x1d0] sm:$0xff]
  %v81 = vld [vmem:[%s1 + $0x1d8] sm:$0xff]
  %v82 = vld [vmem:[%s1 + $0x1e0] sm:$0xff]
  %v83 = vld [vmem:[%s1 + $0x1e8] sm:$0xff]
  %v84 = vld [vmem:[%s1 + $0x1f0] sm:$0xff]
  %v85 = vld [vmem:[%s1 + $0x1f8] sm:$0xff]
  %v93 = vunpack.c.l.b16 %v15
  %v94 = vunpack.c.l.b16 %v16
  %v95 = vunpack.c.l.b16 %v17
  %v96 = vunpack.c.l.b16 %v18
  %v97 = vunpack.c.l.b16 %v19
  %v98 = vunpack.c.l.b16 %v20
  %v99 = vunpack.c.l.b16 %v21
  %v100 = vpack.c.b16 %v94, %v93
  %v101 = vpack.c.b16 %v96, %v95
  %v102 = vpack.c.b16 %v98, %v97
  %v103 = vpack.c.b16 %v99, %v99
  %v172 = vunpack.c.l.b16 %v22
  %v173 = vunpack.c.h.b16 %v22
  %v174 = vunpack.c.l.b16 %v23
  %v175 = vunpack.c.h.b16 %v23
  %v176 = vunpack.c.l.b16 %v24
  %v177 = vunpack.c.h.b16 %v24
  %v178 = vunpack.c.l.b16 %v25
  %v179 = vunpack.c.h.b16 %v25
  %v180 = vunpack.c.l.b16 %v26
  %v181 = vunpack.c.h.b16 %v26
  %v182 = vunpack.c.l.b16 %v27
  %v183 = vunpack.c.h.b16 %v27
  %v184 = vunpack.c.l.b16 %v28
  %v185 = vunpack.c.h.b16 %v28
  %v186 = vunpack.c.l.b16 %v29
  %v187 = vunpack.c.h.b16 %v29
  %v188 = vunpack.c.l.b16 %v30
  %v189 = vunpack.c.h.b16 %v30
  %v190 = vunpack.c.l.b16 %v31
  %v191 = vunpack.c.h.b16 %v31
  %v192 = vunpack.c.l.b16 %v32
  %v193 = vunpack.c.h.b16 %v32
  %v194 = vunpack.c.l.b16 %v33
  %v195 = vunpack.c.h.b16 %v33
  %v196 = vunpack.c.l.b16 %v34
  %v197 = vunpack.c.h.b16 %v34
  %v198 = vunpack.c.l.b16 %v35
  %v199 = vunpack.c.h.b16 %v35
  %v200 = vunpack.c.l.b16 %v36
  %v201 = vunpack.c.h.b16 %v36
  %v202 = vunpack.c.l.b16 %v37
  %v203 = vunpack.c.h.b16 %v37
  %v204 = vunpack.c.l.b16 %v38
  %v205 = vunpack.c.h.b16 %v38
  %v206 = vunpack.c.l.b16 %v39
  %v207 = vunpack.c.h.b16 %v39
  %v208 = vunpack.c.l.b16 %v40
  %v209 = vunpack.c.h.b16 %v40
  %v210 = vunpack.c.l.b16 %v41
  %v211 = vunpack.c.h.b16 %v41
  %v212 = vunpack.c.l.b16 %v42
  %v213 = vunpack.c.h.b16 %v42
  %v214 = vunpack.c.l.b16 %v43
  %v215 = vunpack.c.h.b16 %v43
  %v216 = vunpack.c.l.b16 %v44
  %v217 = vunpack.c.h.b16 %v44
  %v218 = vunpack.c.l.b16 %v45
  %v219 = vunpack.c.h.b16 %v45
  %v220 = vunpack.c.l.b16 %v46
  %v221 = vunpack.c.h.b16 %v46
  %v222 = vunpack.c.l.b16 %v47
  %v223 = vunpack.c.h.b16 %v47
  %v224 = vunpack.c.l.b16 %v48
  %v225 = vunpack.c.h.b16 %v48
  %v226 = vunpack.c.l.b16 %v49
  %v227 = vunpack.c.h.b16 %v49
  %v228 = vunpack.c.l.b16 %v50
  %v229 = vunpack.c.h.b16 %v50
  %v230 = vunpack.c.l.b16 %v51
  %v231 = vunpack.c.h.b16 %v51
  %v232 = vunpack.c.l.b16 %v52
  %v233 = vunpack.c.h.b16 %v52
  %v234 = vunpack.c.l.b16 %v53
  %v235 = vunpack.c.h.b16 %v53
  %v236 = vunpack.c.l.b16 %v54
  %v237 = vunpack.c.h.b16 %v54
  %v238 = vunpack.c.l.b16 %v55
  %v239 = vunpack.c.h.b16 %v55
  %v240 = vunpack.c.l.b16 %v56
  %v241 = vunpack.c.h.b16 %v56
  %v242 = vunpack.c.l.b16 %v57
  %v243 = vunpack.c.h.b16 %v57
  %v244 = vunpack.c.l.b16 %v58
  %v245 = vunpack.c.h.b16 %v58
  %v246 = vunpack.c.l.b16 %v59
  %v247 = vunpack.c.h.b16 %v59
  %v248 = vunpack.c.l.b16 %v60
  %v249 = vunpack.c.h.b16 %v60
  %v250 = vunpack.c.l.b16 %v61
  %v251 = vunpack.c.h.b16 %v61
  %v252 = vunpack.c.l.b16 %v62
  %v253 = vunpack.c.h.b16 %v62
  %v254 = vunpack.c.l.b16 %v63
  %v255 = vunpack.c.h.b16 %v63
  %v256 = vunpack.c.l.b16 %v64
  %v257 = vunpack.c.h.b16 %v64
  %v258 = vunpack.c.l.b16 %v65
  %v259 = vunpack.c.h.b16 %v65
  %v260 = vunpack.c.l.b16 %v66
  %v261 = vunpack.c.h.b16 %v66
  %v262 = vunpack.c.l.b16 %v67
  %v263 = vunpack.c.h.b16 %v67
  %v264 = vunpack.c.l.b16 %v68
  %v265 = vunpack.c.h.b16 %v68
  %v266 = vunpack.c.l.b16 %v69
  %v267 = vunpack.c.h.b16 %v69
  %v268 = vunpack.c.l.b16 %v70
  %v269 = vunpack.c.h.b16 %v70
  %v270 = vunpack.c.l.b16 %v71
  %v271 = vunpack.c.h.b16 %v71
  %v272 = vunpack.c.l.b16 %v72
  %v273 = vunpack.c.h.b16 %v72
  %v274 = vunpack.c.l.b16 %v73
  %v275 = vunpack.c.h.b16 %v73
  %v276 = vunpack.c.l.b16 %v74
  %v277 = vunpack.c.h.b16 %v74
  %v278 = vunpack.c.l.b16 %v75
  %v279 = vunpack.c.h.b16 %v75
  %v280 = vunpack.c.l.b16 %v76
  %v281 = vunpack.c.h.b16 %v76
  %v282 = vunpack.c.l.b16 %v77
  %v283 = vunpack.c.h.b16 %v77
  %v284 = vunpack.c.l.b16 %v78
  %v285 = vunpack.c.h.b16 %v78
  %v286 = vunpack.c.l.b16 %v79
  %v287 = vunpack.c.h.b16 %v79
  %v288 = vunpack.c.l.b16 %v80
  %v289 = vunpack.c.h.b16 %v80
  %v290 = vunpack.c.l.b16 %v81
  %v291 = vunpack.c.h.b16 %v81
  %v292 = vunpack.c.l.b16 %v82
  %v293 = vunpack.c.h.b16 %v82
  %v294 = vunpack.c.l.b16 %v83
  %v295 = vunpack.c.h.b16 %v83
  %v296 = vunpack.c.l.b16 %v84
  %v297 = vunpack.c.h.b16 %v84
  %v298 = vunpack.c.l.b16 %v85
  %v299 = vunpack.c.h.b16 %v85
  %v300 = vpack.c.b16 %v180, %v172
  %v301 = vpack.c.b16 %v181, %v173
  %v302 = vpack.c.b16 %v182, %v174
  %v303 = vpack.c.b16 %v183, %v175
  %v304 = vpack.c.b16 %v184, %v176
  %v305 = vpack.c.b16 %v185, %v177
  %v306 = vpack.c.b16 %v186, %v178
  %v307 = vpack.c.b16 %v187, %v179
  %v308 = vpack.c.b16 %v196, %v188
  %v309 = vpack.c.b16 %v197, %v189
  %v310 = vpack.c.b16 %v198, %v190
  %v311 = vpack.c.b16 %v199, %v191
  %v312 = vpack.c.b16 %v200, %v192
  %v313 = vpack.c.b16 %v201, %v193
  %v314 = vpack.c.b16 %v202, %v194
  %v315 = vpack.c.b16 %v203, %v195
  %v316 = vpack.c.b16 %v212, %v204
  %v317 = vpack.c.b16 %v213, %v205
  %v318 = vpack.c.b16 %v214, %v206
  %v319 = vpack.c.b16 %v215, %v207
  %v320 = vpack.c.b16 %v216, %v208
  %v321 = vpack.c.b16 %v217, %v209
  %v322 = vpack.c.b16 %v218, %v210
  %v323 = vpack.c.b16 %v219, %v211
  %v324 = vpack.c.b16 %v228, %v220
  %v325 = vpack.c.b16 %v229, %v221
  %v326 = vpack.c.b16 %v230, %v222
  %v327 = vpack.c.b16 %v231, %v223
  %v328 = vpack.c.b16 %v232, %v224
  %v329 = vpack.c.b16 %v233, %v225
  %v330 = vpack.c.b16 %v234, %v226
  %v331 = vpack.c.b16 %v235, %v227
  %v332 = vpack.c.b16 %v244, %v236
  %v333 = vpack.c.b16 %v245, %v237
  %v334 = vpack.c.b16 %v246, %v238
  %v335 = vpack.c.b16 %v247, %v239
  %v336 = vpack.c.b16 %v248, %v240
  %v337 = vpack.c.b16 %v249, %v241
  %v338 = vpack.c.b16 %v250, %v242
  %v339 = vpack.c.b16 %v251, %v243
  %v340 = vpack.c.b16 %v260, %v252
  %v341 = vpack.c.b16 %v261, %v253
  %v342 = vpack.c.b16 %v262, %v254
  %v343 = vpack.c.b16 %v263, %v255
  %v344 = vpack.c.b16 %v264, %v256
  %v345 = vpack.c.b16 %v265, %v257
  %v346 = vpack.c.b16 %v266, %v258
  %v347 = vpack.c.b16 %v267, %v259
  %v348 = vpack.c.b16 %v276, %v268
  %v349 = vpack.c.b16 %v277, %v269
  %v350 = vpack.c.b16 %v278, %v270
  %v351 = vpack.c.b16 %v279, %v271
  %v352 = vpack.c.b16 %v280, %v272
  %v353 = vpack.c.b16 %v281, %v273
  %v354 = vpack.c.b16 %v282, %v274
  %v355 = vpack.c.b16 %v283, %v275
  %v356 = vpack.c.b16 %v292, %v284
  %v357 = vpack.c.b16 %v293, %v285
  %v358 = vpack.c.b16 %v294, %v286
  %v359 = vpack.c.b16 %v295, %v287
  %v360 = vpack.c.b16 %v296, %v288
  %v361 = vpack.c.b16 %v297, %v289
  %v362 = vpack.c.b16 %v298, %v290
  %v363 = vpack.c.b16 %v299, %v291
  %428 = vmatprep.subr.bf16.mxu0 %v357
  %429 = vmatpush1.bf16.msra.mxu0 %v356
  %430 = vmatprep.subr.bf16.mxu0 %v349
  %431 = vmatpush1.bf16.msra.mxu0 %v348
  %432 = vmatprep.subr.bf16.mxu0 %v341
  %433 = vmatpush1.bf16.msra.mxu0 %v340
  %434 = vmatprep.subr.bf16.mxu0 %v333
  %435 = vmatpush1.bf16.msra.mxu0 %v332
  %436 = vmatprep.subr.bf16.mxu0 %v325
  %437 = vmatpush1.bf16.msra.mxu0 %v324
  %438 = vmatprep.subr.bf16.mxu0 %v317
  %439 = vmatpush1.bf16.msra.mxu0 %v316
  %440 = vmatprep.subr.bf16.mxu0 %v309
  %441 = vmatpush1.bf16.msra.mxu0 %v308
  %442 = vmatprep.subr.bf16.mxu0 %v301
  %443 = vmatpush1.bf16.msra.mxu0 %v300
  %444 = vmatprep.subr.bf16.mxu0 0
  %445 = vmatpush2.bf16.msra.mxu0 0
  %446 = vmatprep.subr.bf16.mxu0 0
  %447 = vmatpush2.bf16.msra.mxu0 0
  %448 = vmatprep.subr.bf16.mxu0 0
  %449 = vmatpush2.bf16.msra.mxu0 0
  %450 = vmatprep.subr.bf16.mxu0 0
  %451 = vmatpush2.bf16.msra.mxu0 0
  %452 = vmatprep.subr.bf16.mxu0 0
  %453 = vmatpush2.bf16.msra.mxu0 0
  %454 = vmatprep.subr.bf16.mxu0 0
  %455 = vmatpush2.bf16.msra.mxu0 0
  %456 = vmatprep.subr.bf16.mxu0 0
  %457 = vmatpush2.bf16.msra.mxu0 0
  %458 = vmatprep.subr.bf16.mxu0 0
  %459 = vmatpush2.bf16.msra.mxu0 0
  %460 = vmatprep.mubr.bf16.mxu0 0
  %461 = vmatmul.mubr.bf16.gmra.mxu0 %v100
  %v462 = vpop.f32.mrf.mxu0
  %v463 = vadd.f32 0.0, %v462
  %v464 = vpop.f32.mrf.mxu0
  %v465 = vadd.f32 0.0, %v464
  %v466 = vpop.f32.mrf.mxu0
  %v467 = vadd.f32 0.0, %v466
  %v468 = vpop.f32.mrf.mxu0
  %v469 = vadd.f32 0.0, %v468
  %470 = vmatprep.mubr.bf16.mxu0 0
  %471 = vmatmul.mubr.bf16.gmra.mxu0 %v101
  %v472 = vpop.f32.mrf.mxu0
  %v473 = vadd.f32 0.0, %v472
  %v474 = vpop.f32.mrf.mxu0
  %v475 = vadd.f32 0.0, %v474
  %v476 = vpop.f32.mrf.mxu0
  %v477 = vadd.f32 0.0, %v476
  %v478 = vpop.f32.mrf.mxu0
  %v479 = vadd.f32 0.0, %v478
  %480 = vmatprep.mubr.bf16.mxu0 0
  %481 = vmatmul.mubr.bf16.gmra.mxu0 %v102
  %v482 = vpop.f32.mrf.mxu0
  %v483 = vadd.f32 0.0, %v482
  %v484 = vpop.f32.mrf.mxu0
  %v485 = vadd.f32 0.0, %v484
  %v486 = vpop.f32.mrf.mxu0
  %v487 = vadd.f32 0.0, %v486
  %v488 = vpop.f32.mrf.mxu0
  %v489 = vadd.f32 0.0, %v488
  %490 = vmatprep.mubr.bf16.mxu0 0
  %491 = vmatmul.mubr.bf16.gmra.mxu0 %v103
  %v492 = vpop.f32.mrf.mxu0
  %v493 = vadd.f32 0.0, %v492
  %v494 = vpop.f32.mrf.mxu0
  %v495 = vadd.f32 0.0, %v494
  %v496 = vpop.f32.mrf.mxu0
  %v497 = vpop.f32.mrf.mxu0
  %498 = vdwg.mxu0
  %499 = vmatprep.subr.bf16.mxu0 %v359
  %500 = vmatpush1.bf16.msra.mxu0 %v358
  %501 = vmatprep.subr.bf16.mxu0 %v351
  %502 = vmatpush1.bf16.msra.mxu0 %v350
  %503 = vmatprep.subr.bf16.mxu0 %v343
  %504 = vmatpush1.bf16.msra.mxu0 %v342
  %505 = vmatprep.subr.bf16.mxu0 %v335
  %506 = vmatpush1.bf16.msra.mxu0 %v334
  %507 = vmatprep.subr.bf16.mxu0 %v327
  %508 = vmatpush1.bf16.msra.mxu0 %v326
  %509 = vmatprep.subr.bf16.mxu0 %v319
  %510 = vmatpush1.bf16.msra.mxu0 %v318
  %511 = vmatprep.subr.bf16.mxu0 %v311
  %512 = vmatpush1.bf16.msra.mxu0 %v310
  %513 = vmatprep.subr.bf16.mxu0 %v303
  %514 = vmatpush1.bf16.msra.mxu0 %v302
  %515 = vmatprep.subr.bf16.mxu0 0
  %516 = vmatpush2.bf16.msra.mxu0 0
  %517 = vmatprep.subr.bf16.mxu0 0
  %518 = vmatpush2.bf16.msra.mxu0 0
  %519 = vmatprep.subr.bf16.mxu0 0
  %520 = vmatpush2.bf16.msra.mxu0 0
  %521 = vmatprep.subr.bf16.mxu0 0
  %522 = vmatpush2.bf16.msra.mxu0 0
  %523 = vmatprep.subr.bf16.mxu0 0
  %524 = vmatpush2.bf16.msra.mxu0 0
  %525 = vmatprep.subr.bf16.mxu0 0
  %526 = vmatpush2.bf16.msra.mxu0 0
  %527 = vmatprep.subr.bf16.mxu0 0
  %528 = vmatpush2.bf16.msra.mxu0 0
  %529 = vmatprep.subr.bf16.mxu0 0
  %530 = vmatpush2.bf16.msra.mxu0 0
  %531 = vmatprep.mubr.bf16.mxu0 0
  %532 = vmatmul.mubr.bf16.gmra.mxu0 %v100
  %v533 = vpop.f32.mrf.mxu0
  %v534 = vadd.f32 0.0, %v533
  %v535 = vpop.f32.mrf.mxu0
  %v536 = vadd.f32 0.0, %v535
  %v537 = vpop.f32.mrf.mxu0
  %v538 = vadd.f32 0.0, %v537
  %v539 = vpop.f32.mrf.mxu0
  %v540 = vadd.f32 0.0, %v539
  %541 = vmatprep.mubr.bf16.mxu0 0
  %542 = vmatmul.mubr.bf16.gmra.mxu0 %v101
  %v543 = vpop.f32.mrf.mxu0
  %v544 = vadd.f32 0.0, %v543
  %v545 = vpop.f32.mrf.mxu0
  %v546 = vadd.f32 0.0, %v545
  %v547 = vpop.f32.mrf.mxu0
  %v548 = vadd.f32 0.0, %v547
  %v549 = vpop.f32.mrf.mxu0
  %v550 = vadd.f32 0.0, %v549
  %551 = vmatprep.mubr.bf16.mxu0 0
  %552 = vmatmul.mubr.bf16.gmra.mxu0 %v102
  %v553 = vpop.f32.mrf.mxu0
  %v554 = vadd.f32 0.0, %v553
  %v555 = vpop.f32.mrf.mxu0
  %v556 = vadd.f32 0.0, %v555
  %v557 = vpop.f32.mrf.mxu0
  %v558 = vadd.f32 0.0, %v557
  %v559 = vpop.f32.mrf.mxu0
  %v560 = vadd.f32 0.0, %v559
  %561 = vmatprep.mubr.bf16.mxu0 0
  %562 = vmatmul.mubr.bf16.gmra.mxu0 %v103
  %v563 = vpop.f32.mrf.mxu0
  %v564 = vadd.f32 0.0, %v563
  %v565 = vpop.f32.mrf.mxu0
  %v566 = vadd.f32 0.0, %v565
  %v567 = vpop.f32.mrf.mxu0
  %v568 = vpop.f32.mrf.mxu0
  %569 = vdwg.mxu0
  %570 = vmatprep.subr.bf16.mxu0 %v361
  %571 = vmatpush1.bf16.msra.mxu0 %v360
  %572 = vmatprep.subr.bf16.mxu0 %v353
  %573 = vmatpush1.bf16.msra.mxu0 %v352
  %574 = vmatprep.subr.bf16.mxu0 %v345
  %575 = vmatpush1.bf16.msra.mxu0 %v344
  %576 = vmatprep.subr.bf16.mxu0 %v337
  %577 = vmatpush1.bf16.msra.mxu0 %v336
  %578 = vmatprep.subr.bf16.mxu0 %v329
  %579 = vmatpush1.bf16.msra.mxu0 %v328
  %580 = vmatprep.subr.bf16.mxu0 %v321
  %581 = vmatpush1.bf16.msra.mxu0 %v320
  %582 = vmatprep.subr.bf16.mxu0 %v313
  %583 = vmatpush1.bf16.msra.mxu0 %v312
  %584 = vmatprep.subr.bf16.mxu0 %v305
  %585 = vmatpush1.bf16.msra.mxu0 %v304
  %586 = vmatprep.subr.bf16.mxu0 0
  %587 = vmatpush2.bf16.msra.mxu0 0
  %588 = vmatprep.subr.bf16.mxu0 0
  %589 = vmatpush2.bf16.msra.mxu0 0
  %590 = vmatprep.subr.bf16.mxu0 0
  %591 = vmatpush2.bf16.msra.mxu0 0
  %592 = vmatprep.subr.bf16.mxu0 0
  %593 = vmatpush2.bf16.msra.mxu0 0
  %594 = vmatprep.subr.bf16.mxu0 0
  %595 = vmatpush2.bf16.msra.mxu0 0
  %596 = vmatprep.subr.bf16.mxu0 0
  %597 = vmatpush2.bf16.msra.mxu0 0
  %598 = vmatprep.subr.bf16.mxu0 0
  %599 = vmatpush2.bf16.msra.mxu0 0
  %600 = vmatprep.subr.bf16.mxu0 0
  %601 = vmatpush2.bf16.msra.mxu0 0
  %602 = vmatprep.mubr.bf16.mxu0 0
  %603 = vmatmul.mubr.bf16.gmra.mxu0 %v100
  %v604 = vpop.f32.mrf.mxu0
  %v605 = vadd.f32 0.0, %v604
  %v606 = vpop.f32.mrf.mxu0
  %v607 = vadd.f32 0.0, %v606
  %v608 = vpop.f32.mrf.mxu0
  %v609 = vadd.f32 0.0, %v608
  %v610 = vpop.f32.mrf.mxu0
  %v611 = vadd.f32 0.0, %v610
  %612 = vmatprep.mubr.bf16.mxu0 0
  %613 = vmatmul.mubr.bf16.gmra.mxu0 %v101
  %v614 = vpop.f32.mrf.mxu0
  %v615 = vadd.f32 0.0, %v614
  %v616 = vpop.f32.mrf.mxu0
  %v617 = vadd.f32 0.0, %v616
  %v618 = vpop.f32.mrf.mxu0
  %v619 = vadd.f32 0.0, %v618
  %v620 = vpop.f32.mrf.mxu0
  %v621 = vadd.f32 0.0, %v620
  %622 = vmatprep.mubr.bf16.mxu0 0
  %623 = vmatmul.mubr.bf16.gmra.mxu0 %v102
  %v624 = vpop.f32.mrf.mxu0
  %v625 = vadd.f32 0.0, %v624
  %v626 = vpop.f32.mrf.mxu0
  %v627 = vadd.f32 0.0, %v626
  %v628 = vpop.f32.mrf.mxu0
  %v629 = vadd.f32 0.0, %v628
  %v630 = vpop.f32.mrf.mxu0
  %v631 = vadd.f32 0.0, %v630
  %632 = vmatprep.mubr.bf16.mxu0 0
  %633 = vmatmul.mubr.bf16.gmra.mxu0 %v103
  %v634 = vpop.f32.mrf.mxu0
  %v635 = vadd.f32 0.0, %v634
  %v636 = vpop.f32.mrf.mxu0
  %v637 = vadd.f32 0.0, %v636
  %v638 = vpop.f32.mrf.mxu0
  %v639 = vpop.f32.mrf.mxu0
  %640 = vdwg.mxu0
  %641 = vmatprep.subr.bf16.mxu0 %v363
  %642 = vmatpush1.bf16.msra.mxu0 %v362
  %643 = vmatprep.subr.bf16.mxu0 %v355
  %644 = vmatpush1.bf16.msra.mxu0 %v354
  %645 = vmatprep.subr.bf16.mxu0 %v347
  %646 = vmatpush1.bf16.msra.mxu0 %v346
  %647 = vmatprep.subr.bf16.mxu0 %v339
  %648 = vmatpush1.bf16.msra.mxu0 %v338
  %649 = vmatprep.subr.bf16.mxu0 %v331
  %650 = vmatpush1.bf16.msra.mxu0 %v330
  %651 = vmatprep.subr.bf16.mxu0 %v323
  %652 = vmatpush1.bf16.msra.mxu0 %v322
  %653 = vmatprep.subr.bf16.mxu0 %v315
  %654 = vmatpush1.bf16.msra.mxu0 %v314
  %655 = vmatprep.subr.bf16.mxu0 %v307
  %656 = vmatpush1.bf16.msra.mxu0 %v306
  %657 = vmatprep.subr.bf16.mxu0 0
  %658 = vmatpush2.bf16.msra.mxu0 0
  %659 = vmatprep.subr.bf16.mxu0 0
  %660 = vmatpush2.bf16.msra.mxu0 0
  %661 = vmatprep.subr.bf16.mxu0 0
  %662 = vmatpush2.bf16.msra.mxu0 0
  %663 = vmatprep.subr.bf16.mxu0 0
  %664 = vmatpush2.bf16.msra.mxu0 0
  %665 = vmatprep.subr.bf16.mxu0 0
  %666 = vmatpush2.bf16.msra.mxu0 0
  %667 = vmatprep.subr.bf16.mxu0 0
  %668 = vmatpush2.bf16.msra.mxu0 0
  %669 = vmatprep.subr.bf16.mxu0 0
  %670 = vmatpush2.bf16.msra.mxu0 0
  %671 = vmatprep.subr.bf16.mxu0 0
  %672 = vmatpush2.bf16.msra.mxu0 0
  %673 = vmatprep.mubr.bf16.mxu0 0
  %674 = vmatmul.mubr.bf16.gmra.mxu0 %v100
  %v675 = vpop.f32.mrf.mxu0
  %v676 = vadd.f32 0.0, %v675
  %v677 = vpop.f32.mrf.mxu0
  %v678 = vadd.f32 0.0, %v677
  %v679 = vpop.f32.mrf.mxu0
  %v680 = vadd.f32 0.0, %v679
  %v681 = vpop.f32.mrf.mxu0
  %v682 = vadd.f32 0.0, %v681
  %683 = vmatprep.mubr.bf16.mxu0 0
  %684 = vmatmul.mubr.bf16.gmra.mxu0 %v101
  %v685 = vpop.f32.mrf.mxu0
  %v686 = vadd.f32 0.0, %v685
  %v687 = vpop.f32.mrf.mxu0
  %v688 = vadd.f32 0.0, %v687
  %v689 = vpop.f32.mrf.mxu0
  %v690 = vadd.f32 0.0, %v689
  %v691 = vpop.f32.mrf.mxu0
  %v692 = vadd.f32 0.0, %v691
  %693 = vmatprep.mubr.bf16.mxu0 0
  %694 = vmatmul.mubr.bf16.gmra.mxu0 %v102
  %v695 = vpop.f32.mrf.mxu0
  %v696 = vadd.f32 0.0, %v695
  %v697 = vpop.f32.mrf.mxu0
  %v698 = vadd.f32 0.0, %v697
  %v699 = vpop.f32.mrf.mxu0
  %v700 = vadd.f32 0.0, %v699
  %v701 = vpop.f32.mrf.mxu0
  %v702 = vadd.f32 0.0, %v701
  %703 = vmatprep.mubr.bf16.mxu0 0
  %704 = vmatmul.mubr.bf16.gmra.mxu0 %v103
  %v705 = vpop.f32.mrf.mxu0
  %v706 = vadd.f32 0.0, %v705
  %v707 = vpop.f32.mrf.mxu0
  %v708 = vadd.f32 0.0, %v707
  %v709 = vpop.f32.mrf.mxu0
  %v710 = vpop.f32.mrf.mxu0
  %711 = vdwg.mxu0
  %v712 = vmax.f32 %v463, %v534
  %v713 = vmax.f32 %v465, %v536
  %v714 = vmax.f32 %v467, %v538
  %v715 = vmax.f32 %v469, %v540
  %v716 = vmax.f32 %v473, %v544
  %v717 = vmax.f32 %v475, %v546
  %v718 = vmax.f32 %v477, %v548
  %v719 = vmax.f32 %v479, %v550
  %v720 = vmax.f32 %v483, %v554
  %v721 = vmax.f32 %v485, %v556
  %v722 = vmax.f32 %v487, %v558
  %v723 = vmax.f32 %v489, %v560
  %v724 = vmax.f32 %v493, %v564
  %v725 = vmax.f32 %v495, %v566
  %v726 = vmax.f32 %v605, %v676
  %v727 = vmax.f32 %v607, %v678
  %v728 = vmax.f32 %v609, %v680
  %v729 = vmax.f32 %v611, %v682
  %v730 = vmax.f32 %v615, %v686
  %v731 = vmax.f32 %v617, %v688
  %v732 = vmax.f32 %v619, %v690
  %v733 = vmax.f32 %v621, %v692
  %v734 = vmax.f32 %v625, %v696
  %v735 = vmax.f32 %v627, %v698
  %v736 = vmax.f32 %v629, %v700
  %v737 = vmax.f32 %v631, %v702
  %v738 = vmax.f32 %v635, %v706
  %v739 = vmax.f32 %v637, %v708
  %v740 = vmax.f32 %v712, %v726
  %v741 = vmax.f32 %v713, %v727
  %v742 = vmax.f32 %v714, %v728
  %v743 = vmax.f32 %v715, %v729
  %v744 = vmax.f32 %v716, %v730
  %v745 = vmax.f32 %v717, %v731
  %v746 = vmax.f32 %v718, %v732
  %v747 = vmax.f32 %v719, %v733
  %v748 = vmax.f32 %v720, %v734
  %v749 = vmax.f32 %v721, %v735
  %v750 = vmax.f32 %v722, %v736
  %v751 = vmax.f32 %v723, %v737
  %v752 = vmax.f32 %v724, %v738
  %v753 = vmax.f32 %v725, %v739
  %v754 = vld [vmem:[%s2] sm:$0x3]
  %v756 = vlaneseq
  %v757 = vshrl.u32 %v756, 7
  %v758 = vsub.s32 0, %v757
  %v759 = vrot.slane %v754, %v758
  %v760 = vlaneseq
  %v761 = vshrl.u32 %v760, 7
  %v762 = vsub.s32 1, %v761
  %v763 = vrot.slane %v754, %v762
  %v766 = vadd.f32 %v740, %v759
  %v767 = vadd.f32 %v741, %v763
  %v768 = vadd.f32 %v742, %v759
  %v769 = vadd.f32 %v743, %v763
  %v770 = vadd.f32 %v744, %v759
  %v771 = vadd.f32 %v745, %v763
  %v772 = vadd.f32 %v746, %v759
  %v773 = vadd.f32 %v747, %v763
  %v774 = vadd.f32 %v748, %v759
  %v775 = vadd.f32 %v749, %v763
  %v776 = vadd.f32 %v750, %v759
  %v777 = vadd.f32 %v751, %v763
  %v778 = vadd.f32 %v752, %v759
  %v779 = vadd.f32 %v753, %v763
  %v780 = vmax.f32 %v766, 0.0
  %v781 = vmax.f32 %v767, 0.0
  %v782 = vmax.f32 %v768, 0.0
  %v783 = vmax.f32 %v769, 0.0
  %v784 = vmax.f32 %v770, 0.0
  %v785 = vmax.f32 %v771, 0.0
  %v786 = vmax.f32 %v772, 0.0
  %v787 = vmax.f32 %v773, 0.0
  %v788 = vmax.f32 %v774, 0.0
  %v789 = vmax.f32 %v775, 0.0
  %v790 = vmax.f32 %v776, 0.0
  %v791 = vmax.f32 %v777, 0.0
  %v792 = vmax.f32 %v778, 0.0
  %v793 = vmax.f32 %v779, 0.0
  %v794 = vpack.c.bf16 %v782, %v780
  %v795 = vpack.c.bf16 %v783, %v781
  %v796 = vpack.c.bf16 %v786, %v784
  %v797 = vpack.c.bf16 %v787, %v785
  %v798 = vpack.c.bf16 %v790, %v788
  %v799 = vpack.c.bf16 %v791, %v789
  %v800 = vpack.c.bf16 %v792, %v792
  %v801 = vpack.c.bf16 %v793, %v793
  %v810 = vunpack.c.l.b16 %v794
  %v811 = vunpack.c.l.b16 %v795
  %v812 = vunpack.c.h.b16 %v794
  %v813 = vunpack.c.h.b16 %v795
  %v814 = vunpack.c.l.b16 %v796
  %v815 = vunpack.c.l.b16 %v797
  %v816 = vunpack.c.h.b16 %v796
  %v817 = vunpack.c.h.b16 %v797
  %v818 = vunpack.c.l.b16 %v798
  %v819 = vunpack.c.l.b16 %v799
  %v820 = vunpack.c.h.b16 %v798
  %v821 = vunpack.c.h.b16 %v799
  %v822 = vunpack.c.l.b16 %v800
  %v823 = vunpack.c.l.b16 %v801
  %v824 = vpack.c.b16 %v811, %v810
  %v825 = vpack.c.b16 %v813, %v812
  %v826 = vpack.c.b16 %v815, %v814
  %v827 = vpack.c.b16 %v817, %v816
  %v828 = vpack.c.b16 %v819, %v818
  %v829 = vpack.c.b16 %v821, %v820
  %v830 = vpack.c.b16 %v823, %v822
  %838 = vst [vmem:[%s3] sm:$0xff] %v824
  %839 = vst [vmem:[%s3 + $0x8] sm:$0xff] %v825
  %840 = vst [vmem:[%s3 + $0x10] sm:$0xff] %v826
  %841 = vst [vmem:[%s3 + $0x18] sm:$0xff] %v827
  %842 = vst [vmem:[%s3 + $0x20] sm:$0xff] %v828
  %843 = vst [vmem:[%s3 + $0x28] sm:$0xff] %v829
  %vm844 = vcmask 1040384
  %vm845 = vsmask.f32 256
  %vm846 = vmand %vm844, %vm845
  %vm847 = vcmask 1044484
  %vm848 = vsmask.f32 4352
  %vm849 = vmand %vm847, %vm848
  %vm850 = vmor %vm849, %vm846
  %v851 = vld [vmem:[%s3 + $0x30] sm:$0x11]
  %v852 = vsel %vm850, %v830, %v851
  %853 = vst [vmem:[%s3 + $0x30] sm:$0x11] %v852
  // Predicated region
  $region14: #{cnn_forward.3} parent=0 // pred_check
    _
  $region15: #{cnn_forward.3} parent=0 // pred_check_branch
    %855 = sbr.rel (0) target = $region17
  $region16: #{cnn_forward.3} parent=0 // pred_region
    _
  $region17: #{cnn_forward.3} parent=0 // pred_fallthru
    _
  // Predicated region
  $region18: #{cnn_forward.3} parent=0 // pred_check
    _
  $region19: #{cnn_forward.3} parent=0 // pred_check_branch
    %857 = sbr.rel (0) target = $region21
  $region20: #{cnn_forward.3} parent=0 // pred_region
    _
  $region21: #{cnn_forward.3} parent=0 // pred_fallthru
    _

// kernel: cnn_forward.4
$region0: #{cnn_forward.4}
  #allocation0 [shape = 'u32[]', space=smem, size = 0x4, offset = 0x4, fixed_abs, tag = 'smem constant byte address 0x4 - core index']
  #allocation1 [shape = 'u32[144,128]{1,0:T(1,128)}', space=vmem, size = 0x12000, scoped, tag = 'internal scratch']
  %s0 = inlined_call_operand.vmem [shape: bf16[49,1024], index: 0, kind: input, shape index: {}]
  %s1 = inlined_call_operand.vmem [shape: bf16[1024,512], index: 1, kind: input, shape index: {}]
  %s2 = inlined_call_operand.vmem [shape: f32[1,128], index: 2, kind: input, shape index: {}]
  %s3 = inlined_call_operand.vmem [shape: bf16[49,128], index: 3, kind: output, shape index: {}]
  %s4 = sld [smem:[#allocation0]]
  $region22: #{cnn_forward.4} parent=0
    _
  %s6 = ssub.s32 1, %s4
  %s7 = scalar_select 0, %s6, %s4
  // Predicated region
  $region2: #{cnn_forward.4} parent=0 // pred_check
    _
  $region3: #{cnn_forward.4} parent=0 // pred_check_branch
    %9 = sbr.rel (0) target = $region5
  $region4: #{cnn_forward.4} parent=0 // pred_region
    _
  $region5: #{cnn_forward.4} parent=0 // pred_fallthru
    _
  // Predicated region
  $region6: #{cnn_forward.4} parent=0 // pred_check
    _
  $region7: #{cnn_forward.4} parent=0 // pred_check_branch
    %11 = sbr.rel (0) target = $region9
  $region8: #{cnn_forward.4} parent=0 // pred_region
    _
  $region9: #{cnn_forward.4} parent=0 // pred_fallthru
    _
  // Predicated region
  $region10: #{cnn_forward.4} parent=0 // pred_check
    _
  $region11: #{cnn_forward.4} parent=0 // pred_check_branch
    %13 = sbr.rel (0) target = $region13
  $region12: #{cnn_forward.4} parent=0 // pred_region
    _
  $region13: #{cnn_forward.4} parent=0 // pred_fallthru
    _
  %v14 = vld [vmem:[%s0] sm:$0xff]
  %v15 = vld [vmem:[%s0 + $0x8] sm:$0xff]
  %v16 = vld [vmem:[%s0 + $0x10] sm:$0xff]
  %v17 = vld [vmem:[%s0 + $0x18] sm:$0xff]
  %v18 = vld [vmem:[%s0 + $0x20] sm:$0xff]
  %v19 = vld [vmem:[%s0 + $0x28] sm:$0xff]
  %v20 = vld [vmem:[%s0 + $0x30] sm:$0xff]
  %v21 = vld [vmem:[%s0 + $0x38] sm:$0xff]
  %v22 = vld [vmem:[%s0 + $0x40] sm:$0xff]
  %v23 = vld [vmem:[%s0 + $0x48] sm:$0xff]
  %v24 = vld [vmem:[%s0 + $0x50] sm:$0xff]
  %v25 = vld [vmem:[%s0 + $0x58] sm:$0xff]
  %v26 = vld [vmem:[%s0 + $0x60] sm:$0xff]
  %v27 = vld [vmem:[%s0 + $0x68] sm:$0xff]
  %v28 = vld [vmem:[%s0 + $0x70] sm:$0xff]
  %v29 = vld [vmem:[%s0 + $0x78] sm:$0xff]
  %v30 = vld [vmem:[%s0 + $0x80] sm:$0xff]
  %v31 = vld [vmem:[%s0 + $0x88] sm:$0xff]
  %v32 = vld [vmem:[%s0 + $0x90] sm:$0xff]
  %v33 = vld [vmem:[%s0 + $0x98] sm:$0xff]
  %v34 = vld [vmem:[%s0 + $0xa0] sm:$0xff]
  %v35 = vld [vmem:[%s0 + $0xa8] sm:$0xff]
  %v36 = vld [vmem:[%s0 + $0xb0] sm:$0xff]
  %v37 = vld [vmem:[%s0 + $0xb8] sm:$0xff]
  %v38 = vld [vmem:[%s0 + $0xc0] sm:$0x11]
  %v39 = vld [vmem:[%s0 + $0xc8] sm:$0x11]
  %v40 = vld [vmem:[%s0 + $0xd0] sm:$0x11]
  %v41 = vld [vmem:[%s0 + $0xd8] sm:$0x11]
  %v42 = vld [vmem:[%s1] sm:$0xff]
  %v43 = vld [vmem:[%s1 + $0x8] sm:$0xff]
  %v44 = vld [vmem:[%s1 + $0x10] sm:$0xff]
  %v45 = vld [vmem:[%s1 + $0x18] sm:$0xff]
  %v46 = vld [vmem:[%s1 + $0x20] sm:$0xff]
  %v47 = vld [vmem:[%s1 + $0x28] sm:$0xff]
  %v48 = vld [vmem:[%s1 + $0x30] sm:$0xff]
  %v49 = vld [vmem:[%s1 + $0x38] sm:$0xff]
  %v50 = vld [vmem:[%s1 + $0x40] sm:$0xff]
  %v51 = vld [vmem:[%s1 + $0x48] sm:$0xff]
  %v52 = vld [vmem:[%s1 + $0x50] sm:$0xff]
  %v53 = vld [vmem:[%s1 + $0x58] sm:$0xff]
  %v54 = vld [vmem:[%s1 + $0x60] sm:$0xff]
  %v55 = vld [vmem:[%s1 + $0x68] sm:$0xff]
  %v56 = vld [vmem:[%s1 + $0x70] sm:$0xff]
  %v57 = vld [vmem:[%s1 + $0x78] sm:$0xff]
  %v58 = vld [vmem:[%s1 + $0x80] sm:$0xff]
  %v59 = vld [vmem:[%s1 + $0x88] sm:$0xff]
  %v60 = vld [vmem:[%s1 + $0x90] sm:$0xff]
  %v61 = vld [vmem:[%s1 + $0x98] sm:$0xff]
  %v62 = vld [vmem:[%s1 + $0xa0] sm:$0xff]
  %v63 = vld [vmem:[%s1 + $0xa8] sm:$0xff]
  %v64 = vld [vmem:[%s1 + $0xb0] sm:$0xff]
  %v65 = vld [vmem:[%s1 + $0xb8] sm:$0xff]
  %v66 = vld [vmem:[%s1 + $0xc0] sm:$0xff]
  %v67 = vld [vmem:[%s1 + $0xc8] sm:$0xff]
  %v68 = vld [vmem:[%s1 + $0xd0] sm:$0xff]
  %v69 = vld [vmem:[%s1 + $0xd8] sm:$0xff]
  %v70 = vld [vmem:[%s1 + $0xe0] sm:$0xff]
  %v71 = vld [vmem:[%s1 + $0xe8] sm:$0xff]
  %v72 = vld [vmem:[%s1 + $0xf0] sm:$0xff]
  %v73 = vld [vmem:[%s1 + $0xf8] sm:$0xff]
  %v74 = vld [vmem:[%s1 + $0x100] sm:$0xff]
  %v75 = vld [vmem:[%s1 + $0x108] sm:$0xff]
  %v76 = vld [vmem:[%s1 + $0x110] sm:$0xff]
  %v77 = vld [vmem:[%s1 + $0x118] sm:$0xff]
  %v78 = vld [vmem:[%s1 + $0x120] sm:$0xff]
  %v79 = vld [vmem:[%s1 + $0x128] sm:$0xff]
  %v80 = vld [vmem:[%s1 + $0x130] sm:$0xff]
  %v81 = vld [vmem:[%s1 + $0x138] sm:$0xff]
  %v82 = vld [vmem:[%s1 + $0x140] sm:$0xff]
  %v83 = vld [vmem:[%s1 + $0x148] sm:$0xff]
  %v84 = vld [vmem:[%s1 + $0x150] sm:$0xff]
  %v85 = vld [vmem:[%s1 + $0x158] sm:$0xff]
  %v86 = vld [vmem:[%s1 + $0x160] sm:$0xff]
  %v87 = vld [vmem:[%s1 + $0x168] sm:$0xff]
  %v88 = vld [vmem:[%s1 + $0x170] sm:$0xff]
  %v89 = vld [vmem:[%s1 + $0x178] sm:$0xff]
  %v90 = vld [vmem:[%s1 + $0x180] sm:$0xff]
  %v91 = vld [vmem:[%s1 + $0x188] sm:$0xff]
  %v92 = vld [vmem:[%s1 + $0x190] sm:$0xff]
  %v93 = vld [vmem:[%s1 + $0x198] sm:$0xff]
  %v94 = vld [vmem:[%s1 + $0x1a0] sm:$0xff]
  %v95 = vld [vmem:[%s1 + $0x1a8] sm:$0xff]
  %v96 = vld [vmem:[%s1 + $0x1b0] sm:$0xff]
  %v97 = vld [vmem:[%s1 + $0x1b8] sm:$0xff]
  %v98 = vld [vmem:[%s1 + $0x1c0] sm:$0xff]
  %v99 = vld [vmem:[%s1 + $0x1c8] sm:$0xff]
  %v100 = vld [vmem:[%s1 + $0x1d0] sm:$0xff]
  %v101 = vld [vmem:[%s1 + $0x1d8] sm:$0xff]
  %v102 = vld [vmem:[%s1 + $0x1e0] sm:$0xff]
  %v103 = vld [vmem:[%s1 + $0x1e8] sm:$0xff]
  %v104 = vld [vmem:[%s1 + $0x1f0] sm:$0xff]
  %v105 = vld [vmem:[%s1 + $0x1f8] sm:$0xff]
  %v106 = vld [vmem:[%s1 + $0x200] sm:$0xff]
  %v107 = vld [vmem:[%s1 + $0x208] sm:$0xff]
  %v108 = vld [vmem:[%s1 + $0x210] sm:$0xff]
  %v109 = vld [vmem:[%s1 + $0x218] sm:$0xff]
  %v110 = vld [vmem:[%s1 + $0x220] sm:$0xff]
  %v111 = vld [vmem:[%s1 + $0x228] sm:$0xff]
  %v112 = vld [vmem:[%s1 + $0x230] sm:$0xff]
  %v113 = vld [vmem:[%s1 + $0x238] sm:$0xff]
  %v114 = vld [vmem:[%s1 + $0x240] sm:$0xff]
  %v115 = vld [vmem:[%s1 + $0x248] sm:$0xff]
  %v116 = vld [vmem:[%s1 + $0x250] sm:$0xff]
  %v117 = vld [vmem:[%s1 + $0x258] sm:$0xff]
  %v118 = vld [vmem:[%s1 + $0x260] sm:$0xff]
  %v119 = vld [vmem:[%s1 + $0x268] sm:$0xff]
  %v120 = vld [vmem:[%s1 + $0x270] sm:$0xff]
  %v121 = vld [vmem:[%s1 + $0x278] sm:$0xff]
  %v122 = vld [vmem:[%s1 + $0x280] sm:$0xff]
  %v123 = vld [vmem:[%s1 + $0x288] sm:$0xff]
  %v124 = vld [vmem:[%s1 + $0x290] sm:$0xff]
  %v125 = vld [vmem:[%s1 + $0x298] sm:$0xff]
  %v126 = vld [vmem:[%s1 + $0x2a0] sm:$0xff]
  %v127 = vld [vmem:[%s1 + $0x2a8] sm:$0xff]
  %v128 = vld [vmem:[%s1 + $0x2b0] sm:$0xff]
  %v129 = vld [vmem:[%s1 + $0x2b8] sm:$0xff]
  %v130 = vld [vmem:[%s1 + $0x2c0] sm:$0xff]
  %v131 = vld [vmem:[%s1 + $0x2c8] sm:$0xff]
  %v132 = vld [vmem:[%s1 + $0x2d0] sm:$0xff]
  %v133 = vld [vmem:[%s1 + $0x2d8] sm:$0xff]
  %v134 = vld [vmem:[%s1 + $0x2e0] sm:$0xff]
  %v135 = vld [vmem:[%s1 + $0x2e8] sm:$0xff]
  %v136 = vld [vmem:[%s1 + $0x2f0] sm:$0xff]
  %v137 = vld [vmem:[%s1 + $0x2f8] sm:$0xff]
  %v138 = vld [vmem:[%s1 + $0x300] sm:$0xff]
  %v139 = vld [vmem:[%s1 + $0x308] sm:$0xff]
  %v140 = vld [vmem:[%s1 + $0x310] sm:$0xff]
  %v141 = vld [vmem:[%s1 + $0x318] sm:$0xff]
  %v142 = vld [vmem:[%s1 + $0x320] sm:$0xff]
  %v143 = vld [vmem:[%s1 + $0x328] sm:$0xff]
  %v144 = vld [vmem:[%s1 + $0x330] sm:$0xff]
  %v145 = vld [vmem:[%s1 + $0x338] sm:$0xff]
  %v146 = vld [vmem:[%s1 + $0x340] sm:$0xff]
  %v147 = vld [vmem:[%s1 + $0x348] sm:$0xff]
  %v148 = vld [vmem:[%s1 + $0x350] sm:$0xff]
  %v149 = vld [vmem:[%s1 + $0x358] sm:$0xff]
  %v150 = vld [vmem:[%s1 + $0x360] sm:$0xff]
  %v151 = vld [vmem:[%s1 + $0x368] sm:$0xff]
  %v152 = vld [vmem:[%s1 + $0x370] sm:$0xff]
  %v153 = vld [vmem:[%s1 + $0x378] sm:$0xff]
  %v154 = vld [vmem:[%s1 + $0x380] sm:$0xff]
  %v155 = vld [vmem:[%s1 + $0x388] sm:$0xff]
  %v156 = vld [vmem:[%s1 + $0x390] sm:$0xff]
  %v157 = vld [vmem:[%s1 + $0x398] sm:$0xff]
  %v158 = vld [vmem:[%s1 + $0x3a0] sm:$0xff]
  %v159 = vld [vmem:[%s1 + $0x3a8] sm:$0xff]
  %v160 = vld [vmem:[%s1 + $0x3b0] sm:$0xff]
  %v161 = vld [vmem:[%s1 + $0x3b8] sm:$0xff]
  %v162 = vld [vmem:[%s1 + $0x3c0] sm:$0xff]
  %v163 = vld [vmem:[%s1 + $0x3c8] sm:$0xff]
  %v164 = vld [vmem:[%s1 + $0x3d0] sm:$0xff]
  %v165 = vld [vmem:[%s1 + $0x3d8] sm:$0xff]
  %v166 = vld [vmem:[%s1 + $0x3e0] sm:$0xff]
  %v167 = vld [vmem:[%s1 + $0x3e8] sm:$0xff]
  %v168 = vld [vmem:[%s1 + $0x3f0] sm:$0xff]
  %v169 = vld [vmem:[%s1 + $0x3f8] sm:$0xff]
  %v170 = vld [vmem:[%s1 + $0x400] sm:$0xff]
  %v171 = vld [vmem:[%s1 + $0x408] sm:$0xff]
  %v172 = vld [vmem:[%s1 + $0x410] sm:$0xff]
  %v173 = vld [vmem:[%s1 + $0x418] sm:$0xff]
  %v174 = vld [vmem:[%s1 + $0x420] sm:$0xff]
  %v175 = vld [vmem:[%s1 + $0x428] sm:$0xff]
  %v176 = vld [vmem:[%s1 + $0x430] sm:$0xff]
  %v177 = vld [vmem:[%s1 + $0x438] sm:$0xff]
  %v178 = vld [vmem:[%s1 + $0x440] sm:$0xff]
  %v179 = vld [vmem:[%s1 + $0x448] sm:$0xff]
  %v180 = vld [vmem:[%s1 + $0x450] sm:$0xff]
  %v181 = vld [vmem:[%s1 + $0x458] sm:$0xff]
  %v182 = vld [vmem:[%s1 + $0x460] sm:$0xff]
  %v183 = vld [vmem:[%s1 + $0x468] sm:$0xff]
  %v184 = vld [vmem:[%s1 + $0x470] sm:$0xff]
  %v185 = vld [vmem:[%s1 + $0x478] sm:$0xff]
  %v186 = vld [vmem:[%s1 + $0x480] sm:$0xff]
  %v187 = vld [vmem:[%s1 + $0x488] sm:$0xff]
  %v188 = vld [vmem:[%s1 + $0x490] sm:$0xff]
  %v189 = vld [vmem:[%s1 + $0x498] sm:$0xff]
  %v190 = vld [vmem:[%s1 + $0x4a0] sm:$0xff]
  %v191 = vld [vmem:[%s1 + $0x4a8] sm:$0xff]
  %v192 = vld [vmem:[%s1 + $0x4b0] sm:$0xff]
  %v193 = vld [vmem:[%s1 + $0x4b8] sm:$0xff]
  %v194 = vld [vmem:[%s1 + $0x4c0] sm:$0xff]
  %v195 = vld [vmem:[%s1 + $0x4c8] sm:$0xff]
  %v196 = vld [vmem:[%s1 + $0x4d0] sm:$0xff]
  %v197 = vld [vmem:[%s1 + $0x4d8] sm:$0xff]
  %v198 = vld [vmem:[%s1 + $0x4e0] sm:$0xff]
  %v199 = vld [vmem:[%s1 + $0x4e8] sm:$0xff]
  %v200 = vld [vmem:[%s1 + $0x4f0] sm:$0xff]
  %v201 = vld [vmem:[%s1 + $0x4f8] sm:$0xff]
  %v202 = vld [vmem:[%s1 + $0x500] sm:$0xff]
  %v203 = vld [vmem:[%s1 + $0x508] sm:$0xff]
  %v204 = vld [vmem:[%s1 + $0x510] sm:$0xff]
  %v205 = vld [vmem:[%s1 + $0x518] sm:$0xff]
  %v206 = vld [vmem:[%s1 + $0x520] sm:$0xff]
  %v207 = vld [vmem:[%s1 + $0x528] sm:$0xff]
  %v208 = vld [vmem:[%s1 + $0x530] sm:$0xff]
  %v209 = vld [vmem:[%s1 + $0x538] sm:$0xff]
  %v210 = vld [vmem:[%s1 + $0x540] sm:$0xff]
  %v211 = vld [vmem:[%s1 + $0x548] sm:$0xff]
  %v212 = vld [vmem:[%s1 + $0x550] sm:$0xff]
  %v213 = vld [vmem:[%s1 + $0x558] sm:$0xff]
  %v214 = vld [vmem:[%s1 + $0x560] sm:$0xff]
  %v215 = vld [vmem:[%s1 + $0x568] sm:$0xff]
  %v216 = vld [vmem:[%s1 + $0x570] sm:$0xff]
  %v217 = vld [vmem:[%s1 + $0x578] sm:$0xff]
  %v218 = vld [vmem:[%s1 + $0x580] sm:$0xff]
  %v219 = vld [vmem:[%s1 + $0x588] sm:$0xff]
  %v220 = vld [vmem:[%s1 + $0x590] sm:$0xff]
  %v221 = vld [vmem:[%s1 + $0x598] sm:$0xff]
  %v222 = vld [vmem:[%s1 + $0x5a0] sm:$0xff]
  %v223 = vld [vmem:[%s1 + $0x5a8] sm:$0xff]
  %v224 = vld [vmem:[%s1 + $0x5b0] sm:$0xff]
  %v225 = vld [vmem:[%s1 + $0x5b8] sm:$0xff]
  %v226 = vld [vmem:[%s1 + $0x5c0] sm:$0xff]
  %v227 = vld [vmem:[%s1 + $0x5c8] sm:$0xff]
  %v228 = vld [vmem:[%s1 + $0x5d0] sm:$0xff]
  %v229 = vld [vmem:[%s1 + $0x5d8] sm:$0xff]
  %v230 = vld [vmem:[%s1 + $0x5e0] sm:$0xff]
  %v231 = vld [vmem:[%s1 + $0x5e8] sm:$0xff]
  %v232 = vld [vmem:[%s1 + $0x5f0] sm:$0xff]
  %v233 = vld [vmem:[%s1 + $0x5f8] sm:$0xff]
  %v234 = vld [vmem:[%s1 + $0x600] sm:$0xff]
  %v235 = vld [vmem:[%s1 + $0x608] sm:$0xff]
  %v236 = vld [vmem:[%s1 + $0x610] sm:$0xff]
  %v237 = vld [vmem:[%s1 + $0x618] sm:$0xff]
  %v238 = vld [vmem:[%s1 + $0x620] sm:$0xff]
  %v239 = vld [vmem:[%s1 + $0x628] sm:$0xff]
  %v240 = vld [vmem:[%s1 + $0x630] sm:$0xff]
  %v241 = vld [vmem:[%s1 + $0x638] sm:$0xff]
  %v242 = vld [vmem:[%s1 + $0x640] sm:$0xff]
  %v243 = vld [vmem:[%s1 + $0x648] sm:$0xff]
  %v244 = vld [vmem:[%s1 + $0x650] sm:$0xff]
  %v245 = vld [vmem:[%s1 + $0x658] sm:$0xff]
  %v246 = vld [vmem:[%s1 + $0x660] sm:$0xff]
  %v247 = vld [vmem:[%s1 + $0x668] sm:$0xff]
  %v248 = vld [vmem:[%s1 + $0x670] sm:$0xff]
  %v249 = vld [vmem:[%s1 + $0x678] sm:$0xff]
  %v250 = vld [vmem:[%s1 + $0x680] sm:$0xff]
  %v251 = vld [vmem:[%s1 + $0x688] sm:$0xff]
  %v252 = vld [vmem:[%s1 + $0x690] sm:$0xff]
  %v253 = vld [vmem:[%s1 + $0x698] sm:$0xff]
  %v254 = vld [vmem:[%s1 + $0x6a0] sm:$0xff]
  %v255 = vld [vmem:[%s1 + $0x6a8] sm:$0xff]
  %v256 = vld [vmem:[%s1 + $0x6b0] sm:$0xff]
  %v257 = vld [vmem:[%s1 + $0x6b8] sm:$0xff]
  %v258 = vld [vmem:[%s1 + $0x6c0] sm:$0xff]
  %v259 = vld [vmem:[%s1 + $0x6c8] sm:$0xff]
  %v260 = vld [vmem:[%s1 + $0x6d0] sm:$0xff]
  %v261 = vld [vmem:[%s1 + $0x6d8] sm:$0xff]
  %v262 = vld [vmem:[%s1 + $0x6e0] sm:$0xff]
  %v263 = vld [vmem:[%s1 + $0x6e8] sm:$0xff]
  %v264 = vld [vmem:[%s1 + $0x6f0] sm:$0xff]
  %v265 = vld [vmem:[%s1 + $0x6f8] sm:$0xff]
  %v266 = vld [vmem:[%s1 + $0x700] sm:$0xff]
  %v267 = vld [vmem:[%s1 + $0x708] sm:$0xff]
  %v268 = vld [vmem:[%s1 + $0x710] sm:$0xff]
  %v269 = vld [vmem:[%s1 + $0x718] sm:$0xff]
  %v270 = vld [vmem:[%s1 + $0x720] sm:$0xff]
  %v271 = vld [vmem:[%s1 + $0x728] sm:$0xff]
  %v272 = vld [vmem:[%s1 + $0x730] sm:$0xff]
  %v273 = vld [vmem:[%s1 + $0x738] sm:$0xff]
  %v274 = vld [vmem:[%s1 + $0x740] sm:$0xff]
  %v275 = vld [vmem:[%s1 + $0x748] sm:$0xff]
  %v276 = vld [vmem:[%s1 + $0x750] sm:$0xff]
  %v277 = vld [vmem:[%s1 + $0x758] sm:$0xff]
  %v278 = vld [vmem:[%s1 + $0x760] sm:$0xff]
  %v279 = vld [vmem:[%s1 + $0x768] sm:$0xff]
  %v280 = vld [vmem:[%s1 + $0x770] sm:$0xff]
  %v281 = vld [vmem:[%s1 + $0x778] sm:$0xff]
  %v282 = vld [vmem:[%s1 + $0x780] sm:$0xff]
  %v283 = vld [vmem:[%s1 + $0x788] sm:$0xff]
  %v284 = vld [vmem:[%s1 + $0x790] sm:$0xff]
  %v285 = vld [vmem:[%s1 + $0x798] sm:$0xff]
  %v286 = vld [vmem:[%s1 + $0x7a0] sm:$0xff]
  %v287 = vld [vmem:[%s1 + $0x7a8] sm:$0xff]
  %v288 = vld [vmem:[%s1 + $0x7b0] sm:$0xff]
  %v289 = vld [vmem:[%s1 + $0x7b8] sm:$0xff]
  %v290 = vld [vmem:[%s1 + $0x7c0] sm:$0xff]
  %v291 = vld [vmem:[%s1 + $0x7c8] sm:$0xff]
  %v292 = vld [vmem:[%s1 + $0x7d0] sm:$0xff]
  %v293 = vld [vmem:[%s1 + $0x7d8] sm:$0xff]
  %v294 = vld [vmem:[%s1 + $0x7e0] sm:$0xff]
  %v295 = vld [vmem:[%s1 + $0x7e8] sm:$0xff]
  %v296 = vld [vmem:[%s1 + $0x7f0] sm:$0xff]
  %v297 = vld [vmem:[%s1 + $0x7f8] sm:$0xff]
  %v326 = vunpack.c.l.b16 %v14
  %v327 = vunpack.c.h.b16 %v14
  %v328 = vunpack.c.l.b16 %v15
  %v329 = vunpack.c.h.b16 %v15
  %v330 = vunpack.c.l.b16 %v16
  %v331 = vunpack.c.h.b16 %v16
  %v332 = vunpack.c.l.b16 %v17
  %v333 = vunpack.c.h.b16 %v17
  %v334 = vunpack.c.l.b16 %v18
  %v335 = vunpack.c.h.b16 %v18
  %v336 = vunpack.c.l.b16 %v19
  %v337 = vunpack.c.h.b16 %v19
  %v338 = vunpack.c.l.b16 %v20
  %v339 = vunpack.c.h.b16 %v20
  %v340 = vunpack.c.l.b16 %v21
  %v341 = vunpack.c.h.b16 %v21
  %v342 = vunpack.c.l.b16 %v22
  %v343 = vunpack.c.h.b16 %v22
  %v344 = vunpack.c.l.b16 %v23
  %v345 = vunpack.c.h.b16 %v23
  %v346 = vunpack.c.l.b16 %v24
  %v347 = vunpack.c.h.b16 %v24
  %v348 = vunpack.c.l.b16 %v25
  %v349 = vunpack.c.h.b16 %v25
  %v350 = vunpack.c.l.b16 %v26
  %v351 = vunpack.c.h.b16 %v26
  %v352 = vunpack.c.l.b16 %v27
  %v353 = vunpack.c.h.b16 %v27
  %v354 = vunpack.c.l.b16 %v28
  %v355 = vunpack.c.h.b16 %v28
  %v356 = vunpack.c.l.b16 %v29
  %v357 = vunpack.c.h.b16 %v29
  %v358 = vunpack.c.l.b16 %v30
  %v359 = vunpack.c.h.b16 %v30
  %v360 = vunpack.c.l.b16 %v31
  %v361 = vunpack.c.h.b16 %v31
  %v362 = vunpack.c.l.b16 %v32
  %v363 = vunpack.c.h.b16 %v32
  %v364 = vunpack.c.l.b16 %v33
  %v365 = vunpack.c.h.b16 %v33
  %v366 = vunpack.c.l.b16 %v34
  %v367 = vunpack.c.h.b16 %v34
  %v368 = vunpack.c.l.b16 %v35
  %v369 = vunpack.c.h.b16 %v35
  %v370 = vunpack.c.l.b16 %v36
  %v371 = vunpack.c.h.b16 %v36
  %v372 = vunpack.c.l.b16 %v37
  %v373 = vunpack.c.h.b16 %v37
  %v374 = vunpack.c.l.b16 %v38
  %v375 = vunpack.c.h.b16 %v38
  %v376 = vunpack.c.l.b16 %v39
  %v377 = vunpack.c.h.b16 %v39
  %v378 = vunpack.c.l.b16 %v40
  %v379 = vunpack.c.h.b16 %v40
  %v380 = vunpack.c.l.b16 %v41
  %v381 = vunpack.c.h.b16 %v41
  %v382 = vpack.c.b16 %v334, %v326
  %v383 = vpack.c.b16 %v335, %v327
  %v384 = vpack.c.b16 %v336, %v328
  %v385 = vpack.c.b16 %v337, %v329
  %v386 = vpack.c.b16 %v338, %v330
  %v387 = vpack.c.b16 %v339, %v331
  %v388 = vpack.c.b16 %v340, %v332
  %v389 = vpack.c.b16 %v341, %v333
  %v390 = vpack.c.b16 %v350, %v342
  %v391 = vpack.c.b16 %v351, %v343
  %v392 = vpack.c.b16 %v352, %v344
  %v393 = vpack.c.b16 %v353, %v345
  %v394 = vpack.c.b16 %v354, %v346
  %v395 = vpack.c.b16 %v355, %v347
  %v396 = vpack.c.b16 %v356, %v348
  %v397 = vpack.c.b16 %v357, %v349
  %v398 = vpack.c.b16 %v366, %v358
  %v399 = vpack.c.b16 %v367, %v359
  %v400 = vpack.c.b16 %v368, %v360
  %v401 = vpack.c.b16 %v369, %v361
  %v402 = vpack.c.b16 %v370, %v362
  %v403 = vpack.c.b16 %v371, %v363
  %v404 = vpack.c.b16 %v372, %v364
  %v405 = vpack.c.b16 %v373, %v365
  %v406 = vpack.c.b16 %v374, %v374
  %v407 = vpack.c.b16 %v375, %v375
  %v408 = vpack.c.b16 %v376, %v376
  %v409 = vpack.c.b16 %v377, %v377
  %v410 = vpack.c.b16 %v378, %v378
  %v411 = vpack.c.b16 %v379, %v379
  %v412 = vpack.c.b16 %v380, %v380
  %v413 = vpack.c.b16 %v381, %v381
  %v702 = vunpack.c.l.b16 %v42
  %v703 = vunpack.c.h.b16 %v42
  %v704 = vunpack.c.l.b16 %v43
  %v705 = vunpack.c.h.b16 %v43
  %v706 = vunpack.c.l.b16 %v44
  %v707 = vunpack.c.h.b16 %v44
  %v708 = vunpack.c.l.b16 %v45
  %v709 = vunpack.c.h.b16 %v45
  %v710 = vunpack.c.l.b16 %v46
  %v711 = vunpack.c.h.b16 %v46
  %v712 = vunpack.c.l.b16 %v47
  %v713 = vunpack.c.h.b16 %v47
  %v714 = vunpack.c.l.b16 %v48
  %v715 = vunpack.c.h.b16 %v48
  %v716 = vunpack.c.l.b16 %v49
  %v717 = vunpack.c.h.b16 %v49
  %v718 = vunpack.c.l.b16 %v50
  %v719 = vunpack.c.h.b16 %v50
  %v720 = vunpack.c.l.b16 %v51
  %v721 = vunpack.c.h.b16 %v51
  %v722 = vunpack.c.l.b16 %v52
  %v723 = vunpack.c.h.b16 %v52
  %v724 = vunpack.c.l.b16 %v53
  %v725 = vunpack.c.h.b16 %v53
  %v726 = vunpack.c.l.b16 %v54
  %v727 = vunpack.c.h.b16 %v54
  %v728 = vunpack.c.l.b16 %v55
  %v729 = vunpack.c.h.b16 %v55
  %v730 = vunpack.c.l.b16 %v56
  %v731 = vunpack.c.h.b16 %v56
  %v732 = vunpack.c.l.b16 %v57
  %v733 = vunpack.c.h.b16 %v57
  %v734 = vunpack.c.l.b16 %v58
  %v735 = vunpack.c.h.b16 %v58
  %v736 = vunpack.c.l.b16 %v59
  %v737 = vunpack.c.h.b16 %v59
  %v738 = vunpack.c.l.b16 %v60
  %v739 = vunpack.c.h.b16 %v60
  %v740 = vunpack.c.l.b16 %v61
  %v741 = vunpack.c.h.b16 %v61
  %v742 = vunpack.c.l.b16 %v62
  %v743 = vunpack.c.h.b16 %v62
  %v744 = vunpack.c.l.b16 %v63
  %v745 = vunpack.c.h.b16 %v63
  %v746 = vunpack.c.l.b16 %v64
  %v747 = vunpack.c.h.b16 %v64
  %v748 = vunpack.c.l.b16 %v65
  %v749 = vunpack.c.h.b16 %v65
  %v750 = vunpack.c.l.b16 %v66
  %v751 = vunpack.c.h.b16 %v66
  %v752 = vunpack.c.l.b16 %v67
  %v753 = vunpack.c.h.b16 %v67
  %v754 = vunpack.c.l.b16 %v68
  %v755 = vunpack.c.h.b16 %v68
  %v756 = vunpack.c.l.b16 %v69
  %v757 = vunpack.c.h.b16 %v69
  %v758 = vunpack.c.l.b16 %v70
  %v759 = vunpack.c.h.b16 %v70
  %v760 = vunpack.c.l.b16 %v71
  %v761 = vunpack.c.h.b16 %v71
  %v762 = vunpack.c.l.b16 %v72
  %v763 = vunpack.c.h.b16 %v72
  %v764 = vunpack.c.l.b16 %v73
  %v765 = vunpack.c.h.b16 %v73
  %v766 = vunpack.c.l.b16 %v74
  %v767 = vunpack.c.h.b16 %v74
  %v768 = vunpack.c.l.b16 %v75
  %v769 = vunpack.c.h.b16 %v75
  %v770 = vunpack.c.l.b16 %v76
  %v771 = vunpack.c.h.b16 %v76
  %v772 = vunpack.c.l.b16 %v77
  %v773 = vunpack.c.h.b16 %v77
  %v774 = vunpack.c.l.b16 %v78
  %v775 = vunpack.c.h.b16 %v78
  %v776 = vunpack.c.l.b16 %v79
  %v777 = vunpack.c.h.b16 %v79
  %v778 = vunpack.c.l.b16 %v80
  %v779 = vunpack.c.h.b16 %v80
  %v780 = vunpack.c.l.b16 %v81
  %v781 = vunpack.c.h.b16 %v81
  %v782 = vunpack.c.l.b16 %v82
  %v783 = vunpack.c.h.b16 %v82
  %v784 = vunpack.c.l.b16 %v83
  %v785 = vunpack.c.h.b16 %v83
  %v786 = vunpack.c.l.b16 %v84
  %v787 = vunpack.c.h.b16 %v84
  %v788 = vunpack.c.l.b16 %v85
  %v789 = vunpack.c.h.b16 %v85
  %v790 = vunpack.c.l.b16 %v86
  %v791 = vunpack.c.h.b16 %v86
  %v792 = vunpack.c.l.b16 %v87
  %v793 = vunpack.c.h.b16 %v87
  %v794 = vunpack.c.l.b16 %v88
  %v795 = vunpack.c.h.b16 %v88
  %v796 = vunpack.c.l.b16 %v89
  %v797 = vunpack.c.h.b16 %v89
  %v798 = vunpack.c.l.b16 %v90
  %v799 = vunpack.c.h.b16 %v90
  %v800 = vunpack.c.l.b16 %v91
  %v801 = vunpack.c.h.b16 %v91
  %v802 = vunpack.c.l.b16 %v92
  %v803 = vunpack.c.h.b16 %v92
  %v804 = vunpack.c.l.b16 %v93
  %v805 = vunpack.c.h.b16 %v93
  %v806 = vunpack.c.l.b16 %v94
  %v807 = vunpack.c.h.b16 %v94
  %v808 = vunpack.c.l.b16 %v95
  %v809 = vunpack.c.h.b16 %v95
  %v810 = vunpack.c.l.b16 %v96
  %v811 = vunpack.c.h.b16 %v96
  %v812 = vunpack.c.l.b16 %v97
  %v813 = vunpack.c.h.b16 %v97
  %v814 = vunpack.c.l.b16 %v98
  %v815 = vunpack.c.h.b16 %v98
  %v816 = vunpack.c.l.b16 %v99
  %v817 = vunpack.c.h.b16 %v99
  %v818 = vunpack.c.l.b16 %v100
  %v819 = vunpack.c.h.b16 %v100
  %v820 = vunpack.c.l.b16 %v101
  %v821 = vunpack.c.h.b16 %v101
  %v822 = vunpack.c.l.b16 %v102
  %v823 = vunpack.c.h.b16 %v102
  %v824 = vunpack.c.l.b16 %v103
  %v825 = vunpack.c.h.b16 %v103
  %v826 = vunpack.c.l.b16 %v104
  %v827 = vunpack.c.h.b16 %v104
  %v828 = vunpack.c.l.b16 %v105
  %v829 = vunpack.c.h.b16 %v105
  %v830 = vunpack.c.l.b16 %v106
  %v831 = vunpack.c.h.b16 %v106
  %v832 = vunpack.c.l.b16 %v107
  %v833 = vunpack.c.h.b16 %v107
  %v834 = vunpack.c.l.b16 %v108
  %v835 = vunpack.c.h.b16 %v108
  %v836 = vunpack.c.l.b16 %v109
  %v837 = vunpack.c.h.b16 %v109
  %v838 = vunpack.c.l.b16 %v110
  %v839 = vunpack.c.h.b16 %v110
  %v840 = vunpack.c.l.b16 %v111
  %v841 = vunpack.c.h.b16 %v111
  %v842 = vunpack.c.l.b16 %v112
  %v843 = vunpack.c.h.b16 %v112
  %v844 = vunpack.c.l.b16 %v113
  %v845 = vunpack.c.h.b16 %v113
  %v846 = vunpack.c.l.b16 %v114
  %v847 = vunpack.c.h.b16 %v114
  %v848 = vunpack.c.l.b16 %v115
  %v849 = vunpack.c.h.b16 %v115
  %v850 = vunpack.c.l.b16 %v116
  %v851 = vunpack.c.h.b16 %v116
  %v852 = vunpack.c.l.b16 %v117
  %v853 = vunpack.c.h.b16 %v117
  %v854 = vunpack.c.l.b16 %v118
  %v855 = vunpack.c.h.b16 %v118
  %v856 = vunpack.c.l.b16 %v119
  %v857 = vunpack.c.h.b16 %v119
  %v858 = vunpack.c.l.b16 %v120
  %v859 = vunpack.c.h.b16 %v120
  %v860 = vunpack.c.l.b16 %v121
  %v861 = vunpack.c.h.b16 %v121
  %v862 = vunpack.c.l.b16 %v122
  %v863 = vunpack.c.h.b16 %v122
  %v864 = vunpack.c.l.b16 %v123
  %v865 = vunpack.c.h.b16 %v123
  %v866 = vunpack.c.l.b16 %v124
  %v867 = vunpack.c.h.b16 %v124
  %v868 = vunpack.c.l.b16 %v125
  %v869 = vunpack.c.h.b16 %v125
  %v870 = vunpack.c.l.b16 %v126
  %v871 = vunpack.c.h.b16 %v126
  %v872 = vunpack.c.l.b16 %v127
  %v873 = vunpack.c.h.b16 %v127
  %v874 = vunpack.c.l.b16 %v128
  %v875 = vunpack.c.h.b16 %v128
  %v876 = vunpack.c.l.b16 %v129
  %v877 = vunpack.c.h.b16 %v129
  %v878 = vunpack.c.l.b16 %v130
  %v879 = vunpack.c.h.b16 %v130
  %v880 = vunpack.c.l.b16 %v131
  %v881 = vunpack.c.h.b16 %v131
  %v882 = vunpack.c.l.b16 %v132
  %v883 = vunpack.c.h.b16 %v132
  %v884 = vunpack.c.l.b16 %v133
  %v885 = vunpack.c.h.b16 %v133
  %v886 = vunpack.c.l.b16 %v134
  %v887 = vunpack.c.h.b16 %v134
  %v888 = vunpack.c.l.b16 %v135
  %v889 = vunpack.c.h.b16 %v135
  %v890 = vunpack.c.l.b16 %v136
  %v891 = vunpack.c.h.b16 %v136
  %v892 = vunpack.c.l.b16 %v137
  %v893 = vunpack.c.h.b16 %v137
  %v894 = vunpack.c.l.b16 %v138
  %v895 = vunpack.c.h.b16 %v138
  %v896 = vunpack.c.l.b16 %v139
  %v897 = vunpack.c.h.b16 %v139
  %v898 = vunpack.c.l.b16 %v140
  %v899 = vunpack.c.h.b16 %v140
  %v900 = vunpack.c.l.b16 %v141
  %v901 = vunpack.c.h.b16 %v141
  %v902 = vunpack.c.l.b16 %v142
  %v903 = vunpack.c.h.b16 %v142
  %v904 = vunpack.c.l.b16 %v143
  %v905 = vunpack.c.h.b16 %v143
  %v906 = vunpack.c.l.b16 %v144
  %v907 = vunpack.c.h.b16 %v144
  %v908 = vunpack.c.l.b16 %v145
  %v909 = vunpack.c.h.b16 %v145
  %v910 = vunpack.c.l.b16 %v146
  %v911 = vunpack.c.h.b16 %v146
  %v912 = vunpack.c.l.b16 %v147
  %v913 = vunpack.c.h.b16 %v147
  %v914 = vunpack.c.l.b16 %v148
  %v915 = vunpack.c.h.b16 %v148
  %v916 = vunpack.c.l.b16 %v149
  %v917 = vunpack.c.h.b16 %v149
  %v918 = vunpack.c.l.b16 %v150
  %v919 = vunpack.c.h.b16 %v150
  %v920 = vunpack.c.l.b16 %v151
  %v921 = vunpack.c.h.b16 %v151
  %v922 = vunpack.c.l.b16 %v152
  %v923 = vunpack.c.h.b16 %v152
  %v924 = vunpack.c.l.b16 %v153
  %v925 = vunpack.c.h.b16 %v153
  %v926 = vunpack.c.l.b16 %v154
  %v927 = vunpack.c.h.b16 %v154
  %v928 = vunpack.c.l.b16 %v155
  %v929 = vunpack.c.h.b16 %v155
  %v930 = vunpack.c.l.b16 %v156
  %v931 = vunpack.c.h.b16 %v156
  %v932 = vunpack.c.l.b16 %v157
  %v933 = vunpack.c.h.b16 %v157
  %v934 = vunpack.c.l.b16 %v158
  %v935 = vunpack.c.h.b16 %v158
  %v936 = vunpack.c.l.b16 %v159
  %v937 = vunpack.c.h.b16 %v159
  %v938 = vunpack.c.l.b16 %v160
  %v939 = vunpack.c.h.b16 %v160
  %v940 = vunpack.c.l.b16 %v161
  %v941 = vunpack.c.h.b16 %v161
  %v942 = vunpack.c.l.b16 %v162
  %v943 = vunpack.c.h.b16 %v162
  %v944 = vunpack.c.l.b16 %v163
  %v945 = vunpack.c.h.b16 %v163
  %v946 = vunpack.c.l.b16 %v164
  %v947 = vunpack.c.h.b16 %v164
  %v948 = vunpack.c.l.b16 %v165
  %v949 = vunpack.c.h.b16 %v165
  %v950 = vunpack.c.l.b16 %v166
  %v951 = vunpack.c.h.b16 %v166
  %v952 = vunpack.c.l.b16 %v167
  %v953 = vunpack.c.h.b16 %v167
  %v954 = vunpack.c.l.b16 %v168
  %v955 = vunpack.c.h.b16 %v168
  %v956 = vunpack.c.l.b16 %v169
  %v957 = vunpack.c.h.b16 %v169
  %v958 = vunpack.c.l.b16 %v170
  %v959 = vunpack.c.h.b16 %v170
  %v960 = vunpack.c.l.b16 %v171
  %v961 = vunpack.c.h.b16 %v171
  %v962 = vunpack.c.l.b16 %v172
  %v963 = vunpack.c.h.b16 %v172
  %v964 = vunpack.c.l.b16 %v173
  %v965 = vunpack.c.h.b16 %v173
  %v966 = vunpack.c.l.b16 %v174
  %v967 = vunpack.c.h.b16 %v174
  %v968 = vunpack.c.l.b16 %v175
  %v969 = vunpack.c.h.b16 %v175
  %v970 = vunpack.c.l.b16 %v176
  %v971 = vunpack.c.h.b16 %v176
  %v972 = vunpack.c.l.b16 %v177
  %v973 = vunpack.c.h.b16 %v177
  %v974 = vunpack.c.l.b16 %v178
  %v975 = vunpack.c.h.b16 %v178
  %v976 = vunpack.c.l.b16 %v179
  %v977 = vunpack.c.h.b16 %v179
  %v978 = vunpack.c.l.b16 %v180
  %v979 = vunpack.c.h.b16 %v180
  %v980 = vunpack.c.l.b16 %v181
  %v981 = vunpack.c.h.b16 %v181
  %v982 = vunpack.c.l.b16 %v182
  %v983 = vunpack.c.h.b16 %v182
  %v984 = vunpack.c.l.b16 %v183
  %v985 = vunpack.c.h.b16 %v183
  %v986 = vunpack.c.l.b16 %v184
  %v987 = vunpack.c.h.b16 %v184
  %v988 = vunpack.c.l.b16 %v185
  %v989 = vunpack.c.h.b16 %v185
  %v990 = vunpack.c.l.b16 %v186
  %v991 = vunpack.c.h.b16 %v186
  %v992 = vunpack.c.l.b16 %v187
  %v993 = vunpack.c.h.b16 %v187
  %v994 = vunpack.c.l.b16 %v188
  %v995 = vunpack.c.h.b16 %v188
  %v996 = vunpack.c.l.b16 %v189
  %v997 = vunpack.c.h.b16 %v189
  %v998 = vunpack.c.l.b16 %v190
  %v999 = vunpack.c.h.b16 %v190
  %v1000 = vunpack.c.l.b16 %v191
  %v1001 = vunpack.c.h.b16 %v191
  %v1002 = vunpack.c.l.b16 %v192
  %v1003 = vunpack.c.h.b16 %v192
  %v1004 = vunpack.c.l.b16 %v193
  %v1005 = vunpack.c.h.b16 %v193
  %v1006 = vunpack.c.l.b16 %v194
  %v1007 = vunpack.c.h.b16 %v194
  %v1008 = vunpack.c.l.b16 %v195
  %v1009 = vunpack.c.h.b16 %v195
  %v1010 = vunpack.c.l.b16 %v196
  %v1011 = vunpack.c.h.b16 %v196
  %v1012 = vunpack.c.l.b16 %v197
  %v1013 = vunpack.c.h.b16 %v197
  %v1014 = vunpack.c.l.b16 %v198
  %v1015 = vunpack.c.h.b16 %v198
  %v1016 = vunpack.c.l.b16 %v199
  %v1017 = vunpack.c.h.b16 %v199
  %v1018 = vunpack.c.l.b16 %v200
  %v1019 = vunpack.c.h.b16 %v200
  %v1020 = vunpack.c.l.b16 %v201
  %v1021 = vunpack.c.h.b16 %v201
  %v1022 = vunpack.c.l.b16 %v202
  %v1023 = vunpack.c.h.b16 %v202
  %v1024 = vunpack.c.l.b16 %v203
  %v1025 = vunpack.c.h.b16 %v203
  %v1026 = vunpack.c.l.b16 %v204
  %v1027 = vunpack.c.h.b16 %v204
  %v1028 = vunpack.c.l.b16 %v205
  %v1029 = vunpack.c.h.b16 %v205
  %v1030 = vunpack.c.l.b16 %v206
  %v1031 = vunpack.c.h.b16 %v206
  %v1032 = vunpack.c.l.b16 %v207
  %v1033 = vunpack.c.h.b16 %v207
  %v1034 = vunpack.c.l.b16 %v208
  %v1035 = vunpack.c.h.b16 %v208
  %v1036 = vunpack.c.l.b16 %v209
  %v1037 = vunpack.c.h.b16 %v209
  %v1038 = vunpack.c.l.b16 %v210
  %v1039 = vunpack.c.h.b16 %v210
  %v1040 = vunpack.c.l.b16 %v211
  %v1041 = vunpack.c.h.b16 %v211
  %v1042 = vunpack.c.l.b16 %v212
  %v1043 = vunpack.c.h.b16 %v212
  %v1044 = vunpack.c.l.b16 %v213
  %v1045 = vunpack.c.h.b16 %v213
  %v1046 = vunpack.c.l.b16 %v214
  %v1047 = vunpack.c.h.b16 %v214
  %v1048 = vunpack.c.l.b16 %v215
  %v1049 = vunpack.c.h.b16 %v215
  %v1050 = vunpack.c.l.b16 %v216
  %v1051 = vunpack.c.h.b16 %v216
  %v1052 = vunpack.c.l.b16 %v217
  %v1053 = vunpack.c.h.b16 %v217
  %v1054 = vunpack.c.l.b16 %v218
  %v1055 = vunpack.c.h.b16 %v218
  %v1056 = vunpack.c.l.b16 %v219
  %v1057 = vunpack.c.h.b16 %v219
  %v1058 = vunpack.c.l.b16 %v220
  %v1059 = vunpack.c.h.b16 %v220
  %v1060 = vunpack.c.l.b16 %v221
  %v1061 = vunpack.c.h.b16 %v221
  %v1062 = vunpack.c.l.b16 %v222
  %v1063 = vunpack.c.h.b16 %v222
  %v1064 = vunpack.c.l.b16 %v223
  %v1065 = vunpack.c.h.b16 %v223
  %v1066 = vunpack.c.l.b16 %v224
  %v1067 = vunpack.c.h.b16 %v224
  %v1068 = vunpack.c.l.b16 %v225
  %v1069 = vunpack.c.h.b16 %v225
  %v1070 = vunpack.c.l.b16 %v226
  %v1071 = vunpack.c.h.b16 %v226
  %v1072 = vunpack.c.l.b16 %v227
  %v1073 = vunpack.c.h.b16 %v227
  %v1074 = vunpack.c.l.b16 %v228
  %v1075 = vunpack.c.h.b16 %v228
  %v1076 = vunpack.c.l.b16 %v229
  %v1077 = vunpack.c.h.b16 %v229
  %v1078 = vunpack.c.l.b16 %v230
  %v1079 = vunpack.c.h.b16 %v230
  %v1080 = vunpack.c.l.b16 %v231
  %v1081 = vunpack.c.h.b16 %v231
  %v1082 = vunpack.c.l.b16 %v232
  %v1083 = vunpack.c.h.b16 %v232
  %v1084 = vunpack.c.l.b16 %v233
  %v1085 = vunpack.c.h.b16 %v233
  %v1086 = vunpack.c.l.b16 %v234
  %v1087 = vunpack.c.h.b16 %v234
  %v1088 = vunpack.c.l.b16 %v235
  %v1089 = vunpack.c.h.b16 %v235
  %v1090 = vunpack.c.l.b16 %v236
  %v1091 = vunpack.c.h.b16 %v236
  %v1092 = vunpack.c.l.b16 %v237
  %v1093 = vunpack.c.h.b16 %v237
  %v1094 = vunpack.c.l.b16 %v238
  %v1095 = vunpack.c.h.b16 %v238
  %v1096 = vunpack.c.l.b16 %v239
  %v1097 = vunpack.c.h.b16 %v239
  %v1098 = vunpack.c.l.b16 %v240
  %v1099 = vunpack.c.h.b16 %v240
  %v1100 = vunpack.c.l.b16 %v241
  %v1101 = vunpack.c.h.b16 %v241
  %v1102 = vunpack.c.l.b16 %v242
  %v1103 = vunpack.c.h.b16 %v242
  %v1104 = vunpack.c.l.b16 %v243
  %v1105 = vunpack.c.h.b16 %v243
  %v1106 = vunpack.c.l.b16 %v244
  %v1107 = vunpack.c.h.b16 %v244
  %v1108 = vunpack.c.l.b16 %v245
  %v1109 = vunpack.c.h.b16 %v245
  %v1110 = vunpack.c.l.b16 %v246
  %v1111 = vunpack.c.h.b16 %v246
  %v1112 = vunpack.c.l.b16 %v247
  %v1113 = vunpack.c.h.b16 %v247
  %v1114 = vunpack.c.l.b16 %v248
  %v1115 = vunpack.c.h.b16 %v248
  %v1116 = vunpack.c.l.b16 %v249
  %v1117 = vunpack.c.h.b16 %v249
  %v1118 = vunpack.c.l.b16 %v250
  %v1119 = vunpack.c.h.b16 %v250
  %v1120 = vunpack.c.l.b16 %v251
  %v1121 = vunpack.c.h.b16 %v251
  %v1122 = vunpack.c.l.b16 %v252
  %v1123 = vunpack.c.h.b16 %v252
  %v1124 = vunpack.c.l.b16 %v253
  %v1125 = vunpack.c.h.b16 %v253
  %v1126 = vunpack.c.l.b16 %v254
  %v1127 = vunpack.c.h.b16 %v254
  %v1128 = vunpack.c.l.b16 %v255
  %v1129 = vunpack.c.h.b16 %v255
  %v1130 = vunpack.c.l.b16 %v256
  %v1131 = vunpack.c.h.b16 %v256
  %v1132 = vunpack.c.l.b16 %v257
  %v1133 = vunpack.c.h.b16 %v257
  %v1134 = vunpack.c.l.b16 %v258
  %v1135 = vunpack.c.h.b16 %v258
  %v1136 = vunpack.c.l.b16 %v259
  %v1137 = vunpack.c.h.b16 %v259
  %v1138 = vunpack.c.l.b16 %v260
  %v1139 = vunpack.c.h.b16 %v260
  %v1140 = vunpack.c.l.b16 %v261
  %v1141 = vunpack.c.h.b16 %v261
  %v1142 = vunpack.c.l.b16 %v262
  %v1143 = vunpack.c.h.b16 %v262
  %v1144 = vunpack.c.l.b16 %v263
  %v1145 = vunpack.c.h.b16 %v263
  %v1146 = vunpack.c.l.b16 %v264
  %v1147 = vunpack.c.h.b16 %v264
  %v1148 = vunpack.c.l.b16 %v265
  %v1149 = vunpack.c.h.b16 %v265
  %v1150 = vunpack.c.l.b16 %v266
  %v1151 = vunpack.c.h.b16 %v266
  %v1152 = vunpack.c.l.b16 %v267
  %v1153 = vunpack.c.h.b16 %v267
  %v1154 = vunpack.c.l.b16 %v268
  %v1155 = vunpack.c.h.b16 %v268
  %v1156 = vunpack.c.l.b16 %v269
  %v1157 = vunpack.c.h.b16 %v269
  %v1158 = vunpack.c.l.b16 %v270
  %v1159 = vunpack.c.h.b16 %v270
  %v1160 = vunpack.c.l.b16 %v271
  %v1161 = vunpack.c.h.b16 %v271
  %v1162 = vunpack.c.l.b16 %v272
  %v1163 = vunpack.c.h.b16 %v272
  %v1164 = vunpack.c.l.b16 %v273
  %v1165 = vunpack.c.h.b16 %v273
  %v1166 = vunpack.c.l.b16 %v274
  %v1167 = vunpack.c.h.b16 %v274
  %v1168 = vunpack.c.l.b16 %v275
  %v1169 = vunpack.c.h.b16 %v275
  %v1170 = vunpack.c.l.b16 %v276
  %v1171 = vunpack.c.h.b16 %v276
  %v1172 = vunpack.c.l.b16 %v277
  %v1173 = vunpack.c.h.b16 %v277
  %v1174 = vunpack.c.l.b16 %v278
  %v1175 = vunpack.c.h.b16 %v278
  %v1176 = vunpack.c.l.b16 %v279
  %v1177 = vunpack.c.h.b16 %v279
  %v1178 = vunpack.c.l.b16 %v280
  %v1179 = vunpack.c.h.b16 %v280
  %v1180 = vunpack.c.l.b16 %v281
  %v1181 = vunpack.c.h.b16 %v281
  %v1182 = vunpack.c.l.b16 %v282
  %v1183 = vunpack.c.h.b16 %v282
  %v1184 = vunpack.c.l.b16 %v283
  %v1185 = vunpack.c.h.b16 %v283
  %v1186 = vunpack.c.l.b16 %v284
  %v1187 = vunpack.c.h.b16 %v284
  %v1188 = vunpack.c.l.b16 %v285
  %v1189 = vunpack.c.h.b16 %v285
  %v1190 = vunpack.c.l.b16 %v286
  %v1191 = vunpack.c.h.b16 %v286
  %v1192 = vunpack.c.l.b16 %v287
  %v1193 = vunpack.c.h.b16 %v287
  %v1194 = vunpack.c.l.b16 %v288
  %v1195 = vunpack.c.h.b16 %v288
  %v1196 = vunpack.c.l.b16 %v289
  %v1197 = vunpack.c.h.b16 %v289
  %v1198 = vunpack.c.l.b16 %v290
  %v1199 = vunpack.c.h.b16 %v290
  %v1200 = vunpack.c.l.b16 %v291
  %v1201 = vunpack.c.h.b16 %v291
  %v1202 = vunpack.c.l.b16 %v292
  %v1203 = vunpack.c.h.b16 %v292
  %v1204 = vunpack.c.l.b16 %v293
  %v1205 = vunpack.c.h.b16 %v293
  %v1206 = vunpack.c.l.b16 %v294
  %v1207 = vunpack.c.h.b16 %v294
  %v1208 = vunpack.c.l.b16 %v295
  %v1209 = vunpack.c.h.b16 %v295
  %v1210 = vunpack.c.l.b16 %v296
  %v1211 = vunpack.c.h.b16 %v296
  %v1212 = vunpack.c.l.b16 %v297
  %v1213 = vunpack.c.h.b16 %v297
  %v1214 = vpack.c.b16 %v706, %v702
  %v1215 = vpack.c.b16 %v707, %v703
  %v1216 = vpack.c.b16 %v708, %v704
  %v1217 = vpack.c.b16 %v709, %v705
  %v1218 = vpack.c.b16 %v714, %v710
  %v1219 = vpack.c.b16 %v715, %v711
  %v1220 = vpack.c.b16 %v716, %v712
  %v1221 = vpack.c.b16 %v717, %v713
  %v1222 = vpack.c.b16 %v722, %v718
  %v1223 = vpack.c.b16 %v723, %v719
  %v1224 = vpack.c.b16 %v724, %v720
  %v1225 = vpack.c.b16 %v725, %v721
  %v1226 = vpack.c.b16 %v730, %v726
  %v1227 = vpack.c.b16 %v731, %v727
  %v1228 = vpack.c.b16 %v732, %v728
  %v1229 = vpack.c.b16 %v733, %v729
  %v1230 = vpack.c.b16 %v738, %v734
  %v1231 = vpack.c.b16 %v739, %v735
  %v1232 = vpack.c.b16 %v740, %v736
  %v1233 = vpack.c.b16 %v741, %v737
  %v1234 = vpack.c.b16 %v746, %v742
  %v1235 = vpack.c.b16 %v747, %v743
  %v1236 = vpack.c.b16 %v748, %v744
  %v1237 = vpack.c.b16 %v749, %v745
  %v1238 = vpack.c.b16 %v754, %v750
  %v1239 = vpack.c.b16 %v755, %v751
  %v1240 = vpack.c.b16 %v756, %v752
  %v1241 = vpack.c.b16 %v757, %v753
  %v1242 = vpack.c.b16 %v762, %v758
  %v1243 = vpack.c.b16 %v763, %v759
  %v1244 = vpack.c.b16 %v764, %v760
  %v1245 = vpack.c.b16 %v765, %v761
  %v1246 = vpack.c.b16 %v770, %v766
  %v1247 = vpack.c.b16 %v771, %v767
  %v1248 = vpack.c.b16 %v772, %v768
  %v1249 = vpack.c.b16 %v773, %v769
  %v1250 = vpack.c.b16 %v778, %v774
  %v1251 = vpack.c.b16 %v779, %v775
  %v1252 = vpack.c.b16 %v780, %v776
  %v1253 = vpack.c.b16 %v781, %v777
  %v1254 = vpack.c.b16 %v786, %v782
  %v1255 = vpack.c.b16 %v787, %v783
  %v1256 = vpack.c.b16 %v788, %v784
  %v1257 = vpack.c.b16 %v789, %v785
  %v1258 = vpack.c.b16 %v794, %v790
  %v1259 = vpack.c.b16 %v795, %v791
  %v1260 = vpack.c.b16 %v796, %v792
  %v1261 = vpack.c.b16 %v797, %v793
  %v1262 = vpack.c.b16 %v802, %v798
  %v1263 = vpack.c.b16 %v803, %v799
  %v1264 = vpack.c.b16 %v804, %v800
  %v1265 = vpack.c.b16 %v805, %v801
  %v1266 = vpack.c.b16 %v810, %v806
  %v1267 = vpack.c.b16 %v811, %v807
  %v1268 = vpack.c.b16 %v812, %v808
  %v1269 = vpack.c.b16 %v813, %v809
  %v1270 = vpack.c.b16 %v818, %v814
  %v1271 = vpack.c.b16 %v819, %v815
  %v1272 = vpack.c.b16 %v820, %v816
  %v1273 = vpack.c.b16 %v821, %v817
  %v1274 = vpack.c.b16 %v826, %v822
  %v1275 = vpack.c.b16 %v827, %v823
  %v1276 = vpack.c.b16 %v828, %v824
  %v1277 = vpack.c.b16 %v829, %v825
  %v1278 = vpack.c.b16 %v834, %v830
  %v1279 = vpack.c.b16 %v835, %v831
  %v1280 = vpack.c.b16 %v836, %v832
  %v1281 = vpack.c.b16 %v837, %v833
  %v1282 = vpack.c.b16 %v842, %v838
  %v1283 = vpack.c.b16 %v843, %v839
  %v1284 = vpack.c.b16 %v844, %v840
  %v1285 = vpack.c.b16 %v845, %v841
  %v1286 = vpack.c.b16 %v850, %v846
  %v1287 = vpack.c.b16 %v851, %v847
  %v1288 = vpack.c.b16 %v852, %v848
  %v1289 = vpack.c.b16 %v853, %v849
  %v1290 = vpack.c.b16 %v858, %v854
  %v1291 = vpack.c.b16 %v859, %v855
  %v1292 = vpack.c.b16 %v860, %v856
  %v1293 = vpack.c.b16 %v861, %v857
  %v1294 = vpack.c.b16 %v866, %v862
  %v1295 = vpack.c.b16 %v867, %v863
  %v1296 = vpack.c.b16 %v868, %v864
  %v1297 = vpack.c.b16 %v869, %v865
  %v1298 = vpack.c.b16 %v874, %v870
  %v1299 = vpack.c.b16 %v875, %v871
  %v1300 = vpack.c.b16 %v876, %v872
  %v1301 = vpack.c.b16 %v877, %v873
  %v1302 = vpack.c.b16 %v882, %v878
  %v1303 = vpack.c.b16 %v883, %v879
  %v1304 = vpack.c.b16 %v884, %v880
  %v1305 = vpack.c.b16 %v885, %v881
  %v1306 = vpack.c.b16 %v890, %v886
  %v1307 = vpack.c.b16 %v891, %v887
  %v1308 = vpack.c.b16 %v892, %v888
  %v1309 = vpack.c.b16 %v893, %v889
  %v1310 = vpack.c.b16 %v898, %v894
  %v1311 = vpack.c.b16 %v899, %v895
  %v1312 = vpack.c.b16 %v900, %v896
  %v1313 = vpack.c.b16 %v901, %v897
  %v1314 = vpack.c.b16 %v906, %v902
  %v1315 = vpack.c.b16 %v907, %v903
  %v1316 = vpack.c.b16 %v908, %v904
  %v1317 = vpack.c.b16 %v909, %v905
  %v1318 = vpack.c.b16 %v914, %v910
  %v1319 = vpack.c.b16 %v915, %v911
  %v1320 = vpack.c.b16 %v916, %v912
  %v1321 = vpack.c.b16 %v917, %v913
  %v1322 = vpack.c.b16 %v922, %v918
  %v1323 = vpack.c.b16 %v923, %v919
  %v1324 = vpack.c.b16 %v924, %v920
  %v1325 = vpack.c.b16 %v925, %v921
  %v1326 = vpack.c.b16 %v930, %v926
  %v1327 = vpack.c.b16 %v931, %v927
  %v1328 = vpack.c.b16 %v932, %v928
  %v1329 = vpack.c.b16 %v933, %v929
  %v1330 = vpack.c.b16 %v938, %v934
  %v1331 = vpack.c.b16 %v939, %v935
  %v1332 = vpack.c.b16 %v940, %v936
  %v1333 = vpack.c.b16 %v941, %v937
  %v1334 = vpack.c.b16 %v946, %v942
  %v1335 = vpack.c.b16 %v947, %v943
  %v1336 = vpack.c.b16 %v948, %v944
  %v1337 = vpack.c.b16 %v949, %v945
  %v1338 = vpack.c.b16 %v954, %v950
  %v1339 = vpack.c.b16 %v955, %v951
  %v1340 = vpack.c.b16 %v956, %v952
  %v1341 = vpack.c.b16 %v957, %v953
  %v1342 = vpack.c.b16 %v962, %v958
  %v1343 = vpack.c.b16 %v963, %v959
  %v1344 = vpack.c.b16 %v964, %v960
  %v1345 = vpack.c.b16 %v965, %v961
  %v1346 = vpack.c.b16 %v970, %v966
  %v1347 = vpack.c.b16 %v971, %v967
  %v1348 = vpack.c.b16 %v972, %v968
  %v1349 = vpack.c.b16 %v973, %v969
  %v1350 = vpack.c.b16 %v978, %v974
  %v1351 = vpack.c.b16 %v979, %v975
  %v1352 = vpack.c.b16 %v980, %v976
  %v1353 = vpack.c.b16 %v981, %v977
  %v1354 = vpack.c.b16 %v986, %v982
  %v1355 = vpack.c.b16 %v987, %v983
  %v1356 = vpack.c.b16 %v988, %v984
  %v1357 = vpack.c.b16 %v989, %v985
  %v1358 = vpack.c.b16 %v994, %v990
  %v1359 = vpack.c.b16 %v995, %v991
  %v1360 = vpack.c.b16 %v996, %v992
  %v1361 = vpack.c.b16 %v997, %v993
  %v1362 = vpack.c.b16 %v1002, %v998
  %v1363 = vpack.c.b16 %v1003, %v999
  %v1364 = vpack.c.b16 %v1004, %v1000
  %v1365 = vpack.c.b16 %v1005, %v1001
  %v1366 = vpack.c.b16 %v1010, %v1006
  %v1367 = vpack.c.b16 %v1011, %v1007
  %v1368 = vpack.c.b16 %v1012, %v1008
  %v1369 = vpack.c.b16 %v1013, %v1009
  %v1370 = vpack.c.b16 %v1018, %v1014
  %v1371 = vpack.c.b16 %v1019, %v1015
  %v1372 = vpack.c.b16 %v1020, %v1016
  %v1373 = vpack.c.b16 %v1021, %v1017
  %v1374 = vpack.c.b16 %v1026, %v1022
  %v1375 = vpack.c.b16 %v1027, %v1023
  %v1376 = vpack.c.b16 %v1028, %v1024
  %v1377 = vpack.c.b16 %v1029, %v1025
  %v1378 = vpack.c.b16 %v1034, %v1030
  %v1379 = vpack.c.b16 %v1035, %v1031
  %v1380 = vpack.c.b16 %v1036, %v1032
  %v1381 = vpack.c.b16 %v1037, %v1033
  %v1382 = vpack.c.b16 %v1042, %v1038
  %v1383 = vpack.c.b16 %v1043, %v1039
  %v1384 = vpack.c.b16 %v1044, %v1040
  %v1385 = vpack.c.b16 %v1045, %v1041
  %v1386 = vpack.c.b16 %v1050, %v1046
  %v1387 = vpack.c.b16 %v1051, %v1047
  %v1388 = vpack.c.b16 %v1052, %v1048
  %v1389 = vpack.c.b16 %v1053, %v1049
  %v1390 = vpack.c.b16 %v1058, %v1054
  %v1391 = vpack.c.b16 %v1059, %v1055
  %v1392 = vpack.c.b16 %v1060, %v1056
  %v1393 = vpack.c.b16 %v1061, %v1057
  %v1394 = vpack.c.b16 %v1066, %v1062
  %v1395 = vpack.c.b16 %v1067, %v1063
  %v1396 = vpack.c.b16 %v1068, %v1064
  %v1397 = vpack.c.b16 %v1069, %v1065
  %v1398 = vpack.c.b16 %v1074, %v1070
  %v1399 = vpack.c.b16 %v1075, %v1071
  %v1400 = vpack.c.b16 %v1076, %v1072
  %v1401 = vpack.c.b16 %v1077, %v1073
  %v1402 = vpack.c.b16 %v1082, %v1078
  %v1403 = vpack.c.b16 %v1083, %v1079
  %v1404 = vpack.c.b16 %v1084, %v1080
  %v1405 = vpack.c.b16 %v1085, %v1081
  %v1406 = vpack.c.b16 %v1090, %v1086
  %v1407 = vpack.c.b16 %v1091, %v1087
  %v1408 = vpack.c.b16 %v1092, %v1088
  %v1409 = vpack.c.b16 %v1093, %v1089
  %v1410 = vpack.c.b16 %v1098, %v1094
  %v1411 = vpack.c.b16 %v1099, %v1095
  %v1412 = vpack.c.b16 %v1100, %v1096
  %v1413 = vpack.c.b16 %v1101, %v1097
  %v1414 = vpack.c.b16 %v1106, %v1102
  %v1415 = vpack.c.b16 %v1107, %v1103
  %v1416 = vpack.c.b16 %v1108, %v1104
  %v1417 = vpack.c.b16 %v1109, %v1105
  %v1418 = vpack.c.b16 %v1114, %v1110
  %v1419 = vpack.c.b16 %v1115, %v1111
  %v1420 = vpack.c.b16 %v1116, %v1112
  %v1421 = vpack.c.b16 %v1117, %v1113
  %v1422 = vpack.c.b16 %v1122, %v1118
  %v1423 = vpack.c.b16 %v1123, %v1119
  %v1424 = vpack.c.b16 %v1124, %v1120
  %v1425 = vpack.c.b16 %v1125, %v1121
  %v1426 = vpack.c.b16 %v1130, %v1126
  %v1427 = vpack.c.b16 %v1131, %v1127
  %v1428 = vpack.c.b16 %v1132, %v1128
  %v1429 = vpack.c.b16 %v1133, %v1129
  %v1430 = vpack.c.b16 %v1138, %v1134
  %v1431 = vpack.c.b16 %v1139, %v1135
  %v1432 = vpack.c.b16 %v1140, %v1136
  %v1433 = vpack.c.b16 %v1141, %v1137
  %v1434 = vpack.c.b16 %v1146, %v1142
  %v1435 = vpack.c.b16 %v1147, %v1143
  %v1436 = vpack.c.b16 %v1148, %v1144
  %v1437 = vpack.c.b16 %v1149, %v1145
  %v1438 = vpack.c.b16 %v1154, %v1150
  %v1439 = vpack.c.b16 %v1155, %v1151
  %v1440 = vpack.c.b16 %v1156, %v1152
  %v1441 = vpack.c.b16 %v1157, %v1153
  %v1442 = vpack.c.b16 %v1162, %v1158
  %v1443 = vpack.c.b16 %v1163, %v1159
  %v1444 = vpack.c.b16 %v1164, %v1160
  %v1445 = vpack.c.b16 %v1165, %v1161
  %v1446 = vpack.c.b16 %v1170, %v1166
  %v1447 = vpack.c.b16 %v1171, %v1167
  %v1448 = vpack.c.b16 %v1172, %v1168
  %v1449 = vpack.c.b16 %v1173, %v1169
  %v1450 = vpack.c.b16 %v1178, %v1174
  %v1451 = vpack.c.b16 %v1179, %v1175
  %v1452 = vpack.c.b16 %v1180, %v1176
  %v1453 = vpack.c.b16 %v1181, %v1177
  %v1454 = vpack.c.b16 %v1186, %v1182
  %v1455 = vpack.c.b16 %v1187, %v1183
  %v1456 = vpack.c.b16 %v1188, %v1184
  %v1457 = vpack.c.b16 %v1189, %v1185
  %v1458 = vpack.c.b16 %v1194, %v1190
  %v1459 = vpack.c.b16 %v1195, %v1191
  %v1460 = vpack.c.b16 %v1196, %v1192
  %v1461 = vpack.c.b16 %v1197, %v1193
  %v1462 = vpack.c.b16 %v1202, %v1198
  %v1463 = vpack.c.b16 %v1203, %v1199
  %v1464 = vpack.c.b16 %v1204, %v1200
  %v1465 = vpack.c.b16 %v1205, %v1201
  %v1466 = vpack.c.b16 %v1210, %v1206
  %v1467 = vpack.c.b16 %v1211, %v1207
  %v1468 = vpack.c.b16 %v1212, %v1208
  %v1469 = vpack.c.b16 %v1213, %v1209
  %1726 = vmatprep.subr.bf16.mxu0 %v1243
  %1727 = vmatpush1.bf16.msra.mxu0 %v1242
  %1728 = vmatprep.subr.bf16.mxu0 %v1239
  %1729 = vmatpush1.bf16.msra.mxu0 %v1238
  %1730 = vmatprep.subr.bf16.mxu0 %v1235
  %1731 = vmatpush1.bf16.msra.mxu0 %v1234
  %1732 = vmatprep.subr.bf16.mxu0 %v1231
  %1733 = vmatpush1.bf16.msra.mxu0 %v1230
  %1734 = vmatprep.subr.bf16.mxu0 %v1227
  %1735 = vmatpush1.bf16.msra.mxu0 %v1226
  %1736 = vmatprep.subr.bf16.mxu0 %v1223
  %1737 = vmatpush1.bf16.msra.mxu0 %v1222
  %1738 = vmatprep.subr.bf16.mxu0 %v1219
  %1739 = vmatpush1.bf16.msra.mxu0 %v1218
  %1740 = vmatprep.subr.bf16.mxu0 %v1215
  %1741 = vmatpush1.bf16.msra.mxu0 %v1214
  %1742 = vmatprep.subr.bf16.mxu0 %v1275
  %1743 = vmatpush2.bf16.msra.mxu0 %v1274
  %1744 = vmatprep.subr.bf16.mxu0 %v1271
  %1745 = vmatpush2.bf16.msra.mxu0 %v1270
  %1746 = vmatprep.subr.bf16.mxu0 %v1267
  %1747 = vmatpush2.bf16.msra.mxu0 %v1266
  %1748 = vmatprep.subr.bf16.mxu0 %v1263
  %1749 = vmatpush2.bf16.msra.mxu0 %v1262
  %1750 = vmatprep.subr.bf16.mxu0 %v1259
  %1751 = vmatpush2.bf16.msra.mxu0 %v1258
  %1752 = vmatprep.subr.bf16.mxu0 %v1255
  %1753 = vmatpush2.bf16.msra.mxu0 %v1254
  %1754 = vmatprep.subr.bf16.mxu0 %v1251
  %1755 = vmatpush2.bf16.msra.mxu0 %v1250
  %1756 = vmatprep.subr.bf16.mxu0 %v1247
  %1757 = vmatpush2.bf16.msra.mxu0 %v1246
  %1758 = vmatprep.mubr.bf16.mxu0 %v383
  %1759 = vmatmul.mubr.bf16.gmra.mxu0 %v382
  %v1760 = vpop.f32.mrf.mxu0
  %v1761 = vadd.f32 0.0, %v1760
  %v1762 = vpop.f32.mrf.mxu0
  %v1763 = vadd.f32 0.0, %v1762
  %v1764 = vpop.f32.mrf.mxu0
  %v1765 = vadd.f32 0.0, %v1764
  %v1766 = vpop.f32.mrf.mxu0
  %v1767 = vadd.f32 0.0, %v1766
  %1768 = vmatprep.mubr.bf16.mxu0 %v391
  %1769 = vmatmul.mubr.bf16.gmra.mxu0 %v390
  %v1770 = vpop.f32.mrf.mxu0
  %v1771 = vadd.f32 0.0, %v1770
  %v1772 = vpop.f32.mrf.mxu0
  %v1773 = vadd.f32 0.0, %v1772
  %v1774 = vpop.f32.mrf.mxu0
  %v1775 = vadd.f32 0.0, %v1774
  %v1776 = vpop.f32.mrf.mxu0
  %v1777 = vadd.f32 0.0, %v1776
  %1778 = vmatprep.mubr.bf16.mxu0 %v399
  %1779 = vmatmul.mubr.bf16.gmra.mxu0 %v398
  %v1780 = vpop.f32.mrf.mxu0
  %v1781 = vadd.f32 0.0, %v1780
  %v1782 = vpop.f32.mrf.mxu0
  %v1783 = vadd.f32 0.0, %v1782
  %v1784 = vpop.f32.mrf.mxu0
  %v1785 = vadd.f32 0.0, %v1784
  %v1786 = vpop.f32.mrf.mxu0
  %v1787 = vadd.f32 0.0, %v1786
  %1788 = vmatprep.mubr.bf16.mxu0 %v407
  %1789 = vmatmul.mubr.bf16.gmra.mxu0 %v406
  %v1790 = vpop.f32.mrf.mxu0
  %v1791 = vadd.f32 0.0, %v1790
  %v1792 = vpop.f32.mrf.mxu0
  %v1793 = vadd.f32 0.0, %v1792
  %v1794 = vpop.f32.mrf.mxu0
  %v1795 = vpop.f32.mrf.mxu0
  %1796 = vdwg.mxu0
  %1797 = vmatprep.subr.bf16.mxu0 %v1307
  %1798 = vmatpush1.bf16.msra.mxu0 %v1306
  %1799 = vmatprep.subr.bf16.mxu0 %v1303
  %1800 = vmatpush1.bf16.msra.mxu0 %v1302
  %1801 = vmatprep.subr.bf16.mxu0 %v1299
  %1802 = vmatpush1.bf16.msra.mxu0 %v1298
  %1803 = vmatprep.subr.bf16.mxu0 %v1295
  %1804 = vmatpush1.bf16.msra.mxu0 %v1294
  %1805 = vmatprep.subr.bf16.mxu0 %v1291
  %1806 = vmatpush1.bf16.msra.mxu0 %v1290
  %1807 = vmatprep.subr.bf16.mxu0 %v1287
  %1808 = vmatpush1.bf16.msra.mxu0 %v1286
  %1809 = vmatprep.subr.bf16.mxu0 %v1283
  %1810 = vmatpush1.bf16.msra.mxu0 %v1282
  %1811 = vmatprep.subr.bf16.mxu0 %v1279
  %1812 = vmatpush1.bf16.msra.mxu0 %v1278
  %1813 = vmatprep.subr.bf16.mxu0 %v1339
  %1814 = vmatpush2.bf16.msra.mxu0 %v1338
  %1815 = vmatprep.subr.bf16.mxu0 %v1335
  %1816 = vmatpush2.bf16.msra.mxu0 %v1334
  %1817 = vmatprep.subr.bf16.mxu0 %v1331
  %1818 = vmatpush2.bf16.msra.mxu0 %v1330
  %1819 = vmatprep.subr.bf16.mxu0 %v1327
  %1820 = vmatpush2.bf16.msra.mxu0 %v1326
  %1821 = vmatprep.subr.bf16.mxu0 %v1323
  %1822 = vmatpush2.bf16.msra.mxu0 %v1322
  %1823 = vmatprep.subr.bf16.mxu0 %v1319
  %1824 = vmatpush2.bf16.msra.mxu0 %v1318
  %1825 = vmatprep.subr.bf16.mxu0 %v1315
  %1826 = vmatpush2.bf16.msra.mxu0 %v1314
  %1827 = vmatprep.subr.bf16.mxu0 %v1311
  %1828 = vmatpush2.bf16.msra.mxu0 %v1310
  %1829 = vmatprep.mubr.bf16.mxu0 %v385
  %1830 = vmatmul.mubr.bf16.gmra.mxu0 %v384
  %v1831 = vpop.f32.mrf.mxu0
  %v1832 = vadd.f32 %v1761, %v1831
  %v1833 = vpop.f32.mrf.mxu0
  %v1834 = vadd.f32 %v1763, %v1833
  %v1835 = vpop.f32.mrf.mxu0
  %v1836 = vadd.f32 %v1765, %v1835
  %v1837 = vpop.f32.mrf.mxu0
  %v1838 = vadd.f32 %v1767, %v1837
  %1839 = vmatprep.mubr.bf16.mxu0 %v393
  %1840 = vmatmul.mubr.bf16.gmra.mxu0 %v392
  %v1841 = vpop.f32.mrf.mxu0
  %v1842 = vadd.f32 %v1771, %v1841
  %v1843 = vpop.f32.mrf.mxu0
  %v1844 = vadd.f32 %v1773, %v1843
  %v1845 = vpop.f32.mrf.mxu0
  %v1846 = vadd.f32 %v1775, %v1845
  %v1847 = vpop.f32.mrf.mxu0
  %v1848 = vadd.f32 %v1777, %v1847
  %1849 = vmatprep.mubr.bf16.mxu0 %v401
  %1850 = vmatmul.mubr.bf16.gmra.mxu0 %v400
  %v1851 = vpop.f32.mrf.mxu0
  %v1852 = vadd.f32 %v1781, %v1851
  %v1853 = vpop.f32.mrf.mxu0
  %v1854 = vadd.f32 %v1783, %v1853
  %v1855 = vpop.f32.mrf.mxu0
  %v1856 = vadd.f32 %v1785, %v1855
  %v1857 = vpop.f32.mrf.mxu0
  %v1858 = vadd.f32 %v1787, %v1857
  %1859 = vmatprep.mubr.bf16.mxu0 %v409
  %1860 = vmatmul.mubr.bf16.gmra.mxu0 %v408
  %v1861 = vpop.f32.mrf.mxu0
  %v1862 = vadd.f32 %v1791, %v1861
  %v1863 = vpop.f32.mrf.mxu0
  %v1864 = vadd.f32 %v1793, %v1863
  %v1865 = vpop.f32.mrf.mxu0
  %v1866 = vpop.f32.mrf.mxu0
  %1867 = vdwg.mxu0
  %1868 = vmatprep.subr.bf16.mxu0 %v1371
  %1869 = vmatpush1.bf16.msra.mxu0 %v1370
  %1870 = vmatprep.subr.bf16.mxu0 %v1367
  %1871 = vmatpush1.bf16.msra.mxu0 %v1366
  %1872 = vmatprep.subr.bf16.mxu0 %v1363
  %1873 = vmatpush1.bf16.msra.mxu0 %v1362
  %1874 = vmatprep.subr.bf16.mxu0 %v1359
  %1875 = vmatpush1.bf16.msra.mxu0 %v1358
  %1876 = vmatprep.subr.bf16.mxu0 %v1355
  %1877 = vmatpush1.bf16.msra.mxu0 %v1354
  %1878 = vmatprep.subr.bf16.mxu0 %v1351
  %1879 = vmatpush1.bf16.msra.mxu0 %v1350
  %1880 = vmatprep.subr.bf16.mxu0 %v1347
  %1881 = vmatpush1.bf16.msra.mxu0 %v1346
  %1882 = vmatprep.subr.bf16.mxu0 %v1343
  %1883 = vmatpush1.bf16.msra.mxu0 %v1342
  %1884 = vmatprep.subr.bf16.mxu0 %v1403
  %1885 = vmatpush2.bf16.msra.mxu0 %v1402
  %1886 = vmatprep.subr.bf16.mxu0 %v1399
  %1887 = vmatpush2.bf16.msra.mxu0 %v1398
  %1888 = vmatprep.subr.bf16.mxu0 %v1395
  %1889 = vmatpush2.bf16.msra.mxu0 %v1394
  %1890 = vmatprep.subr.bf16.mxu0 %v1391
  %1891 = vmatpush2.bf16.msra.mxu0 %v1390
  %1892 = vmatprep.subr.bf16.mxu0 %v1387
  %1893 = vmatpush2.bf16.msra.mxu0 %v1386
  %1894 = vmatprep.subr.bf16.mxu0 %v1383
  %1895 = vmatpush2.bf16.msra.mxu0 %v1382
  %1896 = vmatprep.subr.bf16.mxu0 %v1379
  %1897 = vmatpush2.bf16.msra.mxu0 %v1378
  %1898 = vmatprep.subr.bf16.mxu0 %v1375
  %1899 = vmatpush2.bf16.msra.mxu0 %v1374
  %1900 = vmatprep.mubr.bf16.mxu0 %v387
  %1901 = vmatmul.mubr.bf16.gmra.mxu0 %v386
  %v1902 = vpop.f32.mrf.mxu0
  %v1903 = vadd.f32 %v1832, %v1902
  %v1904 = vpop.f32.mrf.mxu0
  %v1905 = vadd.f32 %v1834, %v1904
  %v1906 = vpop.f32.mrf.mxu0
  %v1907 = vadd.f32 %v1836, %v1906
  %v1908 = vpop.f32.mrf.mxu0
  %v1909 = vadd.f32 %v1838, %v1908
  %1910 = vmatprep.mubr.bf16.mxu0 %v395
  %1911 = vmatmul.mubr.bf16.gmra.mxu0 %v394
  %v1912 = vpop.f32.mrf.mxu0
  %v1913 = vadd.f32 %v1842, %v1912
  %v1914 = vpop.f32.mrf.mxu0
  %v1915 = vadd.f32 %v1844, %v1914
  %v1916 = vpop.f32.mrf.mxu0
  %v1917 = vadd.f32 %v1846, %v1916
  %v1918 = vpop.f32.mrf.mxu0
  %v1919 = vadd.f32 %v1848, %v1918
  %1920 = vmatprep.mubr.bf16.mxu0 %v403
  %1921 = vmatmul.mubr.bf16.gmra.mxu0 %v402
  %v1922 = vpop.f32.mrf.mxu0
  %v1923 = vadd.f32 %v1852, %v1922
  %v1924 = vpop.f32.mrf.mxu0
  %v1925 = vadd.f32 %v1854, %v1924
  %v1926 = vpop.f32.mrf.mxu0
  %v1927 = vadd.f32 %v1856, %v1926
  %v1928 = vpop.f32.mrf.mxu0
  %v1929 = vadd.f32 %v1858, %v1928
  %1930 = vmatprep.mubr.bf16.mxu0 %v411
  %1931 = vmatmul.mubr.bf16.gmra.mxu0 %v410
  %v1932 = vpop.f32.mrf.mxu0
  %v1933 = vadd.f32 %v1862, %v1932
  %v1934 = vpop.f32.mrf.mxu0
  %v1935 = vadd.f32 %v1864, %v1934
  %v1936 = vpop.f32.mrf.mxu0
  %v1937 = vpop.f32.mrf.mxu0
  %1938 = vdwg.mxu0
  %1939 = vmatprep.subr.bf16.mxu0 %v1435
  %1940 = vmatpush1.bf16.msra.mxu0 %v1434
  %1941 = vmatprep.subr.bf16.mxu0 %v1431
  %1942 = vmatpush1.bf16.msra.mxu0 %v1430
  %1943 = vmatprep.subr.bf16.mxu0 %v1427
  %1944 = vmatpush1.bf16.msra.mxu0 %v1426
  %1945 = vmatprep.subr.bf16.mxu0 %v1423
  %1946 = vmatpush1.bf16.msra.mxu0 %v1422
  %1947 = vmatprep.subr.bf16.mxu0 %v1419
  %1948 = vmatpush1.bf16.msra.mxu0 %v1418
  %1949 = vmatprep.subr.bf16.mxu0 %v1415
  %1950 = vmatpush1.bf16.msra.mxu0 %v1414
  %1951 = vmatprep.subr.bf16.mxu0 %v1411
  %1952 = vmatpush1.bf16.msra.mxu0 %v1410
  %1953 = vmatprep.subr.bf16.mxu0 %v1407
  %1954 = vmatpush1.bf16.msra.mxu0 %v1406
  %1955 = vmatprep.subr.bf16.mxu0 %v1467
  %1956 = vmatpush2.bf16.msra.mxu0 %v1466
  %1957 = vmatprep.subr.bf16.mxu0 %v1463
  %1958 = vmatpush2.bf16.msra.mxu0 %v1462
  %1959 = vmatprep.subr.bf16.mxu0 %v1459
  %1960 = vmatpush2.bf16.msra.mxu0 %v1458
  %1961 = vmatprep.subr.bf16.mxu0 %v1455
  %1962 = vmatpush2.bf16.msra.mxu0 %v1454
  %1963 = vmatprep.subr.bf16.mxu0 %v1451
  %1964 = vmatpush2.bf16.msra.mxu0 %v1450
  %1965 = vmatprep.subr.bf16.mxu0 %v1447
  %1966 = vmatpush2.bf16.msra.mxu0 %v1446
  %1967 = vmatprep.subr.bf16.mxu0 %v1443
  %1968 = vmatpush2.bf16.msra.mxu0 %v1442
  %1969 = vmatprep.subr.bf16.mxu0 %v1439
  %1970 = vmatpush2.bf16.msra.mxu0 %v1438
  %1971 = vmatprep.mubr.bf16.mxu0 %v389
  %1972 = vmatmul.mubr.bf16.gmra.mxu0 %v388
  %v1973 = vpop.f32.mrf.mxu0
  %v1974 = vadd.f32 %v1903, %v1973
  %v1975 = vpop.f32.mrf.mxu0
  %v1976 = vadd.f32 %v1905, %v1975
  %v1977 = vpop.f32.mrf.mxu0
  %v1978 = vadd.f32 %v1907, %v1977
  %v1979 = vpop.f32.mrf.mxu0
  %v1980 = vadd.f32 %v1909, %v1979
  %1981 = vmatprep.mubr.bf16.mxu0 %v397
  %1982 = vmatmul.mubr.bf16.gmra.mxu0 %v396
  %v1983 = vpop.f32.mrf.mxu0
  %v1984 = vadd.f32 %v1913, %v1983
  %v1985 = vpop.f32.mrf.mxu0
  %v1986 = vadd.f32 %v1915, %v1985
  %v1987 = vpop.f32.mrf.mxu0
  %v1988 = vadd.f32 %v1917, %v1987
  %v1989 = vpop.f32.mrf.mxu0
  %v1990 = vadd.f32 %v1919, %v1989
  %1991 = vmatprep.mubr.bf16.mxu0 %v405
  %1992 = vmatmul.mubr.bf16.gmra.mxu0 %v404
  %v1993 = vpop.f32.mrf.mxu0
  %v1994 = vadd.f32 %v1923, %v1993
  %v1995 = vpop.f32.mrf.mxu0
  %v1996 = vadd.f32 %v1925, %v1995
  %v1997 = vpop.f32.mrf.mxu0
  %v1998 = vadd.f32 %v1927, %v1997
  %v1999 = vpop.f32.mrf.mxu0
  %v2000 = vadd.f32 %v1929, %v1999
  %2001 = vmatprep.mubr.bf16.mxu0 %v413
  %2002 = vmatmul.mubr.bf16.gmra.mxu0 %v412
  %v2003 = vpop.f32.mrf.mxu0
  %v2004 = vadd.f32 %v1933, %v2003
  %v2005 = vpop.f32.mrf.mxu0
  %v2006 = vadd.f32 %v1935, %v2005
  %v2007 = vpop.f32.mrf.mxu0
  %v2008 = vpop.f32.mrf.mxu0
  %2009 = vdwg.mxu0
  %2010 = vmatprep.subr.bf16.mxu0 %v1245
  %2011 = vmatpush1.bf16.msra.mxu0 %v1244
  %2012 = vmatprep.subr.bf16.mxu0 %v1241
  %2013 = vmatpush1.bf16.msra.mxu0 %v1240
  %2014 = vmatprep.subr.bf16.mxu0 %v1237
  %2015 = vmatpush1.bf16.msra.mxu0 %v1236
  %2016 = vmatprep.subr.bf16.mxu0 %v1233
  %2017 = vmatpush1.bf16.msra.mxu0 %v1232
  %2018 = vmatprep.subr.bf16.mxu0 %v1229
  %2019 = vmatpush1.bf16.msra.mxu0 %v1228
  %2020 = vmatprep.subr.bf16.mxu0 %v1225
  %2021 = vmatpush1.bf16.msra.mxu0 %v1224
  %2022 = vmatprep.subr.bf16.mxu0 %v1221
  %2023 = vmatpush1.bf16.msra.mxu0 %v1220
  %2024 = vmatprep.subr.bf16.mxu0 %v1217
  %2025 = vmatpush1.bf16.msra.mxu0 %v1216
  %2026 = vmatprep.subr.bf16.mxu0 %v1277
  %2027 = vmatpush2.bf16.msra.mxu0 %v1276
  %2028 = vmatprep.subr.bf16.mxu0 %v1273
  %2029 = vmatpush2.bf16.msra.mxu0 %v1272
  %2030 = vmatprep.subr.bf16.mxu0 %v1269
  %2031 = vmatpush2.bf16.msra.mxu0 %v1268
  %2032 = vmatprep.subr.bf16.mxu0 %v1265
  %2033 = vmatpush2.bf16.msra.mxu0 %v1264
  %2034 = vmatprep.subr.bf16.mxu0 %v1261
  %2035 = vmatpush2.bf16.msra.mxu0 %v1260
  %2036 = vmatprep.subr.bf16.mxu0 %v1257
  %2037 = vmatpush2.bf16.msra.mxu0 %v1256
  %2038 = vmatprep.subr.bf16.mxu0 %v1253
  %2039 = vmatpush2.bf16.msra.mxu0 %v1252
  %2040 = vmatprep.subr.bf16.mxu0 %v1249
  %2041 = vmatpush2.bf16.msra.mxu0 %v1248
  %2042 = vmatprep.mubr.bf16.mxu0 %v383
  %2043 = vmatmul.mubr.bf16.gmra.mxu0 %v382
  %v2044 = vpop.f32.mrf.mxu0
  %v2045 = vadd.f32 0.0, %v2044
  %v2046 = vpop.f32.mrf.mxu0
  %v2047 = vadd.f32 0.0, %v2046
  %v2048 = vpop.f32.mrf.mxu0
  %v2049 = vadd.f32 0.0, %v2048
  %v2050 = vpop.f32.mrf.mxu0
  %v2051 = vadd.f32 0.0, %v2050
  %2052 = vmatprep.mubr.bf16.mxu0 %v391
  %2053 = vmatmul.mubr.bf16.gmra.mxu0 %v390
  %v2054 = vpop.f32.mrf.mxu0
  %v2055 = vadd.f32 0.0, %v2054
  %v2056 = vpop.f32.mrf.mxu0
  %v2057 = vadd.f32 0.0, %v2056
  %v2058 = vpop.f32.mrf.mxu0
  %v2059 = vadd.f32 0.0, %v2058
  %v2060 = vpop.f32.mrf.mxu0
  %v2061 = vadd.f32 0.0, %v2060
  %2062 = vmatprep.mubr.bf16.mxu0 %v399
  %2063 = vmatmul.mubr.bf16.gmra.mxu0 %v398
  %v2064 = vpop.f32.mrf.mxu0
  %v2065 = vadd.f32 0.0, %v2064
  %v2066 = vpop.f32.mrf.mxu0
  %v2067 = vadd.f32 0.0, %v2066
  %v2068 = vpop.f32.mrf.mxu0
  %v2069 = vadd.f32 0.0, %v2068
  %v2070 = vpop.f32.mrf.mxu0
  %v2071 = vadd.f32 0.0, %v2070
  %2072 = vmatprep.mubr.bf16.mxu0 %v407
  %2073 = vmatmul.mubr.bf16.gmra.mxu0 %v406
  %v2074 = vpop.f32.mrf.mxu0
  %v2075 = vadd.f32 0.0, %v2074
  %v2076 = vpop.f32.mrf.mxu0
  %v2077 = vadd.f32 0.0, %v2076
  %v2078 = vpop.f32.mrf.mxu0
  %v2079 = vpop.f32.mrf.mxu0
  %2080 = vdwg.mxu0
  %2081 = vmatprep.subr.bf16.mxu0 %v1309
  %2082 = vmatpush1.bf16.msra.mxu0 %v1308
  %2083 = vmatprep.subr.bf16.mxu0 %v1305
  %2084 = vmatpush1.bf16.msra.mxu0 %v1304
  %2085 = vmatprep.subr.bf16.mxu0 %v1301
  %2086 = vmatpush1.bf16.msra.mxu0 %v1300
  %2087 = vmatprep.subr.bf16.mxu0 %v1297
  %2088 = vmatpush1.bf16.msra.mxu0 %v1296
  %2089 = vmatprep.subr.bf16.mxu0 %v1293
  %2090 = vmatpush1.bf16.msra.mxu0 %v1292
  %2091 = vmatprep.subr.bf16.mxu0 %v1289
  %2092 = vmatpush1.bf16.msra.mxu0 %v1288
  %2093 = vmatprep.subr.bf16.mxu0 %v1285
  %2094 = vmatpush1.bf16.msra.mxu0 %v1284
  %2095 = vmatprep.subr.bf16.mxu0 %v1281
  %2096 = vmatpush1.bf16.msra.mxu0 %v1280
  %2097 = vmatprep.subr.bf16.mxu0 %v1341
  %2098 = vmatpush2.bf16.msra.mxu0 %v1340
  %2099 = vmatprep.subr.bf16.mxu0 %v1337
  %2100 = vmatpush2.bf16.msra.mxu0 %v1336
  %2101 = vmatprep.subr.bf16.mxu0 %v1333
  %2102 = vmatpush2.bf16.msra.mxu0 %v1332
  %2103 = vmatprep.subr.bf16.mxu0 %v1329
  %2104 = vmatpush2.bf16.msra.mxu0 %v1328
  %2105 = vmatprep.subr.bf16.mxu0 %v1325
  %2106 = vmatpush2.bf16.msra.mxu0 %v1324
  %2107 = vmatprep.subr.bf16.mxu0 %v1321
  %2108 = vmatpush2.bf16.msra.mxu0 %v1320
  %2109 = vmatprep.subr.bf16.mxu0 %v1317
  %2110 = vmatpush2.bf16.msra.mxu0 %v1316
  %2111 = vmatprep.subr.bf16.mxu0 %v1313
  %2112 = vmatpush2.bf16.msra.mxu0 %v1312
  %2113 = vmatprep.mubr.bf16.mxu0 %v385
  %2114 = vmatmul.mubr.bf16.gmra.mxu0 %v384
  %v2115 = vpop.f32.mrf.mxu0
  %v2116 = vadd.f32 %v2045, %v2115
  %v2117 = vpop.f32.mrf.mxu0
  %v2118 = vadd.f32 %v2047, %v2117
  %v2119 = vpop.f32.mrf.mxu0
  %v2120 = vadd.f32 %v2049, %v2119
  %v2121 = vpop.f32.mrf.mxu0
  %v2122 = vadd.f32 %v2051, %v2121
  %2123 = vmatprep.mubr.bf16.mxu0 %v393
  %2124 = vmatmul.mubr.bf16.gmra.mxu0 %v392
  %v2125 = vpop.f32.mrf.mxu0
  %v2126 = vadd.f32 %v2055, %v2125
  %v2127 = vpop.f32.mrf.mxu0
  %v2128 = vadd.f32 %v2057, %v2127
  %v2129 = vpop.f32.mrf.mxu0
  %v2130 = vadd.f32 %v2059, %v2129
  %v2131 = vpop.f32.mrf.mxu0
  %v2132 = vadd.f32 %v2061, %v2131
  %2133 = vmatprep.mubr.bf16.mxu0 %v401
  %2134 = vmatmul.mubr.bf16.gmra.mxu0 %v400
  %v2135 = vpop.f32.mrf.mxu0
  %v2136 = vadd.f32 %v2065, %v2135
  %v2137 = vpop.f32.mrf.mxu0
  %v2138 = vadd.f32 %v2067, %v2137
  %v2139 = vpop.f32.mrf.mxu0
  %v2140 = vadd.f32 %v2069, %v2139
  %v2141 = vpop.f32.mrf.mxu0
  %v2142 = vadd.f32 %v2071, %v2141
  %2143 = vmatprep.mubr.bf16.mxu0 %v409
  %2144 = vmatmul.mubr.bf16.gmra.mxu0 %v408
  %v2145 = vpop.f32.mrf.mxu0
  %v2146 = vadd.f32 %v2075, %v2145
  %v2147 = vpop.f32.mrf.mxu0
  %v2148 = vadd.f32 %v2077, %v2147
  %v2149 = vpop.f32.mrf.mxu0
  %v2150 = vpop.f32.mrf.mxu0
  %2151 = vdwg.mxu0
  %2152 = vmatprep.subr.bf16.mxu0 %v1373
  %2153 = vmatpush1.bf16.msra.mxu0 %v1372
  %2154 = vmatprep.subr.bf16.mxu0 %v1369
  %2155 = vmatpush1.bf16.msra.mxu0 %v1368
  %2156 = vmatprep.subr.bf16.mxu0 %v1365
  %2157 = vmatpush1.bf16.msra.mxu0 %v1364
  %2158 = vmatprep.subr.bf16.mxu0 %v1361
  %2159 = vmatpush1.bf16.msra.mxu0 %v1360
  %2160 = vmatprep.subr.bf16.mxu0 %v1357
  %2161 = vmatpush1.bf16.msra.mxu0 %v1356
  %2162 = vmatprep.subr.bf16.mxu0 %v1353
  %2163 = vmatpush1.bf16.msra.mxu0 %v1352
  %2164 = vmatprep.subr.bf16.mxu0 %v1349
  %2165 = vmatpush1.bf16.msra.mxu0 %v1348
  %2166 = vmatprep.subr.bf16.mxu0 %v1345
  %2167 = vmatpush1.bf16.msra.mxu0 %v1344
  %2168 = vmatprep.subr.bf16.mxu0 %v1405
  %2169 = vmatpush2.bf16.msra.mxu0 %v1404
  %2170 = vmatprep.subr.bf16.mxu0 %v1401
  %2171 = vmatpush2.bf16.msra.mxu0 %v1400
  %2172 = vmatprep.subr.bf16.mxu0 %v1397
  %2173 = vmatpush2.bf16.msra.mxu0 %v1396
  %2174 = vmatprep.subr.bf16.mxu0 %v1393
  %2175 = vmatpush2.bf16.msra.mxu0 %v1392
  %2176 = vmatprep.subr.bf16.mxu0 %v1389
  %2177 = vmatpush2.bf16.msra.mxu0 %v1388
  %2178 = vmatprep.subr.bf16.mxu0 %v1385
  %2179 = vmatpush2.bf16.msra.mxu0 %v1384
  %2180 = vmatprep.subr.bf16.mxu0 %v1381
  %2181 = vmatpush2.bf16.msra.mxu0 %v1380
  %2182 = vmatprep.subr.bf16.mxu0 %v1377
  %2183 = vmatpush2.bf16.msra.mxu0 %v1376
  %2184 = vmatprep.mubr.bf16.mxu0 %v387
  %2185 = vmatmul.mubr.bf16.gmra.mxu0 %v386
  %v2186 = vpop.f32.mrf.mxu0
  %v2187 = vadd.f32 %v2116, %v2186
  %v2188 = vpop.f32.mrf.mxu0
  %v2189 = vadd.f32 %v2118, %v2188
  %v2190 = vpop.f32.mrf.mxu0
  %v2191 = vadd.f32 %v2120, %v2190
  %v2192 = vpop.f32.mrf.mxu0
  %v2193 = vadd.f32 %v2122, %v2192
  %2194 = vmatprep.mubr.bf16.mxu0 %v395
  %2195 = vmatmul.mubr.bf16.gmra.mxu0 %v394
  %v2196 = vpop.f32.mrf.mxu0
  %v2197 = vadd.f32 %v2126, %v2196
  %v2198 = vpop.f32.mrf.mxu0
  %v2199 = vadd.f32 %v2128, %v2198
  %v2200 = vpop.f32.mrf.mxu0
  %v2201 = vadd.f32 %v2130, %v2200
  %v2202 = vpop.f32.mrf.mxu0
  %v2203 = vadd.f32 %v2132, %v2202
  %2204 = vmatprep.mubr.bf16.mxu0 %v403
  %2205 = vmatmul.mubr.bf16.gmra.mxu0 %v402
  %v2206 = vpop.f32.mrf.mxu0
  %v2207 = vadd.f32 %v2136, %v2206
  %v2208 = vpop.f32.mrf.mxu0
  %v2209 = vadd.f32 %v2138, %v2208
  %v2210 = vpop.f32.mrf.mxu0
  %v2211 = vadd.f32 %v2140, %v2210
  %v2212 = vpop.f32.mrf.mxu0
  %v2213 = vadd.f32 %v2142, %v2212
  %2214 = vmatprep.mubr.bf16.mxu0 %v411
  %2215 = vmatmul.mubr.bf16.gmra.mxu0 %v410
  %v2216 = vpop.f32.mrf.mxu0
  %v2217 = vadd.f32 %v2146, %v2216
  %v2218 = vpop.f32.mrf.mxu0
  %v2219 = vadd.f32 %v2148, %v2218
  %v2220 = vpop.f32.mrf.mxu0
  %v2221 = vpop.f32.mrf.mxu0
  %2222 = vdwg.mxu0
  %2223 = vmatprep.subr.bf16.mxu0 %v1437
  %2224 = vmatpush1.bf16.msra.mxu0 %v1436
  %2225 = vmatprep.subr.bf16.mxu0 %v1433
  %2226 = vmatpush1.bf16.msra.mxu0 %v1432
  %2227 = vmatprep.subr.bf16.mxu0 %v1429
  %2228 = vmatpush1.bf16.msra.mxu0 %v1428
  %2229 = vmatprep.subr.bf16.mxu0 %v1425
  %2230 = vmatpush1.bf16.msra.mxu0 %v1424
  %2231 = vmatprep.subr.bf16.mxu0 %v1421
  %2232 = vmatpush1.bf16.msra.mxu0 %v1420
  %2233 = vmatprep.subr.bf16.mxu0 %v1417
  %2234 = vmatpush1.bf16.msra.mxu0 %v1416
  %2235 = vmatprep.subr.bf16.mxu0 %v1413
  %2236 = vmatpush1.bf16.msra.mxu0 %v1412
  %2237 = vmatprep.subr.bf16.mxu0 %v1409
  %2238 = vmatpush1.bf16.msra.mxu0 %v1408
  %2239 = vmatprep.subr.bf16.mxu0 %v1469
  %2240 = vmatpush2.bf16.msra.mxu0 %v1468
  %2241 = vmatprep.subr.bf16.mxu0 %v1465
  %2242 = vmatpush2.bf16.msra.mxu0 %v1464
  %2243 = vmatprep.subr.bf16.mxu0 %v1461
  %2244 = vmatpush2.bf16.msra.mxu0 %v1460
  %2245 = vmatprep.subr.bf16.mxu0 %v1457
  %2246 = vmatpush2.bf16.msra.mxu0 %v1456
  %2247 = vmatprep.subr.bf16.mxu0 %v1453
  %2248 = vmatpush2.bf16.msra.mxu0 %v1452
  %2249 = vmatprep.subr.bf16.mxu0 %v1449
  %2250 = vmatpush2.bf16.msra.mxu0 %v1448
  %2251 = vmatprep.subr.bf16.mxu0 %v1445
  %2252 = vmatpush2.bf16.msra.mxu0 %v1444
  %2253 = vmatprep.subr.bf16.mxu0 %v1441
  %2254 = vmatpush2.bf16.msra.mxu0 %v1440
  %2255 = vmatprep.mubr.bf16.mxu0 %v389
  %2256 = vmatmul.mubr.bf16.gmra.mxu0 %v388
  %v2257 = vpop.f32.mrf.mxu0
  %v2258 = vadd.f32 %v2187, %v2257
  %v2259 = vpop.f32.mrf.mxu0
  %v2260 = vadd.f32 %v2189, %v2259
  %v2261 = vpop.f32.mrf.mxu0
  %v2262 = vadd.f32 %v2191, %v2261
  %v2263 = vpop.f32.mrf.mxu0
  %v2264 = vadd.f32 %v2193, %v2263
  %2265 = vmatprep.mubr.bf16.mxu0 %v397
  %2266 = vmatmul.mubr.bf16.gmra.mxu0 %v396
  %v2267 = vpop.f32.mrf.mxu0
  %v2268 = vadd.f32 %v2197, %v2267
  %v2269 = vpop.f32.mrf.mxu0
  %v2270 = vadd.f32 %v2199, %v2269
  %v2271 = vpop.f32.mrf.mxu0
  %v2272 = vadd.f32 %v2201, %v2271
  %v2273 = vpop.f32.mrf.mxu0
  %v2274 = vadd.f32 %v2203, %v2273
  %2275 = vmatprep.mubr.bf16.mxu0 %v405
  %2276 = vmatmul.mubr.bf16.gmra.mxu0 %v404
  %v2277 = vpop.f32.mrf.mxu0
  %v2278 = vadd.f32 %v2207, %v2277
  %v2279 = vpop.f32.mrf.mxu0
  %v2280 = vadd.f32 %v2209, %v2279
  %v2281 = vpop.f32.mrf.mxu0
  %v2282 = vadd.f32 %v2211, %v2281
  %v2283 = vpop.f32.mrf.mxu0
  %v2284 = vadd.f32 %v2213, %v2283
  %2285 = vmatprep.mubr.bf16.mxu0 %v413
  %2286 = vmatmul.mubr.bf16.gmra.mxu0 %v412
  %v2287 = vpop.f32.mrf.mxu0
  %v2288 = vadd.f32 %v2217, %v2287
  %v2289 = vpop.f32.mrf.mxu0
  %v2290 = vadd.f32 %v2219, %v2289
  %v2291 = vpop.f32.mrf.mxu0
  %v2292 = vpop.f32.mrf.mxu0
  %2293 = vdwg.mxu0
  %v2294 = vmax.f32 %v1974, %v1976
  %v2295 = vmax.f32 %v1978, %v1980
  %v2296 = vmax.f32 %v1984, %v1986
  %v2297 = vmax.f32 %v1988, %v1990
  %v2298 = vmax.f32 %v1994, %v1996
  %v2299 = vmax.f32 %v1998, %v2000
  %v2300 = vmax.f32 %v2004, %v2006
  %v2301 = vmax.f32 %v2258, %v2260
  %v2302 = vmax.f32 %v2262, %v2264
  %v2303 = vmax.f32 %v2268, %v2270
  %v2304 = vmax.f32 %v2272, %v2274
  %v2305 = vmax.f32 %v2278, %v2280
  %v2306 = vmax.f32 %v2282, %v2284
  %v2307 = vmax.f32 %v2288, %v2290
  %v2308 = vmax.f32 %v2294, %v2301
  %v2309 = vmax.f32 %v2295, %v2302
  %v2310 = vmax.f32 %v2296, %v2303
  %v2311 = vmax.f32 %v2297, %v2304
  %v2312 = vmax.f32 %v2298, %v2305
  %v2313 = vmax.f32 %v2299, %v2306
  %v2314 = vmax.f32 %v2300, %v2307
  %v2315 = vld [vmem:[%s2] sm:$0x1]
  %v2317 = vlaneseq
  %v2318 = vshrl.u32 %v2317, 7
  %v2319 = vsub.s32 0, %v2318
  %v2320 = vrot.slane %v2315, %v2319
  %v2322 = vadd.f32 %v2308, %v2320
  %v2323 = vadd.f32 %v2309, %v2320
  %v2324 = vadd.f32 %v2310, %v2320
  %v2325 = vadd.f32 %v2311, %v2320
  %v2326 = vadd.f32 %v2312, %v2320
  %v2327 = vadd.f32 %v2313, %v2320
  %v2328 = vadd.f32 %v2314, %v2320
  %v2329 = vmax.f32 %v2322, 0.0
  %v2330 = vmax.f32 %v2323, 0.0
  %v2331 = vmax.f32 %v2324, 0.0
  %v2332 = vmax.f32 %v2325, 0.0
  %v2333 = vmax.f32 %v2326, 0.0
  %v2334 = vmax.f32 %v2327, 0.0
  %v2335 = vmax.f32 %v2328, 0.0
  %v2336 = vpack.c.bf16 %v2330, %v2329
  %v2337 = vpack.c.bf16 %v2332, %v2331
  %v2338 = vpack.c.bf16 %v2334, %v2333
  %v2339 = vpack.c.bf16 %v2335, %v2335
  %v2344 = vunpack.c.l.b16 %v2336
  %v2345 = vunpack.c.h.b16 %v2336
  %v2346 = vunpack.c.l.b16 %v2337
  %v2347 = vunpack.c.h.b16 %v2337
  %v2348 = vunpack.c.l.b16 %v2338
  %v2349 = vunpack.c.h.b16 %v2338
  %v2350 = vunpack.c.l.b16 %v2339
  %v2351 = vpack.c.b16 %v2344, %v2344
  %v2352 = vpack.c.b16 %v2345, %v2345
  %v2353 = vpack.c.b16 %v2346, %v2346
  %v2354 = vpack.c.b16 %v2347, %v2347
  %v2355 = vpack.c.b16 %v2348, %v2348
  %v2356 = vpack.c.b16 %v2349, %v2349
  %v2357 = vpack.c.b16 %v2350, %v2350
  %2365 = vst [vmem:[%s3] sm:$0xf] %v2351
  %2366 = vst [vmem:[%s3 + $0x4] sm:$0xf] %v2352
  %2367 = vst [vmem:[%s3 + $0x8] sm:$0xf] %v2353
  %2368 = vst [vmem:[%s3 + $0xc] sm:$0xf] %v2354
  %2369 = vst [vmem:[%s3 + $0x10] sm:$0xf] %v2355
  %2370 = vst [vmem:[%s3 + $0x14] sm:$0xf] %v2356
  %vm2371 = vcmask 1040384
  %vm2372 = vsmask.f32 256
  %vm2373 = vmand %vm2371, %vm2372
  %v2374 = vld [vmem:[%s3 + $0x18] sm:$0x1]
  %v2375 = vsel %vm2373, %v2357, %v2374
  %2376 = vst [vmem:[%s3 + $0x18] sm:$0x1] %v2375
  // Predicated region
  $region14: #{cnn_forward.4} parent=0 // pred_check
    _
  $region15: #{cnn_forward.4} parent=0 // pred_check_branch
    %2378 = sbr.rel (0) target = $region17
  $region16: #{cnn_forward.4} parent=0 // pred_region
    _
  $region17: #{cnn_forward.4} parent=0 // pred_fallthru
    _
  // Predicated region
  $region18: #{cnn_forward.4} parent=0 // pred_check
    _
  $region19: #{cnn_forward.4} parent=0 // pred_check_branch
    %2380 = sbr.rel (0) target = $region21
  $region20: #{cnn_forward.4} parent=0 // pred_region
    _
  $region21: #{cnn_forward.4} parent=0 // pred_fallthru
    _

// kernel: cnn_forward.5
$region0: #{cnn_forward.5}
  #allocation0 [shape = 'u32[]', space=smem, size = 0x4, offset = 0x4, fixed_abs, tag = 'smem constant byte address 0x4 - core index']
  #allocation1 [shape = 'u32[144,128]{1,0:T(1,128)}', space=vmem, size = 0x12000, scoped, tag = 'internal scratch']
  %s0 = inlined_call_operand.vmem [shape: bf16[2,3136], index: 0, kind: input, shape index: {}]
  %s1 = inlined_call_operand.vmem [shape: bf16[3136,128], index: 1, kind: input, shape index: {}]
  %s2 = inlined_call_operand.vmem [shape: f32[1,128], index: 2, kind: input, shape index: {}]
  %s3 = inlined_call_operand.vmem [shape: bf16[128,128], index: 3, kind: input, shape index: {}]
  %s4 = inlined_call_operand.vmem [shape: f32[1,128], index: 4, kind: input, shape index: {}]
  %s5 = inlined_call_operand.hbm [shape: f32[2,128], index: 5, kind: output, shape index: {}]
  %s6 = sld [smem:[#allocation0]]
  $region30: #{cnn_forward.5} parent=0
    _
  %s8 = ssub.s32 1, %s6
  %s9 = scalar_select 0, %s8, %s6
  $region1: #{cnn_forward.5} parent=0
    #allocation2 [shape = 'u8[1024]{0}', space=vmem, size = 0x400, scoped, tag = 'output window, operand 0, single buffered']
    #allocation3 [shape = 's32[1]{0}', space=sflag, size = 0x4, scoped, tag = 'scoped memory for cnn_forward.5']
    %10 = vsyncpa [#allocation3], 0
    // Predicated region
    $region2: #{cnn_forward.5} parent=1 // pred_check
      _
    $region3: #{cnn_forward.5} parent=1 // pred_check_branch
      %12 = sbr.rel (0) target = $region5
    $region4: #{cnn_forward.5} parent=1 // pred_region
      _
    $region5: #{cnn_forward.5} parent=1 // pred_fallthru
      _
    // Predicated region
    $region6: #{cnn_forward.5} parent=1 // pred_check
      _
    $region7: #{cnn_forward.5} parent=1 // pred_check_branch
      %14 = sbr.rel (0) target = $region9
    $region8: #{cnn_forward.5} parent=1 // pred_region
      _
    $region9: #{cnn_forward.5} parent=1 // pred_fallthru
      _
    // Predicated region
    $region10: #{cnn_forward.5} parent=1 // pred_check
      _
    $region11: #{cnn_forward.5} parent=1 // pred_check_branch
      %16 = sbr.rel (0) target = $region13
    $region12: #{cnn_forward.5} parent=1 // pred_region
      _
    $region13: #{cnn_forward.5} parent=1 // pred_fallthru
      _
    // Predicated region
    $region14: #{cnn_forward.5} parent=1 // pred_check
      _
    $region15: #{cnn_forward.5} parent=1 // pred_check_branch
      %18 = sbr.rel (0) target = $region17
    $region16: #{cnn_forward.5} parent=1 // pred_region
      _
    $region17: #{cnn_forward.5} parent=1 // pred_fallthru
      _
    // Predicated region
    $region18: #{cnn_forward.5} parent=1 // pred_check
      _
    $region19: #{cnn_forward.5} parent=1 // pred_check_branch
      %20 = sbr.rel (0) target = $region21
    $region20: #{cnn_forward.5} parent=1 // pred_region
      _
    $region21: #{cnn_forward.5} parent=1 // pred_fallthru
      _
    %v22 = vld [vmem:[%s0] sm:$0xff]
    %v23 = vld [vmem:[%s0 + $0x8] sm:$0xff]
    %v24 = vld [vmem:[%s0 + $0x10] sm:$0xff]
    %v25 = vld [vmem:[%s0 + $0x18] sm:$0x1]
    %v26 = vld [vmem:[%s1] sm:$0xf]
    %v27 = vld [vmem:[%s1 + $0x4] sm:$0xf]
    %v28 = vld [vmem:[%s1 + $0x8] sm:$0xf]
    %v29 = vld [vmem:[%s1 + $0xc] sm:$0xf]
    %v30 = vld [vmem:[%s1 + $0x10] sm:$0xf]
    %v31 = vld [vmem:[%s1 + $0x14] sm:$0xf]
    %v32 = vld [vmem:[%s1 + $0x18] sm:$0xf]
    %v33 = vld [vmem:[%s1 + $0x1c] sm:$0xf]
    %v34 = vld [vmem:[%s1 + $0x20] sm:$0xf]
    %v35 = vld [vmem:[%s1 + $0x24] sm:$0xf]
    %v36 = vld [vmem:[%s1 + $0x28] sm:$0xf]
    %v37 = vld [vmem:[%s1 + $0x2c] sm:$0xf]
    %v38 = vld [vmem:[%s1 + $0x30] sm:$0xf]
    %v39 = vld [vmem:[%s1 + $0x34] sm:$0xf]
    %v40 = vld [vmem:[%s1 + $0x38] sm:$0xf]
    %v41 = vld [vmem:[%s1 + $0x3c] sm:$0xf]
    %v42 = vld [vmem:[%s1 + $0x40] sm:$0xf]
    %v43 = vld [vmem:[%s1 + $0x44] sm:$0xf]
    %v44 = vld [vmem:[%s1 + $0x48] sm:$0xf]
    %v45 = vld [vmem:[%s1 + $0x4c] sm:$0xf]
    %v46 = vld [vmem:[%s1 + $0x50] sm:$0xf]
    %v47 = vld [vmem:[%s1 + $0x54] sm:$0xf]
    %v48 = vld [vmem:[%s1 + $0x58] sm:$0xf]
    %v49 = vld [vmem:[%s1 + $0x5c] sm:$0xf]
    %v50 = vld [vmem:[%s1 + $0x60] sm:$0xf]
    %v51 = vld [vmem:[%s1 + $0x64] sm:$0xf]
    %v52 = vld [vmem:[%s1 + $0x68] sm:$0xf]
    %v53 = vld [vmem:[%s1 + $0x6c] sm:$0xf]
    %v54 = vld [vmem:[%s1 + $0x70] sm:$0xf]
    %v55 = vld [vmem:[%s1 + $0x74] sm:$0xf]
    %v56 = vld [vmem:[%s1 + $0x78] sm:$0xf]
    %v57 = vld [vmem:[%s1 + $0x7c] sm:$0xf]
    %v58 = vld [vmem:[%s1 + $0x80] sm:$0xf]
    %v59 = vld [vmem:[%s1 + $0x84] sm:$0xf]
    %v60 = vld [vmem:[%s1 + $0x88] sm:$0xf]
    %v61 = vld [vmem:[%s1 + $0x8c] sm:$0xf]
    %v62 = vld [vmem:[%s1 + $0x90] sm:$0xf]
    %v63 = vld [vmem:[%s1 + $0x94] sm:$0xf]
    %v64 = vld [vmem:[%s1 + $0x98] sm:$0xf]
    %v65 = vld [vmem:[%s1 + $0x9c] sm:$0xf]
    %v66 = vld [vmem:[%s1 + $0xa0] sm:$0xf]
    %v67 = vld [vmem:[%s1 + $0xa4] sm:$0xf]
    %v68 = vld [vmem:[%s1 + $0xa8] sm:$0xf]
    %v69 = vld [vmem:[%s1 + $0xac] sm:$0xf]
    %v70 = vld [vmem:[%s1 + $0xb0] sm:$0xf]
    %v71 = vld [vmem:[%s1 + $0xb4] sm:$0xf]
    %v72 = vld [vmem:[%s1 + $0xb8] sm:$0xf]
    %v73 = vld [vmem:[%s1 + $0xbc] sm:$0xf]
    %v74 = vld [vmem:[%s1 + $0xc0] sm:$0xf]
    %v75 = vld [vmem:[%s1 + $0xc4] sm:$0xf]
    %v76 = vld [vmem:[%s1 + $0xc8] sm:$0xf]
    %v77 = vld [vmem:[%s1 + $0xcc] sm:$0xf]
    %v78 = vld [vmem:[%s1 + $0xd0] sm:$0xf]
    %v79 = vld [vmem:[%s1 + $0xd4] sm:$0xf]
    %v80 = vld [vmem:[%s1 + $0xd8] sm:$0xf]
    %v81 = vld [vmem:[%s1 + $0xdc] sm:$0xf]
    %v82 = vld [vmem:[%s1 + $0xe0] sm:$0xf]
    %v83 = vld [vmem:[%s1 + $0xe4] sm:$0xf]
    %v84 = vld [vmem:[%s1 + $0xe8] sm:$0xf]
    %v85 = vld [vmem:[%s1 + $0xec] sm:$0xf]
    %v86 = vld [vmem:[%s1 + $0xf0] sm:$0xf]
    %v87 = vld [vmem:[%s1 + $0xf4] sm:$0xf]
    %v88 = vld [vmem:[%s1 + $0xf8] sm:$0xf]
    %v89 = vld [vmem:[%s1 + $0xfc] sm:$0xf]
    %v90 = vld [vmem:[%s1 + $0x100] sm:$0xf]
    %v91 = vld [vmem:[%s1 + $0x104] sm:$0xf]
    %v92 = vld [vmem:[%s1 + $0x108] sm:$0xf]
    %v93 = vld [vmem:[%s1 + $0x10c] sm:$0xf]
    %v94 = vld [vmem:[%s1 + $0x110] sm:$0xf]
    %v95 = vld [vmem:[%s1 + $0x114] sm:$0xf]
    %v96 = vld [vmem:[%s1 + $0x118] sm:$0xf]
    %v97 = vld [vmem:[%s1 + $0x11c] sm:$0xf]
    %v98 = vld [vmem:[%s1 + $0x120] sm:$0xf]
    %v99 = vld [vmem:[%s1 + $0x124] sm:$0xf]
    %v100 = vld [vmem:[%s1 + $0x128] sm:$0xf]
    %v101 = vld [vmem:[%s1 + $0x12c] sm:$0xf]
    %v102 = vld [vmem:[%s1 + $0x130] sm:$0xf]
    %v103 = vld [vmem:[%s1 + $0x134] sm:$0xf]
    %v104 = vld [vmem:[%s1 + $0x138] sm:$0xf]
    %v105 = vld [vmem:[%s1 + $0x13c] sm:$0xf]
    %v106 = vld [vmem:[%s1 + $0x140] sm:$0xf]
    %v107 = vld [vmem:[%s1 + $0x144] sm:$0xf]
    %v108 = vld [vmem:[%s1 + $0x148] sm:$0xf]
    %v109 = vld [vmem:[%s1 + $0x14c] sm:$0xf]
    %v110 = vld [vmem:[%s1 + $0x150] sm:$0xf]
    %v111 = vld [vmem:[%s1 + $0x154] sm:$0xf]
    %v112 = vld [vmem:[%s1 + $0x158] sm:$0xf]
    %v113 = vld [vmem:[%s1 + $0x15c] sm:$0xf]
    %v114 = vld [vmem:[%s1 + $0x160] sm:$0xf]
    %v115 = vld [vmem:[%s1 + $0x164] sm:$0xf]
    %v116 = vld [vmem:[%s1 + $0x168] sm:$0xf]
    %v117 = vld [vmem:[%s1 + $0x16c] sm:$0xf]
    %v118 = vld [vmem:[%s1 + $0x170] sm:$0xf]
    %v119 = vld [vmem:[%s1 + $0x174] sm:$0xf]
    %v120 = vld [vmem:[%s1 + $0x178] sm:$0xf]
    %v121 = vld [vmem:[%s1 + $0x17c] sm:$0xf]
    %v122 = vld [vmem:[%s1 + $0x180] sm:$0xf]
    %v123 = vld [vmem:[%s1 + $0x184] sm:$0xf]
    %v124 = vld [vmem:[%s1 + $0x188] sm:$0xf]
    %v125 = vld [vmem:[%s1 + $0x18c] sm:$0xf]
    %v126 = vld [vmem:[%s1 + $0x190] sm:$0xf]
    %v127 = vld [vmem:[%s1 + $0x194] sm:$0xf]
    %v128 = vld [vmem:[%s1 + $0x198] sm:$0xf]
    %v129 = vld [vmem:[%s1 + $0x19c] sm:$0xf]
    %v130 = vld [vmem:[%s1 + $0x1a0] sm:$0xf]
    %v131 = vld [vmem:[%s1 + $0x1a4] sm:$0xf]
    %v132 = vld [vmem:[%s1 + $0x1a8] sm:$0xf]
    %v133 = vld [vmem:[%s1 + $0x1ac] sm:$0xf]
    %v134 = vld [vmem:[%s1 + $0x1b0] sm:$0xf]
    %v135 = vld [vmem:[%s1 + $0x1b4] sm:$0xf]
    %v136 = vld [vmem:[%s1 + $0x1b8] sm:$0xf]
    %v137 = vld [vmem:[%s1 + $0x1bc] sm:$0xf]
    %v138 = vld [vmem:[%s1 + $0x1c0] sm:$0xf]
    %v139 = vld [vmem:[%s1 + $0x1c4] sm:$0xf]
    %v140 = vld [vmem:[%s1 + $0x1c8] sm:$0xf]
    %v141 = vld [vmem:[%s1 + $0x1cc] sm:$0xf]
    %v142 = vld [vmem:[%s1 + $0x1d0] sm:$0xf]
    %v143 = vld [vmem:[%s1 + $0x1d4] sm:$0xf]
    %v144 = vld [vmem:[%s1 + $0x1d8] sm:$0xf]
    %v145 = vld [vmem:[%s1 + $0x1dc] sm:$0xf]
    %v146 = vld [vmem:[%s1 + $0x1e0] sm:$0xf]
    %v147 = vld [vmem:[%s1 + $0x1e4] sm:$0xf]
    %v148 = vld [vmem:[%s1 + $0x1e8] sm:$0xf]
    %v149 = vld [vmem:[%s1 + $0x1ec] sm:$0xf]
    %v150 = vld [vmem:[%s1 + $0x1f0] sm:$0xf]
    %v151 = vld [vmem:[%s1 + $0x1f4] sm:$0xf]
    %v152 = vld [vmem:[%s1 + $0x1f8] sm:$0xf]
    %v153 = vld [vmem:[%s1 + $0x1fc] sm:$0xf]
    %v154 = vld [vmem:[%s1 + $0x200] sm:$0xf]
    %v155 = vld [vmem:[%s1 + $0x204] sm:$0xf]
    %v156 = vld [vmem:[%s1 + $0x208] sm:$0xf]
    %v157 = vld [vmem:[%s1 + $0x20c] sm:$0xf]
    %v158 = vld [vmem:[%s1 + $0x210] sm:$0xf]
    %v159 = vld [vmem:[%s1 + $0x214] sm:$0xf]
    %v160 = vld [vmem:[%s1 + $0x218] sm:$0xf]
    %v161 = vld [vmem:[%s1 + $0x21c] sm:$0xf]
    %v162 = vld [vmem:[%s1 + $0x220] sm:$0xf]
    %v163 = vld [vmem:[%s1 + $0x224] sm:$0xf]
    %v164 = vld [vmem:[%s1 + $0x228] sm:$0xf]
    %v165 = vld [vmem:[%s1 + $0x22c] sm:$0xf]
    %v166 = vld [vmem:[%s1 + $0x230] sm:$0xf]
    %v167 = vld [vmem:[%s1 + $0x234] sm:$0xf]
    %v168 = vld [vmem:[%s1 + $0x238] sm:$0xf]
    %v169 = vld [vmem:[%s1 + $0x23c] sm:$0xf]
    %v170 = vld [vmem:[%s1 + $0x240] sm:$0xf]
    %v171 = vld [vmem:[%s1 + $0x244] sm:$0xf]
    %v172 = vld [vmem:[%s1 + $0x248] sm:$0xf]
    %v173 = vld [vmem:[%s1 + $0x24c] sm:$0xf]
    %v174 = vld [vmem:[%s1 + $0x250] sm:$0xf]
    %v175 = vld [vmem:[%s1 + $0x254] sm:$0xf]
    %v176 = vld [vmem:[%s1 + $0x258] sm:$0xf]
    %v177 = vld [vmem:[%s1 + $0x25c] sm:$0xf]
    %v178 = vld [vmem:[%s1 + $0x260] sm:$0xf]
    %v179 = vld [vmem:[%s1 + $0x264] sm:$0xf]
    %v180 = vld [vmem:[%s1 + $0x268] sm:$0xf]
    %v181 = vld [vmem:[%s1 + $0x26c] sm:$0xf]
    %v182 = vld [vmem:[%s1 + $0x270] sm:$0xf]
    %v183 = vld [vmem:[%s1 + $0x274] sm:$0xf]
    %v184 = vld [vmem:[%s1 + $0x278] sm:$0xf]
    %v185 = vld [vmem:[%s1 + $0x27c] sm:$0xf]
    %v186 = vld [vmem:[%s1 + $0x280] sm:$0xf]
    %v187 = vld [vmem:[%s1 + $0x284] sm:$0xf]
    %v188 = vld [vmem:[%s1 + $0x288] sm:$0xf]
    %v189 = vld [vmem:[%s1 + $0x28c] sm:$0xf]
    %v190 = vld [vmem:[%s1 + $0x290] sm:$0xf]
    %v191 = vld [vmem:[%s1 + $0x294] sm:$0xf]
    %v192 = vld [vmem:[%s1 + $0x298] sm:$0xf]
    %v193 = vld [vmem:[%s1 + $0x29c] sm:$0xf]
    %v194 = vld [vmem:[%s1 + $0x2a0] sm:$0xf]
    %v195 = vld [vmem:[%s1 + $0x2a4] sm:$0xf]
    %v196 = vld [vmem:[%s1 + $0x2a8] sm:$0xf]
    %v197 = vld [vmem:[%s1 + $0x2ac] sm:$0xf]
    %v198 = vld [vmem:[%s1 + $0x2b0] sm:$0xf]
    %v199 = vld [vmem:[%s1 + $0x2b4] sm:$0xf]
    %v200 = vld [vmem:[%s1 + $0x2b8] sm:$0xf]
    %v201 = vld [vmem:[%s1 + $0x2bc] sm:$0xf]
    %v202 = vld [vmem:[%s1 + $0x2c0] sm:$0xf]
    %v203 = vld [vmem:[%s1 + $0x2c4] sm:$0xf]
    %v204 = vld [vmem:[%s1 + $0x2c8] sm:$0xf]
    %v205 = vld [vmem:[%s1 + $0x2cc] sm:$0xf]
    %v206 = vld [vmem:[%s1 + $0x2d0] sm:$0xf]
    %v207 = vld [vmem:[%s1 + $0x2d4] sm:$0xf]
    %v208 = vld [vmem:[%s1 + $0x2d8] sm:$0xf]
    %v209 = vld [vmem:[%s1 + $0x2dc] sm:$0xf]
    %v210 = vld [vmem:[%s1 + $0x2e0] sm:$0xf]
    %v211 = vld [vmem:[%s1 + $0x2e4] sm:$0xf]
    %v212 = vld [vmem:[%s1 + $0x2e8] sm:$0xf]
    %v213 = vld [vmem:[%s1 + $0x2ec] sm:$0xf]
    %v214 = vld [vmem:[%s1 + $0x2f0] sm:$0xf]
    %v215 = vld [vmem:[%s1 + $0x2f4] sm:$0xf]
    %v216 = vld [vmem:[%s1 + $0x2f8] sm:$0xf]
    %v217 = vld [vmem:[%s1 + $0x2fc] sm:$0xf]
    %v218 = vld [vmem:[%s1 + $0x300] sm:$0xf]
    %v219 = vld [vmem:[%s1 + $0x304] sm:$0xf]
    %v220 = vld [vmem:[%s1 + $0x308] sm:$0xf]
    %v221 = vld [vmem:[%s1 + $0x30c] sm:$0xf]
    %v222 = vld [vmem:[%s1 + $0x310] sm:$0xf]
    %v223 = vld [vmem:[%s1 + $0x314] sm:$0xf]
    %v224 = vld [vmem:[%s1 + $0x318] sm:$0xf]
    %v225 = vld [vmem:[%s1 + $0x31c] sm:$0xf]
    %v226 = vld [vmem:[%s1 + $0x320] sm:$0xf]
    %v227 = vld [vmem:[%s1 + $0x324] sm:$0xf]
    %v228 = vld [vmem:[%s1 + $0x328] sm:$0xf]
    %v229 = vld [vmem:[%s1 + $0x32c] sm:$0xf]
    %v230 = vld [vmem:[%s1 + $0x330] sm:$0xf]
    %v231 = vld [vmem:[%s1 + $0x334] sm:$0xf]
    %v232 = vld [vmem:[%s1 + $0x338] sm:$0xf]
    %v233 = vld [vmem:[%s1 + $0x33c] sm:$0xf]
    %v234 = vld [vmem:[%s1 + $0x340] sm:$0xf]
    %v235 = vld [vmem:[%s1 + $0x344] sm:$0xf]
    %v236 = vld [vmem:[%s1 + $0x348] sm:$0xf]
    %v237 = vld [vmem:[%s1 + $0x34c] sm:$0xf]
    %v238 = vld [vmem:[%s1 + $0x350] sm:$0xf]
    %v239 = vld [vmem:[%s1 + $0x354] sm:$0xf]
    %v240 = vld [vmem:[%s1 + $0x358] sm:$0xf]
    %v241 = vld [vmem:[%s1 + $0x35c] sm:$0xf]
    %v242 = vld [vmem:[%s1 + $0x360] sm:$0xf]
    %v243 = vld [vmem:[%s1 + $0x364] sm:$0xf]
    %v244 = vld [vmem:[%s1 + $0x368] sm:$0xf]
    %v245 = vld [vmem:[%s1 + $0x36c] sm:$0xf]
    %v246 = vld [vmem:[%s1 + $0x370] sm:$0xf]
    %v247 = vld [vmem:[%s1 + $0x374] sm:$0xf]
    %v248 = vld [vmem:[%s1 + $0x378] sm:$0xf]
    %v249 = vld [vmem:[%s1 + $0x37c] sm:$0xf]
    %v250 = vld [vmem:[%s1 + $0x380] sm:$0xf]
    %v251 = vld [vmem:[%s1 + $0x384] sm:$0xf]
    %v252 = vld [vmem:[%s1 + $0x388] sm:$0xf]
    %v253 = vld [vmem:[%s1 + $0x38c] sm:$0xf]
    %v254 = vld [vmem:[%s1 + $0x390] sm:$0xf]
    %v255 = vld [vmem:[%s1 + $0x394] sm:$0xf]
    %v256 = vld [vmem:[%s1 + $0x398] sm:$0xf]
    %v257 = vld [vmem:[%s1 + $0x39c] sm:$0xf]
    %v258 = vld [vmem:[%s1 + $0x3a0] sm:$0xf]
    %v259 = vld [vmem:[%s1 + $0x3a4] sm:$0xf]
    %v260 = vld [vmem:[%s1 + $0x3a8] sm:$0xf]
    %v261 = vld [vmem:[%s1 + $0x3ac] sm:$0xf]
    %v262 = vld [vmem:[%s1 + $0x3b0] sm:$0xf]
    %v263 = vld [vmem:[%s1 + $0x3b4] sm:$0xf]
    %v264 = vld [vmem:[%s1 + $0x3b8] sm:$0xf]
    %v265 = vld [vmem:[%s1 + $0x3bc] sm:$0xf]
    %v266 = vld [vmem:[%s1 + $0x3c0] sm:$0xf]
    %v267 = vld [vmem:[%s1 + $0x3c4] sm:$0xf]
    %v268 = vld [vmem:[%s1 + $0x3c8] sm:$0xf]
    %v269 = vld [vmem:[%s1 + $0x3cc] sm:$0xf]
    %v270 = vld [vmem:[%s1 + $0x3d0] sm:$0xf]
    %v271 = vld [vmem:[%s1 + $0x3d4] sm:$0xf]
    %v272 = vld [vmem:[%s1 + $0x3d8] sm:$0xf]
    %v273 = vld [vmem:[%s1 + $0x3dc] sm:$0xf]
    %v274 = vld [vmem:[%s1 + $0x3e0] sm:$0xf]
    %v275 = vld [vmem:[%s1 + $0x3e4] sm:$0xf]
    %v276 = vld [vmem:[%s1 + $0x3e8] sm:$0xf]
    %v277 = vld [vmem:[%s1 + $0x3ec] sm:$0xf]
    %v278 = vld [vmem:[%s1 + $0x3f0] sm:$0xf]
    %v279 = vld [vmem:[%s1 + $0x3f4] sm:$0xf]
    %v280 = vld [vmem:[%s1 + $0x3f8] sm:$0xf]
    %v281 = vld [vmem:[%s1 + $0x3fc] sm:$0xf]
    %v282 = vld [vmem:[%s1 + $0x400] sm:$0xf]
    %v283 = vld [vmem:[%s1 + $0x404] sm:$0xf]
    %v284 = vld [vmem:[%s1 + $0x408] sm:$0xf]
    %v285 = vld [vmem:[%s1 + $0x40c] sm:$0xf]
    %v286 = vld [vmem:[%s1 + $0x410] sm:$0xf]
    %v287 = vld [vmem:[%s1 + $0x414] sm:$0xf]
    %v288 = vld [vmem:[%s1 + $0x418] sm:$0xf]
    %v289 = vld [vmem:[%s1 + $0x41c] sm:$0xf]
    %v290 = vld [vmem:[%s1 + $0x420] sm:$0xf]
    %v291 = vld [vmem:[%s1 + $0x424] sm:$0xf]
    %v292 = vld [vmem:[%s1 + $0x428] sm:$0xf]
    %v293 = vld [vmem:[%s1 + $0x42c] sm:$0xf]
    %v294 = vld [vmem:[%s1 + $0x430] sm:$0xf]
    %v295 = vld [vmem:[%s1 + $0x434] sm:$0xf]
    %v296 = vld [vmem:[%s1 + $0x438] sm:$0xf]
    %v297 = vld [vmem:[%s1 + $0x43c] sm:$0xf]
    %v298 = vld [vmem:[%s1 + $0x440] sm:$0xf]
    %v299 = vld [vmem:[%s1 + $0x444] sm:$0xf]
    %v300 = vld [vmem:[%s1 + $0x448] sm:$0xf]
    %v301 = vld [vmem:[%s1 + $0x44c] sm:$0xf]
    %v302 = vld [vmem:[%s1 + $0x450] sm:$0xf]
    %v303 = vld [vmem:[%s1 + $0x454] sm:$0xf]
    %v304 = vld [vmem:[%s1 + $0x458] sm:$0xf]
    %v305 = vld [vmem:[%s1 + $0x45c] sm:$0xf]
    %v306 = vld [vmem:[%s1 + $0x460] sm:$0xf]
    %v307 = vld [vmem:[%s1 + $0x464] sm:$0xf]
    %v308 = vld [vmem:[%s1 + $0x468] sm:$0xf]
    %v309 = vld [vmem:[%s1 + $0x46c] sm:$0xf]
    %v310 = vld [vmem:[%s1 + $0x470] sm:$0xf]
    %v311 = vld [vmem:[%s1 + $0x474] sm:$0xf]
    %v312 = vld [vmem:[%s1 + $0x478] sm:$0xf]
    %v313 = vld [vmem:[%s1 + $0x47c] sm:$0xf]
    %v314 = vld [vmem:[%s1 + $0x480] sm:$0xf]
    %v315 = vld [vmem:[%s1 + $0x484] sm:$0xf]
    %v316 = vld [vmem:[%s1 + $0x488] sm:$0xf]
    %v317 = vld [vmem:[%s1 + $0x48c] sm:$0xf]
    %v318 = vld [vmem:[%s1 + $0x490] sm:$0xf]
    %v319 = vld [vmem:[%s1 + $0x494] sm:$0xf]
    %v320 = vld [vmem:[%s1 + $0x498] sm:$0xf]
    %v321 = vld [vmem:[%s1 + $0x49c] sm:$0xf]
    %v322 = vld [vmem:[%s1 + $0x4a0] sm:$0xf]
    %v323 = vld [vmem:[%s1 + $0x4a4] sm:$0xf]
    %v324 = vld [vmem:[%s1 + $0x4a8] sm:$0xf]
    %v325 = vld [vmem:[%s1 + $0x4ac] sm:$0xf]
    %v326 = vld [vmem:[%s1 + $0x4b0] sm:$0xf]
    %v327 = vld [vmem:[%s1 + $0x4b4] sm:$0xf]
    %v328 = vld [vmem:[%s1 + $0x4b8] sm:$0xf]
    %v329 = vld [vmem:[%s1 + $0x4bc] sm:$0xf]
    %v330 = vld [vmem:[%s1 + $0x4c0] sm:$0xf]
    %v331 = vld [vmem:[%s1 + $0x4c4] sm:$0xf]
    %v332 = vld [vmem:[%s1 + $0x4c8] sm:$0xf]
    %v333 = vld [vmem:[%s1 + $0x4cc] sm:$0xf]
    %v334 = vld [vmem:[%s1 + $0x4d0] sm:$0xf]
    %v335 = vld [vmem:[%s1 + $0x4d4] sm:$0xf]
    %v336 = vld [vmem:[%s1 + $0x4d8] sm:$0xf]
    %v337 = vld [vmem:[%s1 + $0x4dc] sm:$0xf]
    %v338 = vld [vmem:[%s1 + $0x4e0] sm:$0xf]
    %v339 = vld [vmem:[%s1 + $0x4e4] sm:$0xf]
    %v340 = vld [vmem:[%s1 + $0x4e8] sm:$0xf]
    %v341 = vld [vmem:[%s1 + $0x4ec] sm:$0xf]
    %v342 = vld [vmem:[%s1 + $0x4f0] sm:$0xf]
    %v343 = vld [vmem:[%s1 + $0x4f4] sm:$0xf]
    %v344 = vld [vmem:[%s1 + $0x4f8] sm:$0xf]
    %v345 = vld [vmem:[%s1 + $0x4fc] sm:$0xf]
    %v346 = vld [vmem:[%s1 + $0x500] sm:$0xf]
    %v347 = vld [vmem:[%s1 + $0x504] sm:$0xf]
    %v348 = vld [vmem:[%s1 + $0x508] sm:$0xf]
    %v349 = vld [vmem:[%s1 + $0x50c] sm:$0xf]
    %v350 = vld [vmem:[%s1 + $0x510] sm:$0xf]
    %v351 = vld [vmem:[%s1 + $0x514] sm:$0xf]
    %v352 = vld [vmem:[%s1 + $0x518] sm:$0xf]
    %v353 = vld [vmem:[%s1 + $0x51c] sm:$0xf]
    %v354 = vld [vmem:[%s1 + $0x520] sm:$0xf]
    %v355 = vld [vmem:[%s1 + $0x524] sm:$0xf]
    %v356 = vld [vmem:[%s1 + $0x528] sm:$0xf]
    %v357 = vld [vmem:[%s1 + $0x52c] sm:$0xf]
    %v358 = vld [vmem:[%s1 + $0x530] sm:$0xf]
    %v359 = vld [vmem:[%s1 + $0x534] sm:$0xf]
    %v360 = vld [vmem:[%s1 + $0x538] sm:$0xf]
    %v361 = vld [vmem:[%s1 + $0x53c] sm:$0xf]
    %v362 = vld [vmem:[%s1 + $0x540] sm:$0xf]
    %v363 = vld [vmem:[%s1 + $0x544] sm:$0xf]
    %v364 = vld [vmem:[%s1 + $0x548] sm:$0xf]
    %v365 = vld [vmem:[%s1 + $0x54c] sm:$0xf]
    %v366 = vld [vmem:[%s1 + $0x550] sm:$0xf]
    %v367 = vld [vmem:[%s1 + $0x554] sm:$0xf]
    %v368 = vld [vmem:[%s1 + $0x558] sm:$0xf]
    %v369 = vld [vmem:[%s1 + $0x55c] sm:$0xf]
    %v370 = vld [vmem:[%s1 + $0x560] sm:$0xf]
    %v371 = vld [vmem:[%s1 + $0x564] sm:$0xf]
    %v372 = vld [vmem:[%s1 + $0x568] sm:$0xf]
    %v373 = vld [vmem:[%s1 + $0x56c] sm:$0xf]
    %v374 = vld [vmem:[%s1 + $0x570] sm:$0xf]
    %v375 = vld [vmem:[%s1 + $0x574] sm:$0xf]
    %v376 = vld [vmem:[%s1 + $0x578] sm:$0xf]
    %v377 = vld [vmem:[%s1 + $0x57c] sm:$0xf]
    %v378 = vld [vmem:[%s1 + $0x580] sm:$0xf]
    %v379 = vld [vmem:[%s1 + $0x584] sm:$0xf]
    %v380 = vld [vmem:[%s1 + $0x588] sm:$0xf]
    %v381 = vld [vmem:[%s1 + $0x58c] sm:$0xf]
    %v382 = vld [vmem:[%s1 + $0x590] sm:$0xf]
    %v383 = vld [vmem:[%s1 + $0x594] sm:$0xf]
    %v384 = vld [vmem:[%s1 + $0x598] sm:$0xf]
    %v385 = vld [vmem:[%s1 + $0x59c] sm:$0xf]
    %v386 = vld [vmem:[%s1 + $0x5a0] sm:$0xf]
    %v387 = vld [vmem:[%s1 + $0x5a4] sm:$0xf]
    %v388 = vld [vmem:[%s1 + $0x5a8] sm:$0xf]
    %v389 = vld [vmem:[%s1 + $0x5ac] sm:$0xf]
    %v390 = vld [vmem:[%s1 + $0x5b0] sm:$0xf]
    %v391 = vld [vmem:[%s1 + $0x5b4] sm:$0xf]
    %v392 = vld [vmem:[%s1 + $0x5b8] sm:$0xf]
    %v393 = vld [vmem:[%s1 + $0x5bc] sm:$0xf]
    %v394 = vld [vmem:[%s1 + $0x5c0] sm:$0xf]
    %v395 = vld [vmem:[%s1 + $0x5c4] sm:$0xf]
    %v396 = vld [vmem:[%s1 + $0x5c8] sm:$0xf]
    %v397 = vld [vmem:[%s1 + $0x5cc] sm:$0xf]
    %v398 = vld [vmem:[%s1 + $0x5d0] sm:$0xf]
    %v399 = vld [vmem:[%s1 + $0x5d4] sm:$0xf]
    %v400 = vld [vmem:[%s1 + $0x5d8] sm:$0xf]
    %v401 = vld [vmem:[%s1 + $0x5dc] sm:$0xf]
    %v402 = vld [vmem:[%s1 + $0x5e0] sm:$0xf]
    %v403 = vld [vmem:[%s1 + $0x5e4] sm:$0xf]
    %v404 = vld [vmem:[%s1 + $0x5e8] sm:$0xf]
    %v405 = vld [vmem:[%s1 + $0x5ec] sm:$0xf]
    %v406 = vld [vmem:[%s1 + $0x5f0] sm:$0xf]
    %v407 = vld [vmem:[%s1 + $0x5f4] sm:$0xf]
    %v408 = vld [vmem:[%s1 + $0x5f8] sm:$0xf]
    %v409 = vld [vmem:[%s1 + $0x5fc] sm:$0xf]
    %v410 = vld [vmem:[%s1 + $0x600] sm:$0xf]
    %v411 = vld [vmem:[%s1 + $0x604] sm:$0xf]
    %v412 = vld [vmem:[%s1 + $0x608] sm:$0xf]
    %v413 = vld [vmem:[%s1 + $0x60c] sm:$0xf]
    %v414 = vld [vmem:[%s1 + $0x610] sm:$0xf]
    %v415 = vld [vmem:[%s1 + $0x614] sm:$0xf]
    %v416 = vld [vmem:[%s1 + $0x618] sm:$0xf]
    %v417 = vld [vmem:[%s1 + $0x61c] sm:$0xf]
    %v418 = vld [vmem:[%s2] sm:$0x1]
    %v420 = vlaneseq
    %v421 = vshrl.u32 %v420, 7
    %v422 = vsub.s32 0, %v421
    %v423 = vrot.slane %v418, %v422
    %v429 = vcombine.high %v22, %v22
    %v431 = vunpack.c.l.s4 1966171168
    %v432 = vunpack.c.0.s8 %v431
    %v433 = vlaneseq
    %v434 = vshrl.u32 %v433, 7
    %v435 = vsub.s32 %v432, %v434
    %v436 = vrot.slane %v22, %v435
    %v438 = vunpack.c.l.s4 1966171168
    %v439 = vunpack.c.0.s8 %v438
    %v440 = vlaneseq
    %v441 = vshrl.u32 %v440, 7
    %v442 = vsub.s32 %v439, %v441
    %v443 = vrot.slane %v429, %v442
    %v444 = vcombine.high %v436, %v436
    %v445 = vcombine.high %v443, %v443
    %v447 = vunpack.c.l.s4 1966171168
    %v448 = vunpack.c.0.s8 %v447
    %v449 = vlaneseq
    %v450 = vshrl.u32 %v449, 7
    %v451 = vsub.s32 %v448, %v450
    %v452 = vrot.slane %v436, %v451
    %v454 = vunpack.c.l.s4 1966171168
    %v455 = vunpack.c.0.s8 %v454
    %v456 = vlaneseq
    %v457 = vshrl.u32 %v456, 7
    %v458 = vsub.s32 %v455, %v457
    %v459 = vrot.slane %v443, %v458
    %v461 = vunpack.c.l.s4 1966171168
    %v462 = vunpack.c.0.s8 %v461
    %v463 = vlaneseq
    %v464 = vshrl.u32 %v463, 7
    %v465 = vsub.s32 %v462, %v464
    %v466 = vrot.slane %v444, %v465
    %v468 = vunpack.c.l.s4 1966171168
    %v469 = vunpack.c.0.s8 %v468
    %v470 = vlaneseq
    %v471 = vshrl.u32 %v470, 7
    %v472 = vsub.s32 %v469, %v471
    %v473 = vrot.slane %v445, %v472
    %v474 = vcombine.high %v452, %v452
    %v475 = vcombine.high %v459, %v459
    %v476 = vcombine.high %v466, %v466
    %v477 = vcombine.high %v473, %v473
    %v478 = vcombine.high %v23, %v23
    %v480 = vunpack.c.l.s4 1966171168
    %v481 = vunpack.c.0.s8 %v480
    %v482 = vlaneseq
    %v483 = vshrl.u32 %v482, 7
    %v484 = vsub.s32 %v481, %v483
    %v485 = vrot.slane %v23, %v484
    %v487 = vunpack.c.l.s4 1966171168
    %v488 = vunpack.c.0.s8 %v487
    %v489 = vlaneseq
    %v490 = vshrl.u32 %v489, 7
    %v491 = vsub.s32 %v488, %v490
    %v492 = vrot.slane %v478, %v491
    %v493 = vcombine.high %v485, %v485
    %v494 = vcombine.high %v492, %v492
    %v496 = vunpack.c.l.s4 1966171168
    %v497 = vunpack.c.0.s8 %v496
    %v498 = vlaneseq
    %v499 = vshrl.u32 %v498, 7
    %v500 = vsub.s32 %v497, %v499
    %v501 = vrot.slane %v485, %v500
    %v503 = vunpack.c.l.s4 1966171168
    %v504 = vunpack.c.0.s8 %v503
    %v505 = vlaneseq
    %v506 = vshrl.u32 %v505, 7
    %v507 = vsub.s32 %v504, %v506
    %v508 = vrot.slane %v492, %v507
    %v510 = vunpack.c.l.s4 1966171168
    %v511 = vunpack.c.0.s8 %v510
    %v512 = vlaneseq
    %v513 = vshrl.u32 %v512, 7
    %v514 = vsub.s32 %v511, %v513
    %v515 = vrot.slane %v493, %v514
    %v517 = vunpack.c.l.s4 1966171168
    %v518 = vunpack.c.0.s8 %v517
    %v519 = vlaneseq
    %v520 = vshrl.u32 %v519, 7
    %v521 = vsub.s32 %v518, %v520
    %v522 = vrot.slane %v494, %v521
    %v523 = vcombine.high %v501, %v501
    %v524 = vcombine.high %v508, %v508
    %v525 = vcombine.high %v515, %v515
    %v526 = vcombine.high %v522, %v522
    %v527 = vcombine.high %v24, %v24
    %v529 = vunpack.c.l.s4 1966171168
    %v530 = vunpack.c.0.s8 %v529
    %v531 = vlaneseq
    %v532 = vshrl.u32 %v531, 7
    %v533 = vsub.s32 %v530, %v532
    %v534 = vrot.slane %v24, %v533
    %v536 = vunpack.c.l.s4 1966171168
    %v537 = vunpack.c.0.s8 %v536
    %v538 = vlaneseq
    %v539 = vshrl.u32 %v538, 7
    %v540 = vsub.s32 %v537, %v539
    %v541 = vrot.slane %v527, %v540
    %v542 = vcombine.high %v534, %v534
    %v543 = vcombine.high %v541, %v541
    %v545 = vunpack.c.l.s4 1966171168
    %v546 = vunpack.c.0.s8 %v545
    %v547 = vlaneseq
    %v548 = vshrl.u32 %v547, 7
    %v549 = vsub.s32 %v546, %v548
    %v550 = vrot.slane %v534, %v549
    %v552 = vunpack.c.l.s4 1966171168
    %v553 = vunpack.c.0.s8 %v552
    %v554 = vlaneseq
    %v555 = vshrl.u32 %v554, 7
    %v556 = vsub.s32 %v553, %v555
    %v557 = vrot.slane %v541, %v556
    %v559 = vunpack.c.l.s4 1966171168
    %v560 = vunpack.c.0.s8 %v559
    %v561 = vlaneseq
    %v562 = vshrl.u32 %v561, 7
    %v563 = vsub.s32 %v560, %v562
    %v564 = vrot.slane %v542, %v563
    %v566 = vunpack.c.l.s4 1966171168
    %v567 = vunpack.c.0.s8 %v566
    %v568 = vlaneseq
    %v569 = vshrl.u32 %v568, 7
    %v570 = vsub.s32 %v567, %v569
    %v571 = vrot.slane %v543, %v570
    %v572 = vcombine.high %v550, %v550
    %v573 = vcombine.high %v557, %v557
    %v574 = vcombine.high %v564, %v564
    %v575 = vcombine.high %v571, %v571
    %v577 = vunpack.c.l.s4 1966171168
    %v578 = vunpack.c.0.s8 %v577
    %v579 = vlaneseq
    %v580 = vshrl.u32 %v579, 7
    %v581 = vsub.s32 %v578, %v580
    %v582 = vrot.slane %v25, %v581
    %v584 = vunpack.c.l.s4 1966171168
    %v585 = vunpack.c.0.s8 %v584
    %v586 = vlaneseq
    %v587 = vshrl.u32 %v586, 7
    %v588 = vsub.s32 %v585, %v587
    %v589 = vrot.slane %v582, %v588
    %v1006 = vunpack.c.l.b16 %v26
    %v1007 = vunpack.c.l.b16 %v27
    %v1008 = vunpack.c.l.b16 %v28
    %v1009 = vunpack.c.l.b16 %v29
    %v1010 = vunpack.c.l.b16 %v30
    %v1011 = vunpack.c.l.b16 %v31
    %v1012 = vunpack.c.l.b16 %v32
    %v1013 = vunpack.c.l.b16 %v33
    %v1014 = vunpack.c.l.b16 %v34
    %v1015 = vunpack.c.l.b16 %v35
    %v1016 = vunpack.c.l.b16 %v36
    %v1017 = vunpack.c.l.b16 %v37
    %v1018 = vunpack.c.l.b16 %v38
    %v1019 = vunpack.c.l.b16 %v39
    %v1020 = vunpack.c.l.b16 %v40
    %v1021 = vunpack.c.l.b16 %v41
    %v1022 = vunpack.c.l.b16 %v42
    %v1023 = vunpack.c.l.b16 %v43
    %v1024 = vunpack.c.l.b16 %v44
    %v1025 = vunpack.c.l.b16 %v45
    %v1026 = vunpack.c.l.b16 %v46
    %v1027 = vunpack.c.l.b16 %v47
    %v1028 = vunpack.c.l.b16 %v48
    %v1029 = vunpack.c.l.b16 %v49
    %v1030 = vunpack.c.l.b16 %v50
    %v1031 = vunpack.c.l.b16 %v51
    %v1032 = vunpack.c.l.b16 %v52
    %v1033 = vunpack.c.l.b16 %v53
    %v1034 = vunpack.c.l.b16 %v54
    %v1035 = vunpack.c.l.b16 %v55
    %v1036 = vunpack.c.l.b16 %v56
    %v1037 = vunpack.c.l.b16 %v57
    %v1038 = vunpack.c.l.b16 %v58
    %v1039 = vunpack.c.l.b16 %v59
    %v1040 = vunpack.c.l.b16 %v60
    %v1041 = vunpack.c.l.b16 %v61
    %v1042 = vunpack.c.l.b16 %v62
    %v1043 = vunpack.c.l.b16 %v63
    %v1044 = vunpack.c.l.b16 %v64
    %v1045 = vunpack.c.l.b16 %v65
    %v1046 = vunpack.c.l.b16 %v66
    %v1047 = vunpack.c.l.b16 %v67
    %v1048 = vunpack.c.l.b16 %v68
    %v1049 = vunpack.c.l.b16 %v69
    %v1050 = vunpack.c.l.b16 %v70
    %v1051 = vunpack.c.l.b16 %v71
    %v1052 = vunpack.c.l.b16 %v72
    %v1053 = vunpack.c.l.b16 %v73
    %v1054 = vunpack.c.l.b16 %v74
    %v1055 = vunpack.c.l.b16 %v75
    %v1056 = vunpack.c.l.b16 %v76
    %v1057 = vunpack.c.l.b16 %v77
    %v1058 = vunpack.c.l.b16 %v78
    %v1059 = vunpack.c.l.b16 %v79
    %v1060 = vunpack.c.l.b16 %v80
    %v1061 = vunpack.c.l.b16 %v81
    %v1062 = vunpack.c.l.b16 %v82
    %v1063 = vunpack.c.l.b16 %v83
    %v1064 = vunpack.c.l.b16 %v84
    %v1065 = vunpack.c.l.b16 %v85
    %v1066 = vunpack.c.l.b16 %v86
    %v1067 = vunpack.c.l.b16 %v87
    %v1068 = vunpack.c.l.b16 %v88
    %v1069 = vunpack.c.l.b16 %v89
    %v1070 = vunpack.c.l.b16 %v90
    %v1071 = vunpack.c.l.b16 %v91
    %v1072 = vunpack.c.l.b16 %v92
    %v1073 = vunpack.c.l.b16 %v93
    %v1074 = vunpack.c.l.b16 %v94
    %v1075 = vunpack.c.l.b16 %v95
    %v1076 = vunpack.c.l.b16 %v96
    %v1077 = vunpack.c.l.b16 %v97
    %v1078 = vunpack.c.l.b16 %v98
    %v1079 = vunpack.c.l.b16 %v99
    %v1080 = vunpack.c.l.b16 %v100
    %v1081 = vunpack.c.l.b16 %v101
    %v1082 = vunpack.c.l.b16 %v102
    %v1083 = vunpack.c.l.b16 %v103
    %v1084 = vunpack.c.l.b16 %v104
    %v1085 = vunpack.c.l.b16 %v105
    %v1086 = vunpack.c.l.b16 %v106
    %v1087 = vunpack.c.l.b16 %v107
    %v1088 = vunpack.c.l.b16 %v108
    %v1089 = vunpack.c.l.b16 %v109
    %v1090 = vunpack.c.l.b16 %v110
    %v1091 = vunpack.c.l.b16 %v111
    %v1092 = vunpack.c.l.b16 %v112
    %v1093 = vunpack.c.l.b16 %v113
    %v1094 = vunpack.c.l.b16 %v114
    %v1095 = vunpack.c.l.b16 %v115
    %v1096 = vunpack.c.l.b16 %v116
    %v1097 = vunpack.c.l.b16 %v117
    %v1098 = vunpack.c.l.b16 %v118
    %v1099 = vunpack.c.l.b16 %v119
    %v1100 = vunpack.c.l.b16 %v120
    %v1101 = vunpack.c.l.b16 %v121
    %v1102 = vunpack.c.l.b16 %v122
    %v1103 = vunpack.c.l.b16 %v123
    %v1104 = vunpack.c.l.b16 %v124
    %v1105 = vunpack.c.l.b16 %v125
    %v1106 = vunpack.c.l.b16 %v126
    %v1107 = vunpack.c.l.b16 %v127
    %v1108 = vunpack.c.l.b16 %v128
    %v1109 = vunpack.c.l.b16 %v129
    %v1110 = vunpack.c.l.b16 %v130
    %v1111 = vunpack.c.l.b16 %v131
    %v1112 = vunpack.c.l.b16 %v132
    %v1113 = vunpack.c.l.b16 %v133
    %v1114 = vunpack.c.l.b16 %v134
    %v1115 = vunpack.c.l.b16 %v135
    %v1116 = vunpack.c.l.b16 %v136
    %v1117 = vunpack.c.l.b16 %v137
    %v1118 = vunpack.c.l.b16 %v138
    %v1119 = vunpack.c.l.b16 %v139
    %v1120 = vunpack.c.l.b16 %v140
    %v1121 = vunpack.c.l.b16 %v141
    %v1122 = vunpack.c.l.b16 %v142
    %v1123 = vunpack.c.l.b16 %v143
    %v1124 = vunpack.c.l.b16 %v144
    %v1125 = vunpack.c.l.b16 %v145
    %v1126 = vunpack.c.l.b16 %v146
    %v1127 = vunpack.c.l.b16 %v147
    %v1128 = vunpack.c.l.b16 %v148
    %v1129 = vunpack.c.l.b16 %v149
    %v1130 = vunpack.c.l.b16 %v150
    %v1131 = vunpack.c.l.b16 %v151
    %v1132 = vunpack.c.l.b16 %v152
    %v1133 = vunpack.c.l.b16 %v153
    %v1134 = vunpack.c.l.b16 %v154
    %v1135 = vunpack.c.l.b16 %v155
    %v1136 = vunpack.c.l.b16 %v156
    %v1137 = vunpack.c.l.b16 %v157
    %v1138 = vunpack.c.l.b16 %v158
    %v1139 = vunpack.c.l.b16 %v159
    %v1140 = vunpack.c.l.b16 %v160
    %v1141 = vunpack.c.l.b16 %v161
    %v1142 = vunpack.c.l.b16 %v162
    %v1143 = vunpack.c.l.b16 %v163
    %v1144 = vunpack.c.l.b16 %v164
    %v1145 = vunpack.c.l.b16 %v165
    %v1146 = vunpack.c.l.b16 %v166
    %v1147 = vunpack.c.l.b16 %v167
    %v1148 = vunpack.c.l.b16 %v168
    %v1149 = vunpack.c.l.b16 %v169
    %v1150 = vunpack.c.l.b16 %v170
    %v1151 = vunpack.c.l.b16 %v171
    %v1152 = vunpack.c.l.b16 %v172
    %v1153 = vunpack.c.l.b16 %v173
    %v1154 = vunpack.c.l.b16 %v174
    %v1155 = vunpack.c.l.b16 %v175
    %v1156 = vunpack.c.l.b16 %v176
    %v1157 = vunpack.c.l.b16 %v177
    %v1158 = vunpack.c.l.b16 %v178
    %v1159 = vunpack.c.l.b16 %v179
    %v1160 = vunpack.c.l.b16 %v180
    %v1161 = vunpack.c.l.b16 %v181
    %v1162 = vunpack.c.l.b16 %v182
    %v1163 = vunpack.c.l.b16 %v183
    %v1164 = vunpack.c.l.b16 %v184
    %v1165 = vunpack.c.l.b16 %v185
    %v1166 = vunpack.c.l.b16 %v186
    %v1167 = vunpack.c.l.b16 %v187
    %v1168 = vunpack.c.l.b16 %v188
    %v1169 = vunpack.c.l.b16 %v189
    %v1170 = vunpack.c.l.b16 %v190
    %v1171 = vunpack.c.l.b16 %v191
    %v1172 = vunpack.c.l.b16 %v192
    %v1173 = vunpack.c.l.b16 %v193
    %v1174 = vunpack.c.l.b16 %v194
    %v1175 = vunpack.c.l.b16 %v195
    %v1176 = vunpack.c.l.b16 %v196
    %v1177 = vunpack.c.l.b16 %v197
    %v1178 = vunpack.c.l.b16 %v198
    %v1179 = vunpack.c.l.b16 %v199
    %v1180 = vunpack.c.l.b16 %v200
    %v1181 = vunpack.c.l.b16 %v201
    %v1182 = vunpack.c.l.b16 %v202
    %v1183 = vunpack.c.l.b16 %v203
    %v1184 = vunpack.c.l.b16 %v204
    %v1185 = vunpack.c.l.b16 %v205
    %v1186 = vunpack.c.l.b16 %v206
    %v1187 = vunpack.c.l.b16 %v207
    %v1188 = vunpack.c.l.b16 %v208
    %v1189 = vunpack.c.l.b16 %v209
    %v1190 = vunpack.c.l.b16 %v210
    %v1191 = vunpack.c.l.b16 %v211
    %v1192 = vunpack.c.l.b16 %v212
    %v1193 = vunpack.c.l.b16 %v213
    %v1194 = vunpack.c.l.b16 %v214
    %v1195 = vunpack.c.l.b16 %v215
    %v1196 = vunpack.c.l.b16 %v216
    %v1197 = vunpack.c.l.b16 %v217
    %v1198 = vunpack.c.l.b16 %v218
    %v1199 = vunpack.c.l.b16 %v219
    %v1200 = vunpack.c.l.b16 %v220
    %v1201 = vunpack.c.l.b16 %v221
    %v1202 = vunpack.c.l.b16 %v222
    %v1203 = vunpack.c.l.b16 %v223
    %v1204 = vunpack.c.l.b16 %v224
    %v1205 = vunpack.c.l.b16 %v225
    %v1206 = vunpack.c.l.b16 %v226
    %v1207 = vunpack.c.l.b16 %v227
    %v1208 = vunpack.c.l.b16 %v228
    %v1209 = vunpack.c.l.b16 %v229
    %v1210 = vunpack.c.l.b16 %v230
    %v1211 = vunpack.c.l.b16 %v231
    %v1212 = vunpack.c.l.b16 %v232
    %v1213 = vunpack.c.l.b16 %v233
    %v1214 = vunpack.c.l.b16 %v234
    %v1215 = vunpack.c.l.b16 %v235
    %v1216 = vunpack.c.l.b16 %v236
    %v1217 = vunpack.c.l.b16 %v237
    %v1218 = vunpack.c.l.b16 %v238
    %v1219 = vunpack.c.l.b16 %v239
    %v1220 = vunpack.c.l.b16 %v240
    %v1221 = vunpack.c.l.b16 %v241
    %v1222 = vunpack.c.l.b16 %v242
    %v1223 = vunpack.c.l.b16 %v243
    %v1224 = vunpack.c.l.b16 %v244
    %v1225 = vunpack.c.l.b16 %v245
    %v1226 = vunpack.c.l.b16 %v246
    %v1227 = vunpack.c.l.b16 %v247
    %v1228 = vunpack.c.l.b16 %v248
    %v1229 = vunpack.c.l.b16 %v249
    %v1230 = vunpack.c.l.b16 %v250
    %v1231 = vunpack.c.l.b16 %v251
    %v1232 = vunpack.c.l.b16 %v252
    %v1233 = vunpack.c.l.b16 %v253
    %v1234 = vunpack.c.l.b16 %v254
    %v1235 = vunpack.c.l.b16 %v255
    %v1236 = vunpack.c.l.b16 %v256
    %v1237 = vunpack.c.l.b16 %v257
    %v1238 = vunpack.c.l.b16 %v258
    %v1239 = vunpack.c.l.b16 %v259
    %v1240 = vunpack.c.l.b16 %v260
    %v1241 = vunpack.c.l.b16 %v261
    %v1242 = vunpack.c.l.b16 %v262
    %v1243 = vunpack.c.l.b16 %v263
    %v1244 = vunpack.c.l.b16 %v264
    %v1245 = vunpack.c.l.b16 %v265
    %v1246 = vunpack.c.l.b16 %v266
    %v1247 = vunpack.c.l.b16 %v267
    %v1248 = vunpack.c.l.b16 %v268
    %v1249 = vunpack.c.l.b16 %v269
    %v1250 = vunpack.c.l.b16 %v270
    %v1251 = vunpack.c.l.b16 %v271
    %v1252 = vunpack.c.l.b16 %v272
    %v1253 = vunpack.c.l.b16 %v273
    %v1254 = vunpack.c.l.b16 %v274
    %v1255 = vunpack.c.l.b16 %v275
    %v1256 = vunpack.c.l.b16 %v276
    %v1257 = vunpack.c.l.b16 %v277
    %v1258 = vunpack.c.l.b16 %v278
    %v1259 = vunpack.c.l.b16 %v279
    %v1260 = vunpack.c.l.b16 %v280
    %v1261 = vunpack.c.l.b16 %v281
    %v1262 = vunpack.c.l.b16 %v282
    %v1263 = vunpack.c.l.b16 %v283
    %v1264 = vunpack.c.l.b16 %v284
    %v1265 = vunpack.c.l.b16 %v285
    %v1266 = vunpack.c.l.b16 %v286
    %v1267 = vunpack.c.l.b16 %v287
    %v1268 = vunpack.c.l.b16 %v288
    %v1269 = vunpack.c.l.b16 %v289
    %v1270 = vunpack.c.l.b16 %v290
    %v1271 = vunpack.c.l.b16 %v291
    %v1272 = vunpack.c.l.b16 %v292
    %v1273 = vunpack.c.l.b16 %v293
    %v1274 = vunpack.c.l.b16 %v294
    %v1275 = vunpack.c.l.b16 %v295
    %v1276 = vunpack.c.l.b16 %v296
    %v1277 = vunpack.c.l.b16 %v297
    %v1278 = vunpack.c.l.b16 %v298
    %v1279 = vunpack.c.l.b16 %v299
    %v1280 = vunpack.c.l.b16 %v300
    %v1281 = vunpack.c.l.b16 %v301
    %v1282 = vunpack.c.l.b16 %v302
    %v1283 = vunpack.c.l.b16 %v303
    %v1284 = vunpack.c.l.b16 %v304
    %v1285 = vunpack.c.l.b16 %v305
    %v1286 = vunpack.c.l.b16 %v306
    %v1287 = vunpack.c.l.b16 %v307
    %v1288 = vunpack.c.l.b16 %v308
    %v1289 = vunpack.c.l.b16 %v309
    %v1290 = vunpack.c.l.b16 %v310
    %v1291 = vunpack.c.l.b16 %v311
    %v1292 = vunpack.c.l.b16 %v312
    %v1293 = vunpack.c.l.b16 %v313
    %v1294 = vunpack.c.l.b16 %v314
    %v1295 = vunpack.c.l.b16 %v315
    %v1296 = vunpack.c.l.b16 %v316
    %v1297 = vunpack.c.l.b16 %v317
    %v1298 = vunpack.c.l.b16 %v318
    %v1299 = vunpack.c.l.b16 %v319
    %v1300 = vunpack.c.l.b16 %v320
    %v1301 = vunpack.c.l.b16 %v321
    %v1302 = vunpack.c.l.b16 %v322
    %v1303 = vunpack.c.l.b16 %v323
    %v1304 = vunpack.c.l.b16 %v324
    %v1305 = vunpack.c.l.b16 %v325
    %v1306 = vunpack.c.l.b16 %v326
    %v1307 = vunpack.c.l.b16 %v327
    %v1308 = vunpack.c.l.b16 %v328
    %v1309 = vunpack.c.l.b16 %v329
    %v1310 = vunpack.c.l.b16 %v330
    %v1311 = vunpack.c.l.b16 %v331
    %v1312 = vunpack.c.l.b16 %v332
    %v1313 = vunpack.c.l.b16 %v333
    %v1314 = vunpack.c.l.b16 %v334
    %v1315 = vunpack.c.l.b16 %v335
    %v1316 = vunpack.c.l.b16 %v336
    %v1317 = vunpack.c.l.b16 %v337
    %v1318 = vunpack.c.l.b16 %v338
    %v1319 = vunpack.c.l.b16 %v339
    %v1320 = vunpack.c.l.b16 %v340
    %v1321 = vunpack.c.l.b16 %v341
    %v1322 = vunpack.c.l.b16 %v342
    %v1323 = vunpack.c.l.b16 %v343
    %v1324 = vunpack.c.l.b16 %v344
    %v1325 = vunpack.c.l.b16 %v345
    %v1326 = vunpack.c.l.b16 %v346
    %v1327 = vunpack.c.l.b16 %v347
    %v1328 = vunpack.c.l.b16 %v348
    %v1329 = vunpack.c.l.b16 %v349
    %v1330 = vunpack.c.l.b16 %v350
    %v1331 = vunpack.c.l.b16 %v351
    %v1332 = vunpack.c.l.b16 %v352
    %v1333 = vunpack.c.l.b16 %v353
    %v1334 = vunpack.c.l.b16 %v354
    %v1335 = vunpack.c.l.b16 %v355
    %v1336 = vunpack.c.l.b16 %v356
    %v1337 = vunpack.c.l.b16 %v357
    %v1338 = vunpack.c.l.b16 %v358
    %v1339 = vunpack.c.l.b16 %v359
    %v1340 = vunpack.c.l.b16 %v360
    %v1341 = vunpack.c.l.b16 %v361
    %v1342 = vunpack.c.l.b16 %v362
    %v1343 = vunpack.c.l.b16 %v363
    %v1344 = vunpack.c.l.b16 %v364
    %v1345 = vunpack.c.l.b16 %v365
    %v1346 = vunpack.c.l.b16 %v366
    %v1347 = vunpack.c.l.b16 %v367
    %v1348 = vunpack.c.l.b16 %v368
    %v1349 = vunpack.c.l.b16 %v369
    %v1350 = vunpack.c.l.b16 %v370
    %v1351 = vunpack.c.l.b16 %v371
    %v1352 = vunpack.c.l.b16 %v372
    %v1353 = vunpack.c.l.b16 %v373
    %v1354 = vunpack.c.l.b16 %v374
    %v1355 = vunpack.c.l.b16 %v375
    %v1356 = vunpack.c.l.b16 %v376
    %v1357 = vunpack.c.l.b16 %v377
    %v1358 = vunpack.c.l.b16 %v378
    %v1359 = vunpack.c.l.b16 %v379
    %v1360 = vunpack.c.l.b16 %v380
    %v1361 = vunpack.c.l.b16 %v381
    %v1362 = vunpack.c.l.b16 %v382
    %v1363 = vunpack.c.l.b16 %v383
    %v1364 = vunpack.c.l.b16 %v384
    %v1365 = vunpack.c.l.b16 %v385
    %v1366 = vunpack.c.l.b16 %v386
    %v1367 = vunpack.c.l.b16 %v387
    %v1368 = vunpack.c.l.b16 %v388
    %v1369 = vunpack.c.l.b16 %v389
    %v1370 = vunpack.c.l.b16 %v390
    %v1371 = vunpack.c.l.b16 %v391
    %v1372 = vunpack.c.l.b16 %v392
    %v1373 = vunpack.c.l.b16 %v393
    %v1374 = vunpack.c.l.b16 %v394
    %v1375 = vunpack.c.l.b16 %v395
    %v1376 = vunpack.c.l.b16 %v396
    %v1377 = vunpack.c.l.b16 %v397
    %v1378 = vunpack.c.l.b16 %v398
    %v1379 = vunpack.c.l.b16 %v399
    %v1380 = vunpack.c.l.b16 %v400
    %v1381 = vunpack.c.l.b16 %v401
    %v1382 = vunpack.c.l.b16 %v402
    %v1383 = vunpack.c.l.b16 %v403
    %v1384 = vunpack.c.l.b16 %v404
    %v1385 = vunpack.c.l.b16 %v405
    %v1386 = vunpack.c.l.b16 %v406
    %v1387 = vunpack.c.l.b16 %v407
    %v1388 = vunpack.c.l.b16 %v408
    %v1389 = vunpack.c.l.b16 %v409
    %v1390 = vunpack.c.l.b16 %v410
    %v1391 = vunpack.c.l.b16 %v411
    %v1392 = vunpack.c.l.b16 %v412
    %v1393 = vunpack.c.l.b16 %v413
    %v1394 = vunpack.c.l.b16 %v414
    %v1395 = vunpack.c.l.b16 %v415
    %v1396 = vunpack.c.l.b16 %v416
    %v1397 = vunpack.c.l.b16 %v417
    %v1398 = vpack.c.b16 %v1007, %v1006
    %v1399 = vpack.c.b16 %v1009, %v1008
    %v1400 = vpack.c.b16 %v1011, %v1010
    %v1401 = vpack.c.b16 %v1013, %v1012
    %v1402 = vpack.c.b16 %v1015, %v1014
    %v1403 = vpack.c.b16 %v1017, %v1016
    %v1404 = vpack.c.b16 %v1019, %v1018
    %v1405 = vpack.c.b16 %v1021, %v1020
    %v1406 = vpack.c.b16 %v1023, %v1022
    %v1407 = vpack.c.b16 %v1025, %v1024
    %v1408 = vpack.c.b16 %v1027, %v1026
    %v1409 = vpack.c.b16 %v1029, %v1028
    %v1410 = vpack.c.b16 %v1031, %v1030
    %v1411 = vpack.c.b16 %v1033, %v1032
    %v1412 = vpack.c.b16 %v1035, %v1034
    %v1413 = vpack.c.b16 %v1037, %v1036
    %v1414 = vpack.c.b16 %v1039, %v1038
    %v1415 = vpack.c.b16 %v1041, %v1040
    %v1416 = vpack.c.b16 %v1043, %v1042
    %v1417 = vpack.c.b16 %v1045, %v1044
    %v1418 = vpack.c.b16 %v1047, %v1046
    %v1419 = vpack.c.b16 %v1049, %v1048
    %v1420 = vpack.c.b16 %v1051, %v1050
    %v1421 = vpack.c.b16 %v1053, %v1052
    %v1422 = vpack.c.b16 %v1055, %v1054
    %v1423 = vpack.c.b16 %v1057, %v1056
    %v1424 = vpack.c.b16 %v1059, %v1058
    %v1425 = vpack.c.b16 %v1061, %v1060
    %v1426 = vpack.c.b16 %v1063, %v1062
    %v1427 = vpack.c.b16 %v1065, %v1064
    %v1428 = vpack.c.b16 %v1067, %v1066
    %v1429 = vpack.c.b16 %v1069, %v1068
    %v1430 = vpack.c.b16 %v1071, %v1070
    %v1431 = vpack.c.b16 %v1073, %v1072
    %v1432 = vpack.c.b16 %v1075, %v1074
    %v1433 = vpack.c.b16 %v1077, %v1076
    %v1434 = vpack.c.b16 %v1079, %v1078
    %v1435 = vpack.c.b16 %v1081, %v1080
    %v1436 = vpack.c.b16 %v1083, %v1082
    %v1437 = vpack.c.b16 %v1085, %v1084
    %v1438 = vpack.c.b16 %v1087, %v1086
    %v1439 = vpack.c.b16 %v1089, %v1088
    %v1440 = vpack.c.b16 %v1091, %v1090
    %v1441 = vpack.c.b16 %v1093, %v1092
    %v1442 = vpack.c.b16 %v1095, %v1094
    %v1443 = vpack.c.b16 %v1097, %v1096
    %v1444 = vpack.c.b16 %v1099, %v1098
    %v1445 = vpack.c.b16 %v1101, %v1100
    %v1446 = vpack.c.b16 %v1103, %v1102
    %v1447 = vpack.c.b16 %v1105, %v1104
    %v1448 = vpack.c.b16 %v1107, %v1106
    %v1449 = vpack.c.b16 %v1109, %v1108
    %v1450 = vpack.c.b16 %v1111, %v1110
    %v1451 = vpack.c.b16 %v1113, %v1112
    %v1452 = vpack.c.b16 %v1115, %v1114
    %v1453 = vpack.c.b16 %v1117, %v1116
    %v1454 = vpack.c.b16 %v1119, %v1118
    %v1455 = vpack.c.b16 %v1121, %v1120
    %v1456 = vpack.c.b16 %v1123, %v1122
    %v1457 = vpack.c.b16 %v1125, %v1124
    %v1458 = vpack.c.b16 %v1127, %v1126
    %v1459 = vpack.c.b16 %v1129, %v1128
    %v1460 = vpack.c.b16 %v1131, %v1130
    %v1461 = vpack.c.b16 %v1133, %v1132
    %v1462 = vpack.c.b16 %v1135, %v1134
    %v1463 = vpack.c.b16 %v1137, %v1136
    %v1464 = vpack.c.b16 %v1139, %v1138
    %v1465 = vpack.c.b16 %v1141, %v1140
    %v1466 = vpack.c.b16 %v1143, %v1142
    %v1467 = vpack.c.b16 %v1145, %v1144
    %v1468 = vpack.c.b16 %v1147, %v1146
    %v1469 = vpack.c.b16 %v1149, %v1148
    %v1470 = vpack.c.b16 %v1151, %v1150
    %v1471 = vpack.c.b16 %v1153, %v1152
    %v1472 = vpack.c.b16 %v1155, %v1154
    %v1473 = vpack.c.b16 %v1157, %v1156
    %v1474 = vpack.c.b16 %v1159, %v1158
    %v1475 = vpack.c.b16 %v1161, %v1160
    %v1476 = vpack.c.b16 %v1163, %v1162
    %v1477 = vpack.c.b16 %v1165, %v1164
    %v1478 = vpack.c.b16 %v1167, %v1166
    %v1479 = vpack.c.b16 %v1169, %v1168
    %v1480 = vpack.c.b16 %v1171, %v1170
    %v1481 = vpack.c.b16 %v1173, %v1172
    %v1482 = vpack.c.b16 %v1175, %v1174
    %v1483 = vpack.c.b16 %v1177, %v1176
    %v1484 = vpack.c.b16 %v1179, %v1178
    %v1485 = vpack.c.b16 %v1181, %v1180
    %v1486 = vpack.c.b16 %v1183, %v1182
    %v1487 = vpack.c.b16 %v1185, %v1184
    %v1488 = vpack.c.b16 %v1187, %v1186
    %v1489 = vpack.c.b16 %v1189, %v1188
    %v1490 = vpack.c.b16 %v1191, %v1190
    %v1491 = vpack.c.b16 %v1193, %v1192
    %v1492 = vpack.c.b16 %v1195, %v1194
    %v1493 = vpack.c.b16 %v1197, %v1196
    %v1494 = vpack.c.b16 %v1199, %v1198
    %v1495 = vpack.c.b16 %v1201, %v1200
    %v1496 = vpack.c.b16 %v1203, %v1202
    %v1497 = vpack.c.b16 %v1205, %v1204
    %v1498 = vpack.c.b16 %v1207, %v1206
    %v1499 = vpack.c.b16 %v1209, %v1208
    %v1500 = vpack.c.b16 %v1211, %v1210
    %v1501 = vpack.c.b16 %v1213, %v1212
    %v1502 = vpack.c.b16 %v1215, %v1214
    %v1503 = vpack.c.b16 %v1217, %v1216
    %v1504 = vpack.c.b16 %v1219, %v1218
    %v1505 = vpack.c.b16 %v1221, %v1220
    %v1506 = vpack.c.b16 %v1223, %v1222
    %v1507 = vpack.c.b16 %v1225, %v1224
    %v1508 = vpack.c.b16 %v1227, %v1226
    %v1509 = vpack.c.b16 %v1229, %v1228
    %v1510 = vpack.c.b16 %v1231, %v1230
    %v1511 = vpack.c.b16 %v1233, %v1232
    %v1512 = vpack.c.b16 %v1235, %v1234
    %v1513 = vpack.c.b16 %v1237, %v1236
    %v1514 = vpack.c.b16 %v1239, %v1238
    %v1515 = vpack.c.b16 %v1241, %v1240
    %v1516 = vpack.c.b16 %v1243, %v1242
    %v1517 = vpack.c.b16 %v1245, %v1244
    %v1518 = vpack.c.b16 %v1247, %v1246
    %v1519 = vpack.c.b16 %v1249, %v1248
    %v1520 = vpack.c.b16 %v1251, %v1250
    %v1521 = vpack.c.b16 %v1253, %v1252
    %v1522 = vpack.c.b16 %v1255, %v1254
    %v1523 = vpack.c.b16 %v1257, %v1256
    %v1524 = vpack.c.b16 %v1259, %v1258
    %v1525 = vpack.c.b16 %v1261, %v1260
    %v1526 = vpack.c.b16 %v1263, %v1262
    %v1527 = vpack.c.b16 %v1265, %v1264
    %v1528 = vpack.c.b16 %v1267, %v1266
    %v1529 = vpack.c.b16 %v1269, %v1268
    %v1530 = vpack.c.b16 %v1271, %v1270
    %v1531 = vpack.c.b16 %v1273, %v1272
    %v1532 = vpack.c.b16 %v1275, %v1274
    %v1533 = vpack.c.b16 %v1277, %v1276
    %v1534 = vpack.c.b16 %v1279, %v1278
    %v1535 = vpack.c.b16 %v1281, %v1280
    %v1536 = vpack.c.b16 %v1283, %v1282
    %v1537 = vpack.c.b16 %v1285, %v1284
    %v1538 = vpack.c.b16 %v1287, %v1286
    %v1539 = vpack.c.b16 %v1289, %v1288
    %v1540 = vpack.c.b16 %v1291, %v1290
    %v1541 = vpack.c.b16 %v1293, %v1292
    %v1542 = vpack.c.b16 %v1295, %v1294
    %v1543 = vpack.c.b16 %v1297, %v1296
    %v1544 = vpack.c.b16 %v1299, %v1298
    %v1545 = vpack.c.b16 %v1301, %v1300
    %v1546 = vpack.c.b16 %v1303, %v1302
    %v1547 = vpack.c.b16 %v1305, %v1304
    %v1548 = vpack.c.b16 %v1307, %v1306
    %v1549 = vpack.c.b16 %v1309, %v1308
    %v1550 = vpack.c.b16 %v1311, %v1310
    %v1551 = vpack.c.b16 %v1313, %v1312
    %v1552 = vpack.c.b16 %v1315, %v1314
    %v1553 = vpack.c.b16 %v1317, %v1316
    %v1554 = vpack.c.b16 %v1319, %v1318
    %v1555 = vpack.c.b16 %v1321, %v1320
    %v1556 = vpack.c.b16 %v1323, %v1322
    %v1557 = vpack.c.b16 %v1325, %v1324
    %v1558 = vpack.c.b16 %v1327, %v1326
    %v1559 = vpack.c.b16 %v1329, %v1328
    %v1560 = vpack.c.b16 %v1331, %v1330
    %v1561 = vpack.c.b16 %v1333, %v1332
    %v1562 = vpack.c.b16 %v1335, %v1334
    %v1563 = vpack.c.b16 %v1337, %v1336
    %v1564 = vpack.c.b16 %v1339, %v1338
    %v1565 = vpack.c.b16 %v1341, %v1340
    %v1566 = vpack.c.b16 %v1343, %v1342
    %v1567 = vpack.c.b16 %v1345, %v1344
    %v1568 = vpack.c.b16 %v1347, %v1346
    %v1569 = vpack.c.b16 %v1349, %v1348
    %v1570 = vpack.c.b16 %v1351, %v1350
    %v1571 = vpack.c.b16 %v1353, %v1352
    %v1572 = vpack.c.b16 %v1355, %v1354
    %v1573 = vpack.c.b16 %v1357, %v1356
    %v1574 = vpack.c.b16 %v1359, %v1358
    %v1575 = vpack.c.b16 %v1361, %v1360
    %v1576 = vpack.c.b16 %v1363, %v1362
    %v1577 = vpack.c.b16 %v1365, %v1364
    %v1578 = vpack.c.b16 %v1367, %v1366
    %v1579 = vpack.c.b16 %v1369, %v1368
    %v1580 = vpack.c.b16 %v1371, %v1370
    %v1581 = vpack.c.b16 %v1373, %v1372
    %v1582 = vpack.c.b16 %v1375, %v1374
    %v1583 = vpack.c.b16 %v1377, %v1376
    %v1584 = vpack.c.b16 %v1379, %v1378
    %v1585 = vpack.c.b16 %v1381, %v1380
    %v1586 = vpack.c.b16 %v1383, %v1382
    %v1587 = vpack.c.b16 %v1385, %v1384
    %v1588 = vpack.c.b16 %v1387, %v1386
    %v1589 = vpack.c.b16 %v1389, %v1388
    %v1590 = vpack.c.b16 %v1391, %v1390
    %v1591 = vpack.c.b16 %v1393, %v1392
    %v1592 = vpack.c.b16 %v1395, %v1394
    %v1593 = vpack.c.b16 %v1397, %v1396
    %vm1790 = vcmask 523264
    %v1792 = vsel %vm1790, %v589, 0
    %1794 = vmatprep.subr.bf16.mxu0 0
    %1795 = vmatpush1.bf16.msra.mxu0 %v1405
    %1796 = vmatprep.subr.bf16.mxu0 0
    %1797 = vmatpush1.bf16.msra.mxu0 %v1404
    %1798 = vmatprep.subr.bf16.mxu0 0
    %1799 = vmatpush1.bf16.msra.mxu0 %v1403
    %1800 = vmatprep.subr.bf16.mxu0 0
    %1801 = vmatpush1.bf16.msra.mxu0 %v1402
    %1802 = vmatprep.subr.bf16.mxu0 0
    %1803 = vmatpush1.bf16.msra.mxu0 %v1401
    %1804 = vmatprep.subr.bf16.mxu0 0
    %1805 = vmatpush1.bf16.msra.mxu0 %v1400
    %1806 = vmatprep.subr.bf16.mxu0 0
    %1807 = vmatpush1.bf16.msra.mxu0 %v1399
    %1808 = vmatprep.subr.bf16.mxu0 0
    %1809 = vmatpush1.bf16.msra.mxu0 %v1398
    %1810 = vmatprep.subr.bf16.mxu0 0
    %1811 = vmatpush2.bf16.msra.mxu0 %v1413
    %1812 = vmatprep.subr.bf16.mxu0 0
    %1813 = vmatpush2.bf16.msra.mxu0 %v1412
    %1814 = vmatprep.subr.bf16.mxu0 0
    %1815 = vmatpush2.bf16.msra.mxu0 %v1411
    %1816 = vmatprep.subr.bf16.mxu0 0
    %1817 = vmatpush2.bf16.msra.mxu0 %v1410
    %1818 = vmatprep.subr.bf16.mxu0 0
    %1819 = vmatpush2.bf16.msra.mxu0 %v1409
    %1820 = vmatprep.subr.bf16.mxu0 0
    %1821 = vmatpush2.bf16.msra.mxu0 %v1408
    %1822 = vmatprep.subr.bf16.mxu0 0
    %1823 = vmatpush2.bf16.msra.mxu0 %v1407
    %1824 = vmatprep.subr.bf16.mxu0 0
    %1825 = vmatpush2.bf16.msra.mxu0 %v1406
    %1826 = vmatprep.mubr.bf16.mxu0 %v466
    %1827 = vmatmul.mubr.bf16.gmra.mxu0 %v452
    %v1828 = vpop.f32.mrf.mxu0
    %v1829 = vadd.f32 %v423, %v1828
    %v1830 = vpop.f32.mrf.mxu0
    %v1831 = vpop.f32.mrf.mxu0
    %v1832 = vpop.f32.mrf.mxu0
    %1833 = vdwg.mxu0
    %1834 = vmatprep.subr.bf16.mxu0 0
    %1835 = vmatpush1.bf16.msra.mxu0 %v1421
    %1836 = vmatprep.subr.bf16.mxu0 0
    %1837 = vmatpush1.bf16.msra.mxu0 %v1420
    %1838 = vmatprep.subr.bf16.mxu0 0
    %1839 = vmatpush1.bf16.msra.mxu0 %v1419
    %1840 = vmatprep.subr.bf16.mxu0 0
    %1841 = vmatpush1.bf16.msra.mxu0 %v1418
    %1842 = vmatprep.subr.bf16.mxu0 0
    %1843 = vmatpush1.bf16.msra.mxu0 %v1417
    %1844 = vmatprep.subr.bf16.mxu0 0
    %1845 = vmatpush1.bf16.msra.mxu0 %v1416
    %1846 = vmatprep.subr.bf16.mxu0 0
    %1847 = vmatpush1.bf16.msra.mxu0 %v1415
    %1848 = vmatprep.subr.bf16.mxu0 0
    %1849 = vmatpush1.bf16.msra.mxu0 %v1414
    %1850 = vmatprep.subr.bf16.mxu0 0
    %1851 = vmatpush2.bf16.msra.mxu0 %v1429
    %1852 = vmatprep.subr.bf16.mxu0 0
    %1853 = vmatpush2.bf16.msra.mxu0 %v1428
    %1854 = vmatprep.subr.bf16.mxu0 0
    %1855 = vmatpush2.bf16.msra.mxu0 %v1427
    %1856 = vmatprep.subr.bf16.mxu0 0
    %1857 = vmatpush2.bf16.msra.mxu0 %v1426
    %1858 = vmatprep.subr.bf16.mxu0 0
    %1859 = vmatpush2.bf16.msra.mxu0 %v1425
    %1860 = vmatprep.subr.bf16.mxu0 0
    %1861 = vmatpush2.bf16.msra.mxu0 %v1424
    %1862 = vmatprep.subr.bf16.mxu0 0
    %1863 = vmatpush2.bf16.msra.mxu0 %v1423
    %1864 = vmatprep.subr.bf16.mxu0 0
    %1865 = vmatpush2.bf16.msra.mxu0 %v1422
    %1866 = vmatprep.mubr.bf16.mxu0 %v476
    %1867 = vmatmul.mubr.bf16.gmra.mxu0 %v474
    %v1868 = vpop.f32.mrf.mxu0
    %v1869 = vadd.f32 %v1829, %v1868
    %v1870 = vpop.f32.mrf.mxu0
    %v1871 = vpop.f32.mrf.mxu0
    %v1872 = vpop.f32.mrf.mxu0
    %1873 = vdwg.mxu0
    %1874 = vmatprep.subr.bf16.mxu0 0
    %1875 = vmatpush1.bf16.msra.mxu0 %v1437
    %1876 = vmatprep.subr.bf16.mxu0 0
    %1877 = vmatpush1.bf16.msra.mxu0 %v1436
    %1878 = vmatprep.subr.bf16.mxu0 0
    %1879 = vmatpush1.bf16.msra.mxu0 %v1435
    %1880 = vmatprep.subr.bf16.mxu0 0
    %1881 = vmatpush1.bf16.msra.mxu0 %v1434
    %1882 = vmatprep.subr.bf16.mxu0 0
    %1883 = vmatpush1.bf16.msra.mxu0 %v1433
    %1884 = vmatprep.subr.bf16.mxu0 0
    %1885 = vmatpush1.bf16.msra.mxu0 %v1432
    %1886 = vmatprep.subr.bf16.mxu0 0
    %1887 = vmatpush1.bf16.msra.mxu0 %v1431
    %1888 = vmatprep.subr.bf16.mxu0 0
    %1889 = vmatpush1.bf16.msra.mxu0 %v1430
    %1890 = vmatprep.subr.bf16.mxu0 0
    %1891 = vmatpush2.bf16.msra.mxu0 %v1445
    %1892 = vmatprep.subr.bf16.mxu0 0
    %1893 = vmatpush2.bf16.msra.mxu0 %v1444
    %1894 = vmatprep.subr.bf16.mxu0 0
    %1895 = vmatpush2.bf16.msra.mxu0 %v1443
    %1896 = vmatprep.subr.bf16.mxu0 0
    %1897 = vmatpush2.bf16.msra.mxu0 %v1442
    %1898 = vmatprep.subr.bf16.mxu0 0
    %1899 = vmatpush2.bf16.msra.mxu0 %v1441
    %1900 = vmatprep.subr.bf16.mxu0 0
    %1901 = vmatpush2.bf16.msra.mxu0 %v1440
    %1902 = vmatprep.subr.bf16.mxu0 0
    %1903 = vmatpush2.bf16.msra.mxu0 %v1439
    %1904 = vmatprep.subr.bf16.mxu0 0
    %1905 = vmatpush2.bf16.msra.mxu0 %v1438
    %1906 = vmatprep.mubr.bf16.mxu0 %v473
    %1907 = vmatmul.mubr.bf16.gmra.mxu0 %v459
    %v1908 = vpop.f32.mrf.mxu0
    %v1909 = vadd.f32 %v1869, %v1908
    %v1910 = vpop.f32.mrf.mxu0
    %v1911 = vpop.f32.mrf.mxu0
    %v1912 = vpop.f32.mrf.mxu0
    %1913 = vdwg.mxu0
    %1914 = vmatprep.subr.bf16.mxu0 0
    %1915 = vmatpush1.bf16.msra.mxu0 %v1453
    %1916 = vmatprep.subr.bf16.mxu0 0
    %1917 = vmatpush1.bf16.msra.mxu0 %v1452
    %1918 = vmatprep.subr.bf16.mxu0 0
    %1919 = vmatpush1.bf16.msra.mxu0 %v1451
    %1920 = vmatprep.subr.bf16.mxu0 0
    %1921 = vmatpush1.bf16.msra.mxu0 %v1450
    %1922 = vmatprep.subr.bf16.mxu0 0
    %1923 = vmatpush1.bf16.msra.mxu0 %v1449
    %1924 = vmatprep.subr.bf16.mxu0 0
    %1925 = vmatpush1.bf16.msra.mxu0 %v1448
    %1926 = vmatprep.subr.bf16.mxu0 0
    %1927 = vmatpush1.bf16.msra.mxu0 %v1447
    %1928 = vmatprep.subr.bf16.mxu0 0
    %1929 = vmatpush1.bf16.msra.mxu0 %v1446
    %1930 = vmatprep.subr.bf16.mxu0 0
    %1931 = vmatpush2.bf16.msra.mxu0 %v1461
    %1932 = vmatprep.subr.bf16.mxu0 0
    %1933 = vmatpush2.bf16.msra.mxu0 %v1460
    %1934 = vmatprep.subr.bf16.mxu0 0
    %1935 = vmatpush2.bf16.msra.mxu0 %v1459
    %1936 = vmatprep.subr.bf16.mxu0 0
    %1937 = vmatpush2.bf16.msra.mxu0 %v1458
    %1938 = vmatprep.subr.bf16.mxu0 0
    %1939 = vmatpush2.bf16.msra.mxu0 %v1457
    %1940 = vmatprep.subr.bf16.mxu0 0
    %1941 = vmatpush2.bf16.msra.mxu0 %v1456
    %1942 = vmatprep.subr.bf16.mxu0 0
    %1943 = vmatpush2.bf16.msra.mxu0 %v1455
    %1944 = vmatprep.subr.bf16.mxu0 0
    %1945 = vmatpush2.bf16.msra.mxu0 %v1454
    %1946 = vmatprep.mubr.bf16.mxu0 %v477
    %1947 = vmatmul.mubr.bf16.gmra.mxu0 %v475
    %v1948 = vpop.f32.mrf.mxu0
    %v1949 = vadd.f32 %v1909, %v1948
    %v1950 = vpop.f32.mrf.mxu0
    %v1951 = vpop.f32.mrf.mxu0
    %v1952 = vpop.f32.mrf.mxu0
    %1953 = vdwg.mxu0
    %1954 = vmatprep.subr.bf16.mxu0 0
    %1955 = vmatpush1.bf16.msra.mxu0 %v1469
    %1956 = vmatprep.subr.bf16.mxu0 0
    %1957 = vmatpush1.bf16.msra.mxu0 %v1468
    %1958 = vmatprep.subr.bf16.mxu0 0
    %1959 = vmatpush1.bf16.msra.mxu0 %v1467
    %1960 = vmatprep.subr.bf16.mxu0 0
    %1961 = vmatpush1.bf16.msra.mxu0 %v1466
    %1962 = vmatprep.subr.bf16.mxu0 0
    %1963 = vmatpush1.bf16.msra.mxu0 %v1465
    %1964 = vmatprep.subr.bf16.mxu0 0
    %1965 = vmatpush1.bf16.msra.mxu0 %v1464
    %1966 = vmatprep.subr.bf16.mxu0 0
    %1967 = vmatpush1.bf16.msra.mxu0 %v1463
    %1968 = vmatprep.subr.bf16.mxu0 0
    %1969 = vmatpush1.bf16.msra.mxu0 %v1462
    %1970 = vmatprep.subr.bf16.mxu0 0
    %1971 = vmatpush2.bf16.msra.mxu0 %v1477
    %1972 = vmatprep.subr.bf16.mxu0 0
    %1973 = vmatpush2.bf16.msra.mxu0 %v1476
    %1974 = vmatprep.subr.bf16.mxu0 0
    %1975 = vmatpush2.bf16.msra.mxu0 %v1475
    %1976 = vmatprep.subr.bf16.mxu0 0
    %1977 = vmatpush2.bf16.msra.mxu0 %v1474
    %1978 = vmatprep.subr.bf16.mxu0 0
    %1979 = vmatpush2.bf16.msra.mxu0 %v1473
    %1980 = vmatprep.subr.bf16.mxu0 0
    %1981 = vmatpush2.bf16.msra.mxu0 %v1472
    %1982 = vmatprep.subr.bf16.mxu0 0
    %1983 = vmatpush2.bf16.msra.mxu0 %v1471
    %1984 = vmatprep.subr.bf16.mxu0 0
    %1985 = vmatpush2.bf16.msra.mxu0 %v1470
    %1986 = vmatprep.mubr.bf16.mxu0 %v515
    %1987 = vmatmul.mubr.bf16.gmra.mxu0 %v501
    %v1988 = vpop.f32.mrf.mxu0
    %v1989 = vadd.f32 %v1949, %v1988
    %v1990 = vpop.f32.mrf.mxu0
    %v1991 = vpop.f32.mrf.mxu0
    %v1992 = vpop.f32.mrf.mxu0
    %1993 = vdwg.mxu0
    %1994 = vmatprep.subr.bf16.mxu0 0
    %1995 = vmatpush1.bf16.msra.mxu0 %v1485
    %1996 = vmatprep.subr.bf16.mxu0 0
    %1997 = vmatpush1.bf16.msra.mxu0 %v1484
    %1998 = vmatprep.subr.bf16.mxu0 0
    %1999 = vmatpush1.bf16.msra.mxu0 %v1483
    %2000 = vmatprep.subr.bf16.mxu0 0
    %2001 = vmatpush1.bf16.msra.mxu0 %v1482
    %2002 = vmatprep.subr.bf16.mxu0 0
    %2003 = vmatpush1.bf16.msra.mxu0 %v1481
    %2004 = vmatprep.subr.bf16.mxu0 0
    %2005 = vmatpush1.bf16.msra.mxu0 %v1480
    %2006 = vmatprep.subr.bf16.mxu0 0
    %2007 = vmatpush1.bf16.msra.mxu0 %v1479
    %2008 = vmatprep.subr.bf16.mxu0 0
    %2009 = vmatpush1.bf16.msra.mxu0 %v1478
    %2010 = vmatprep.subr.bf16.mxu0 0
    %2011 = vmatpush2.bf16.msra.mxu0 %v1493
    %2012 = vmatprep.subr.bf16.mxu0 0
    %2013 = vmatpush2.bf16.msra.mxu0 %v1492
    %2014 = vmatprep.subr.bf16.mxu0 0
    %2015 = vmatpush2.bf16.msra.mxu0 %v1491
    %2016 = vmatprep.subr.bf16.mxu0 0
    %2017 = vmatpush2.bf16.msra.mxu0 %v1490
    %2018 = vmatprep.subr.bf16.mxu0 0
    %2019 = vmatpush2.bf16.msra.mxu0 %v1489
    %2020 = vmatprep.subr.bf16.mxu0 0
    %2021 = vmatpush2.bf16.msra.mxu0 %v1488
    %2022 = vmatprep.subr.bf16.mxu0 0
    %2023 = vmatpush2.bf16.msra.mxu0 %v1487
    %2024 = vmatprep.subr.bf16.mxu0 0
    %2025 = vmatpush2.bf16.msra.mxu0 %v1486
    %2026 = vmatprep.mubr.bf16.mxu0 %v525
    %2027 = vmatmul.mubr.bf16.gmra.mxu0 %v523
    %v2028 = vpop.f32.mrf.mxu0
    %v2029 = vadd.f32 %v1989, %v2028
    %v2030 = vpop.f32.mrf.mxu0
    %v2031 = vpop.f32.mrf.mxu0
    %v2032 = vpop.f32.mrf.mxu0
    %2033 = vdwg.mxu0
    %2034 = vmatprep.subr.bf16.mxu0 0
    %2035 = vmatpush1.bf16.msra.mxu0 %v1501
    %2036 = vmatprep.subr.bf16.mxu0 0
    %2037 = vmatpush1.bf16.msra.mxu0 %v1500
    %2038 = vmatprep.subr.bf16.mxu0 0
    %2039 = vmatpush1.bf16.msra.mxu0 %v1499
    %2040 = vmatprep.subr.bf16.mxu0 0
    %2041 = vmatpush1.bf16.msra.mxu0 %v1498
    %2042 = vmatprep.subr.bf16.mxu0 0
    %2043 = vmatpush1.bf16.msra.mxu0 %v1497
    %2044 = vmatprep.subr.bf16.mxu0 0
    %2045 = vmatpush1.bf16.msra.mxu0 %v1496
    %2046 = vmatprep.subr.bf16.mxu0 0
    %2047 = vmatpush1.bf16.msra.mxu0 %v1495
    %2048 = vmatprep.subr.bf16.mxu0 0
    %2049 = vmatpush1.bf16.msra.mxu0 %v1494
    %2050 = vmatprep.subr.bf16.mxu0 0
    %2051 = vmatpush2.bf16.msra.mxu0 %v1509
    %2052 = vmatprep.subr.bf16.mxu0 0
    %2053 = vmatpush2.bf16.msra.mxu0 %v1508
    %2054 = vmatprep.subr.bf16.mxu0 0
    %2055 = vmatpush2.bf16.msra.mxu0 %v1507
    %2056 = vmatprep.subr.bf16.mxu0 0
    %2057 = vmatpush2.bf16.msra.mxu0 %v1506
    %2058 = vmatprep.subr.bf16.mxu0 0
    %2059 = vmatpush2.bf16.msra.mxu0 %v1505
    %2060 = vmatprep.subr.bf16.mxu0 0
    %2061 = vmatpush2.bf16.msra.mxu0 %v1504
    %2062 = vmatprep.subr.bf16.mxu0 0
    %2063 = vmatpush2.bf16.msra.mxu0 %v1503
    %2064 = vmatprep.subr.bf16.mxu0 0
    %2065 = vmatpush2.bf16.msra.mxu0 %v1502
    %2066 = vmatprep.mubr.bf16.mxu0 %v522
    %2067 = vmatmul.mubr.bf16.gmra.mxu0 %v508
    %v2068 = vpop.f32.mrf.mxu0
    %v2069 = vadd.f32 %v2029, %v2068
    %v2070 = vpop.f32.mrf.mxu0
    %v2071 = vpop.f32.mrf.mxu0
    %v2072 = vpop.f32.mrf.mxu0
    %2073 = vdwg.mxu0
    %2074 = vmatprep.subr.bf16.mxu0 0
    %2075 = vmatpush1.bf16.msra.mxu0 %v1517
    %2076 = vmatprep.subr.bf16.mxu0 0
    %2077 = vmatpush1.bf16.msra.mxu0 %v1516
    %2078 = vmatprep.subr.bf16.mxu0 0
    %2079 = vmatpush1.bf16.msra.mxu0 %v1515
    %2080 = vmatprep.subr.bf16.mxu0 0
    %2081 = vmatpush1.bf16.msra.mxu0 %v1514
    %2082 = vmatprep.subr.bf16.mxu0 0
    %2083 = vmatpush1.bf16.msra.mxu0 %v1513
    %2084 = vmatprep.subr.bf16.mxu0 0
    %2085 = vmatpush1.bf16.msra.mxu0 %v1512
    %2086 = vmatprep.subr.bf16.mxu0 0
    %2087 = vmatpush1.bf16.msra.mxu0 %v1511
    %2088 = vmatprep.subr.bf16.mxu0 0
    %2089 = vmatpush1.bf16.msra.mxu0 %v1510
    %2090 = vmatprep.subr.bf16.mxu0 0
    %2091 = vmatpush2.bf16.msra.mxu0 %v1525
    %2092 = vmatprep.subr.bf16.mxu0 0
    %2093 = vmatpush2.bf16.msra.mxu0 %v1524
    %2094 = vmatprep.subr.bf16.mxu0 0
    %2095 = vmatpush2.bf16.msra.mxu0 %v1523
    %2096 = vmatprep.subr.bf16.mxu0 0
    %2097 = vmatpush2.bf16.msra.mxu0 %v1522
    %2098 = vmatprep.subr.bf16.mxu0 0
    %2099 = vmatpush2.bf16.msra.mxu0 %v1521
    %2100 = vmatprep.subr.bf16.mxu0 0
    %2101 = vmatpush2.bf16.msra.mxu0 %v1520
    %2102 = vmatprep.subr.bf16.mxu0 0
    %2103 = vmatpush2.bf16.msra.mxu0 %v1519
    %2104 = vmatprep.subr.bf16.mxu0 0
    %2105 = vmatpush2.bf16.msra.mxu0 %v1518
    %2106 = vmatprep.mubr.bf16.mxu0 %v526
    %2107 = vmatmul.mubr.bf16.gmra.mxu0 %v524
    %v2108 = vpop.f32.mrf.mxu0
    %v2109 = vadd.f32 %v2069, %v2108
    %v2110 = vpop.f32.mrf.mxu0
    %v2111 = vpop.f32.mrf.mxu0
    %v2112 = vpop.f32.mrf.mxu0
    %2113 = vdwg.mxu0
    %2114 = vmatprep.subr.bf16.mxu0 0
    %2115 = vmatpush1.bf16.msra.mxu0 %v1533
    %2116 = vmatprep.subr.bf16.mxu0 0
    %2117 = vmatpush1.bf16.msra.mxu0 %v1532
    %2118 = vmatprep.subr.bf16.mxu0 0
    %2119 = vmatpush1.bf16.msra.mxu0 %v1531
    %2120 = vmatprep.subr.bf16.mxu0 0
    %2121 = vmatpush1.bf16.msra.mxu0 %v1530
    %2122 = vmatprep.subr.bf16.mxu0 0
    %2123 = vmatpush1.bf16.msra.mxu0 %v1529
    %2124 = vmatprep.subr.bf16.mxu0 0
    %2125 = vmatpush1.bf16.msra.mxu0 %v1528
    %2126 = vmatprep.subr.bf16.mxu0 0
    %2127 = vmatpush1.bf16.msra.mxu0 %v1527
    %2128 = vmatprep.subr.bf16.mxu0 0
    %2129 = vmatpush1.bf16.msra.mxu0 %v1526
    %2130 = vmatprep.subr.bf16.mxu0 0
    %2131 = vmatpush2.bf16.msra.mxu0 %v1541
    %2132 = vmatprep.subr.bf16.mxu0 0
    %2133 = vmatpush2.bf16.msra.mxu0 %v1540
    %2134 = vmatprep.subr.bf16.mxu0 0
    %2135 = vmatpush2.bf16.msra.mxu0 %v1539
    %2136 = vmatprep.subr.bf16.mxu0 0
    %2137 = vmatpush2.bf16.msra.mxu0 %v1538
    %2138 = vmatprep.subr.bf16.mxu0 0
    %2139 = vmatpush2.bf16.msra.mxu0 %v1537
    %2140 = vmatprep.subr.bf16.mxu0 0
    %2141 = vmatpush2.bf16.msra.mxu0 %v1536
    %2142 = vmatprep.subr.bf16.mxu0 0
    %2143 = vmatpush2.bf16.msra.mxu0 %v1535
    %2144 = vmatprep.subr.bf16.mxu0 0
    %2145 = vmatpush2.bf16.msra.mxu0 %v1534
    %2146 = vmatprep.mubr.bf16.mxu0 %v564
    %2147 = vmatmul.mubr.bf16.gmra.mxu0 %v550
    %v2148 = vpop.f32.mrf.mxu0
    %v2149 = vadd.f32 %v2109, %v2148
    %v2150 = vpop.f32.mrf.mxu0
    %v2151 = vpop.f32.mrf.mxu0
    %v2152 = vpop.f32.mrf.mxu0
    %2153 = vdwg.mxu0
    %2154 = vmatprep.subr.bf16.mxu0 0
    %2155 = vmatpush1.bf16.msra.mxu0 %v1549
    %2156 = vmatprep.subr.bf16.mxu0 0
    %2157 = vmatpush1.bf16.msra.mxu0 %v1548
    %2158 = vmatprep.subr.bf16.mxu0 0
    %2159 = vmatpush1.bf16.msra.mxu0 %v1547
    %2160 = vmatprep.subr.bf16.mxu0 0
    %2161 = vmatpush1.bf16.msra.mxu0 %v1546
    %2162 = vmatprep.subr.bf16.mxu0 0
    %2163 = vmatpush1.bf16.msra.mxu0 %v1545
    %2164 = vmatprep.subr.bf16.mxu0 0
    %2165 = vmatpush1.bf16.msra.mxu0 %v1544
    %2166 = vmatprep.subr.bf16.mxu0 0
    %2167 = vmatpush1.bf16.msra.mxu0 %v1543
    %2168 = vmatprep.subr.bf16.mxu0 0
    %2169 = vmatpush1.bf16.msra.mxu0 %v1542
    %2170 = vmatprep.subr.bf16.mxu0 0
    %2171 = vmatpush2.bf16.msra.mxu0 %v1557
    %2172 = vmatprep.subr.bf16.mxu0 0
    %2173 = vmatpush2.bf16.msra.mxu0 %v1556
    %2174 = vmatprep.subr.bf16.mxu0 0
    %2175 = vmatpush2.bf16.msra.mxu0 %v1555
    %2176 = vmatprep.subr.bf16.mxu0 0
    %2177 = vmatpush2.bf16.msra.mxu0 %v1554
    %2178 = vmatprep.subr.bf16.mxu0 0
    %2179 = vmatpush2.bf16.msra.mxu0 %v1553
    %2180 = vmatprep.subr.bf16.mxu0 0
    %2181 = vmatpush2.bf16.msra.mxu0 %v1552
    %2182 = vmatprep.subr.bf16.mxu0 0
    %2183 = vmatpush2.bf16.msra.mxu0 %v1551
    %2184 = vmatprep.subr.bf16.mxu0 0
    %2185 = vmatpush2.bf16.msra.mxu0 %v1550
    %2186 = vmatprep.mubr.bf16.mxu0 %v574
    %2187 = vmatmul.mubr.bf16.gmra.mxu0 %v572
    %v2188 = vpop.f32.mrf.mxu0
    %v2189 = vadd.f32 %v2149, %v2188
    %v2190 = vpop.f32.mrf.mxu0
    %v2191 = vpop.f32.mrf.mxu0
    %v2192 = vpop.f32.mrf.mxu0
    %2193 = vdwg.mxu0
    %2194 = vmatprep.subr.bf16.mxu0 0
    %2195 = vmatpush1.bf16.msra.mxu0 %v1565
    %2196 = vmatprep.subr.bf16.mxu0 0
    %2197 = vmatpush1.bf16.msra.mxu0 %v1564
    %2198 = vmatprep.subr.bf16.mxu0 0
    %2199 = vmatpush1.bf16.msra.mxu0 %v1563
    %2200 = vmatprep.subr.bf16.mxu0 0
    %2201 = vmatpush1.bf16.msra.mxu0 %v1562
    %2202 = vmatprep.subr.bf16.mxu0 0
    %2203 = vmatpush1.bf16.msra.mxu0 %v1561
    %2204 = vmatprep.subr.bf16.mxu0 0
    %2205 = vmatpush1.bf16.msra.mxu0 %v1560
    %2206 = vmatprep.subr.bf16.mxu0 0
    %2207 = vmatpush1.bf16.msra.mxu0 %v1559
    %2208 = vmatprep.subr.bf16.mxu0 0
    %2209 = vmatpush1.bf16.msra.mxu0 %v1558
    %2210 = vmatprep.subr.bf16.mxu0 0
    %2211 = vmatpush2.bf16.msra.mxu0 %v1573
    %2212 = vmatprep.subr.bf16.mxu0 0
    %2213 = vmatpush2.bf16.msra.mxu0 %v1572
    %2214 = vmatprep.subr.bf16.mxu0 0
    %2215 = vmatpush2.bf16.msra.mxu0 %v1571
    %2216 = vmatprep.subr.bf16.mxu0 0
    %2217 = vmatpush2.bf16.msra.mxu0 %v1570
    %2218 = vmatprep.subr.bf16.mxu0 0
    %2219 = vmatpush2.bf16.msra.mxu0 %v1569
    %2220 = vmatprep.subr.bf16.mxu0 0
    %2221 = vmatpush2.bf16.msra.mxu0 %v1568
    %2222 = vmatprep.subr.bf16.mxu0 0
    %2223 = vmatpush2.bf16.msra.mxu0 %v1567
    %2224 = vmatprep.subr.bf16.mxu0 0
    %2225 = vmatpush2.bf16.msra.mxu0 %v1566
    %2226 = vmatprep.mubr.bf16.mxu0 %v571
    %2227 = vmatmul.mubr.bf16.gmra.mxu0 %v557
    %v2228 = vpop.f32.mrf.mxu0
    %v2229 = vadd.f32 %v2189, %v2228
    %v2230 = vpop.f32.mrf.mxu0
    %v2231 = vpop.f32.mrf.mxu0
    %v2232 = vpop.f32.mrf.mxu0
    %2233 = vdwg.mxu0
    %2234 = vmatprep.subr.bf16.mxu0 0
    %2235 = vmatpush1.bf16.msra.mxu0 %v1581
    %2236 = vmatprep.subr.bf16.mxu0 0
    %2237 = vmatpush1.bf16.msra.mxu0 %v1580
    %2238 = vmatprep.subr.bf16.mxu0 0
    %2239 = vmatpush1.bf16.msra.mxu0 %v1579
    %2240 = vmatprep.subr.bf16.mxu0 0
    %2241 = vmatpush1.bf16.msra.mxu0 %v1578
    %2242 = vmatprep.subr.bf16.mxu0 0
    %2243 = vmatpush1.bf16.msra.mxu0 %v1577
    %2244 = vmatprep.subr.bf16.mxu0 0
    %2245 = vmatpush1.bf16.msra.mxu0 %v1576
    %2246 = vmatprep.subr.bf16.mxu0 0
    %2247 = vmatpush1.bf16.msra.mxu0 %v1575
    %2248 = vmatprep.subr.bf16.mxu0 0
    %2249 = vmatpush1.bf16.msra.mxu0 %v1574
    %2250 = vmatprep.subr.bf16.mxu0 0
    %2251 = vmatpush2.bf16.msra.mxu0 %v1589
    %2252 = vmatprep.subr.bf16.mxu0 0
    %2253 = vmatpush2.bf16.msra.mxu0 %v1588
    %2254 = vmatprep.subr.bf16.mxu0 0
    %2255 = vmatpush2.bf16.msra.mxu0 %v1587
    %2256 = vmatprep.subr.bf16.mxu0 0
    %2257 = vmatpush2.bf16.msra.mxu0 %v1586
    %2258 = vmatprep.subr.bf16.mxu0 0
    %2259 = vmatpush2.bf16.msra.mxu0 %v1585
    %2260 = vmatprep.subr.bf16.mxu0 0
    %2261 = vmatpush2.bf16.msra.mxu0 %v1584
    %2262 = vmatprep.subr.bf16.mxu0 0
    %2263 = vmatpush2.bf16.msra.mxu0 %v1583
    %2264 = vmatprep.subr.bf16.mxu0 0
    %2265 = vmatpush2.bf16.msra.mxu0 %v1582
    %2266 = vmatprep.mubr.bf16.mxu0 %v575
    %2267 = vmatmul.mubr.bf16.gmra.mxu0 %v573
    %v2268 = vpop.f32.mrf.mxu0
    %v2269 = vadd.f32 %v2229, %v2268
    %v2270 = vpop.f32.mrf.mxu0
    %v2271 = vpop.f32.mrf.mxu0
    %v2272 = vpop.f32.mrf.mxu0
    %2273 = vdwg.mxu0
    %2274 = vmatprep.subr.bf16.mxu0 0
    %2275 = vmatpush1.bf16.msra.mxu0 0
    %2276 = vmatprep.subr.bf16.mxu0 0
    %2277 = vmatpush1.bf16.msra.mxu0 0
    %2278 = vmatprep.subr.bf16.mxu0 0
    %2279 = vmatpush1.bf16.msra.mxu0 0
    %2280 = vmatprep.subr.bf16.mxu0 0
    %2281 = vmatpush1.bf16.msra.mxu0 0
    %2282 = vmatprep.subr.bf16.mxu0 0
    %2283 = vmatpush1.bf16.msra.mxu0 %v1593
    %2284 = vmatprep.subr.bf16.mxu0 0
    %2285 = vmatpush1.bf16.msra.mxu0 %v1592
    %2286 = vmatprep.subr.bf16.mxu0 0
    %2287 = vmatpush1.bf16.msra.mxu0 %v1591
    %2288 = vmatprep.subr.bf16.mxu0 0
    %2289 = vmatpush1.bf16.msra.mxu0 %v1590
    %2290 = vmatprep.subr.bf16.mxu0 0
    %2291 = vmatpush2.bf16.msra.mxu0 0
    %2292 = vmatprep.subr.bf16.mxu0 0
    %2293 = vmatpush2.bf16.msra.mxu0 0
    %2294 = vmatprep.subr.bf16.mxu0 0
    %2295 = vmatpush2.bf16.msra.mxu0 0
    %2296 = vmatprep.subr.bf16.mxu0 0
    %2297 = vmatpush2.bf16.msra.mxu0 0
    %2298 = vmatprep.subr.bf16.mxu0 0
    %2299 = vmatpush2.bf16.msra.mxu0 0
    %2300 = vmatprep.subr.bf16.mxu0 0
    %2301 = vmatpush2.bf16.msra.mxu0 0
    %2302 = vmatprep.subr.bf16.mxu0 0
    %2303 = vmatpush2.bf16.msra.mxu0 0
    %2304 = vmatprep.subr.bf16.mxu0 0
    %2305 = vmatpush2.bf16.msra.mxu0 0
    %2306 = vmatprep.mubr.bf16.mxu0 0
    %2307 = vmatmul.mubr.bf16.gmra.mxu0 %v1792
    %v2308 = vpop.f32.mrf.mxu0
    %v2309 = vadd.f32 %v2269, %v2308
    %v2310 = vpop.f32.mrf.mxu0
    %v2311 = vpop.f32.mrf.mxu0
    %v2312 = vpop.f32.mrf.mxu0
    %2313 = vdwg.mxu0
    %v2314 = vmax.f32 %v2309, 0.0
    %v2315 = vpack.c.bf16 %v2314, %v2314
    %v2316 = vld [vmem:[%s3] sm:$0xf]
    %v2317 = vld [vmem:[%s3 + $0x4] sm:$0xf]
    %v2318 = vld [vmem:[%s3 + $0x8] sm:$0xf]
    %v2319 = vld [vmem:[%s3 + $0xc] sm:$0xf]
    %v2320 = vld [vmem:[%s3 + $0x10] sm:$0xf]
    %v2321 = vld [vmem:[%s3 + $0x14] sm:$0xf]
    %v2322 = vld [vmem:[%s3 + $0x18] sm:$0xf]
    %v2323 = vld [vmem:[%s3 + $0x1c] sm:$0xf]
    %v2324 = vld [vmem:[%s3 + $0x20] sm:$0xf]
    %v2325 = vld [vmem:[%s3 + $0x24] sm:$0xf]
    %v2326 = vld [vmem:[%s3 + $0x28] sm:$0xf]
    %v2327 = vld [vmem:[%s3 + $0x2c] sm:$0xf]
    %v2328 = vld [vmem:[%s3 + $0x30] sm:$0xf]
    %v2329 = vld [vmem:[%s3 + $0x34] sm:$0xf]
    %v2330 = vld [vmem:[%s3 + $0x38] sm:$0xf]
    %v2331 = vld [vmem:[%s3 + $0x3c] sm:$0xf]
    %v2332 = vld [vmem:[%s4] sm:$0x1]
    %v2334 = vlaneseq
    %v2335 = vshrl.u32 %v2334, 7
    %v2336 = vsub.s32 0, %v2335
    %v2337 = vrot.slane %v2332, %v2336
    %v2355 = vunpack.c.l.b16 %v2316
    %v2356 = vunpack.c.l.b16 %v2317
    %v2357 = vunpack.c.l.b16 %v2318
    %v2358 = vunpack.c.l.b16 %v2319
    %v2359 = vunpack.c.l.b16 %v2320
    %v2360 = vunpack.c.l.b16 %v2321
    %v2361 = vunpack.c.l.b16 %v2322
    %v2362 = vunpack.c.l.b16 %v2323
    %v2363 = vunpack.c.l.b16 %v2324
    %v2364 = vunpack.c.l.b16 %v2325
    %v2365 = vunpack.c.l.b16 %v2326
    %v2366 = vunpack.c.l.b16 %v2327
    %v2367 = vunpack.c.l.b16 %v2328
    %v2368 = vunpack.c.l.b16 %v2329
    %v2369 = vunpack.c.l.b16 %v2330
    %v2370 = vunpack.c.l.b16 %v2331
    %v2371 = vpack.c.b16 %v2356, %v2355
    %v2372 = vpack.c.b16 %v2358, %v2357
    %v2373 = vpack.c.b16 %v2360, %v2359
    %v2374 = vpack.c.b16 %v2362, %v2361
    %v2375 = vpack.c.b16 %v2364, %v2363
    %v2376 = vpack.c.b16 %v2366, %v2365
    %v2377 = vpack.c.b16 %v2368, %v2367
    %v2378 = vpack.c.b16 %v2370, %v2369
    %2387 = vmatprep.subr.bf16.mxu0 0
    %2388 = vmatpush1.bf16.msra.mxu0 %v2378
    %2389 = vmatprep.subr.bf16.mxu0 0
    %2390 = vmatpush1.bf16.msra.mxu0 %v2377
    %2391 = vmatprep.subr.bf16.mxu0 0
    %2392 = vmatpush1.bf16.msra.mxu0 %v2376
    %2393 = vmatprep.subr.bf16.mxu0 0
    %2394 = vmatpush1.bf16.msra.mxu0 %v2375
    %2395 = vmatprep.subr.bf16.mxu0 0
    %2396 = vmatpush1.bf16.msra.mxu0 %v2374
    %2397 = vmatprep.subr.bf16.mxu0 0
    %2398 = vmatpush1.bf16.msra.mxu0 %v2373
    %2399 = vmatprep.subr.bf16.mxu0 0
    %2400 = vmatpush1.bf16.msra.mxu0 %v2372
    %2401 = vmatprep.subr.bf16.mxu0 0
    %2402 = vmatpush1.bf16.msra.mxu0 %v2371
    %2403 = vmatprep.subr.bf16.mxu0 0
    %2404 = vmatpush2.bf16.msra.mxu0 0
    %2405 = vmatprep.subr.bf16.mxu0 0
    %2406 = vmatpush2.bf16.msra.mxu0 0
    %2407 = vmatprep.subr.bf16.mxu0 0
    %2408 = vmatpush2.bf16.msra.mxu0 0
    %2409 = vmatprep.subr.bf16.mxu0 0
    %2410 = vmatpush2.bf16.msra.mxu0 0
    %2411 = vmatprep.subr.bf16.mxu0 0
    %2412 = vmatpush2.bf16.msra.mxu0 0
    %2413 = vmatprep.subr.bf16.mxu0 0
    %2414 = vmatpush2.bf16.msra.mxu0 0
    %2415 = vmatprep.subr.bf16.mxu0 0
    %2416 = vmatpush2.bf16.msra.mxu0 0
    %2417 = vmatprep.subr.bf16.mxu0 0
    %2418 = vmatpush2.bf16.msra.mxu0 0
    %2419 = vmatprep.mubr.bf16.mxu0 0
    %2420 = vmatmul.mubr.bf16.gmra.mxu0 %v2315
    %v2421 = vpop.f32.mrf.mxu0
    %v2422 = vadd.f32 %v2337, %v2421
    %v2423 = vpop.f32.mrf.mxu0
    %v2424 = vpop.f32.mrf.mxu0
    %v2425 = vpop.f32.mrf.mxu0
    %2426 = vdwg.mxu0
    %2427 = vst [vmem:[#allocation2] sm:$0x3] %v2422
    // Predicated region
    $region22: #{cnn_forward.5} parent=1 // pred_check
      _
    $region23: #{cnn_forward.5} parent=1 // pred_check_branch
      %2429 = sbr.rel (0) target = $region25
    $region24: #{cnn_forward.5} parent=1 // pred_region
      %s2431 = ssub.s32 32, 32
      %2432 = vsyncadd [#allocation3], %s2431
      %s2434 = sshll.u32 [#allocation2], 4
      %s2435 = int_to_ptr.vmem [resolvable:$true] %s2434
      %2437 = dma.vmem_to_hbm [thread:$0]  %s2435, 32, %s5, [#allocation3]
    $region25: #{cnn_forward.5} parent=1 // pred_fallthru
      _
    // Predicated region
    $region26: #{cnn_forward.5} parent=1 // pred_check
      _
    $region27: #{cnn_forward.5} parent=1 // pred_check_branch
      %2439 = sbr.rel (0) target = $region29
    $region28: #{cnn_forward.5} parent=1 // pred_region
      %2440 = dma.done [#allocation3], 32
    $region29: #{cnn_forward.5} parent=1 // pred_fallthru
      _
    %2441 = vsyncpa [#allocation3], 1

</llo_original>
